<compile_context>
chip_gen: v7x
topology: tpu7x:2x2x1
jax: 0.10.0
libtpu: 0.0.40
codegen_flags: <defaults>
</compile_context>

<pallas_src>
import functools

import jax
import jax.numpy as jnp
from jax import lax
from jax.experimental import pallas as pl
from jax.experimental.pallas import tpu as pltpu


def _convlstm_kernel(xh_ref, c_ref, w_ref, b_ref, newc_ref, newh_ref,
                     *, H, W, K, Cin_tot, Cout):
    """One batch element per grid step.

    xh_ref  : (1, H+K-1, W+K-1, Cin_tot)  zero-padded [x ; h] concat, NHWC, bf16
    c_ref   : (1, H*W, Cout)              previous cell state
    w_ref   : (K*K*Cin_tot, 4*Cout)       conv weights (rows ordered kh,kw,cin), bf16
    b_ref   : (1, 4*Cout)                 conv bias with forget_bias folded into f
    newc_ref, newh_ref : (1, H*W, Cout)   outputs
    """
    xh = xh_ref[0]                                       # (Hp, Wp, Cin_tot)

    # --- im2col: one concat of the K*K shifted views -> (H*W, K*K*Cin_tot).
    views = [xh[kh:kh + H, kw:kw + W, :]
             for kh in range(K) for kw in range(K)]
    patch = jnp.concatenate(views, axis=-1)              # (H, W, K*K*Cin_tot)
    patch = patch.reshape(H * W, K * K * Cin_tot)        # layout no-op (W % 8 == 0)

    # --- one big MXU matmul (bf16 operands, f32 accumulation) + fused bias.
    acc = jnp.dot(patch, w_ref[...], preferred_element_type=jnp.float32)
    acc = acc + b_ref[...].astype(jnp.float32)           # (H*W, 4*Cout)

    # --- fused LSTM gate math, 2-D and lane-dense.
    sig = jax.nn.sigmoid(acc)                            # full 128-lane slab (EUP)
    i_g = sig[:, 0 * Cout:1 * Cout]
    f_g = sig[:, 2 * Cout:3 * Cout]                      # forget_bias already folded in
    o_g = sig[:, 3 * Cout:4 * Cout]
    j_t = jnp.tanh(acc[:, 1 * Cout:2 * Cout])

    c_prev = c_ref[0].astype(jnp.float32)                # (H*W, Cout)
    new_c = c_prev * f_g + i_g * j_t
    new_h = jnp.tanh(new_c) * o_g

    newc_ref[0] = new_c.astype(newc_ref.dtype)
    newh_ref[0] = new_h.astype(newh_ref.dtype)


def convlstm_pallas(x_nchw, states, w_oihw, bias, *,
                    kernel_size=5, forget_bias=1.0, padding=2):
    """Mirrors ConvLSTM.forward. x_nchw: (B, Cin, H, W)."""
    B, Cin, H, W = x_nchw.shape
    Cout4, Cin_tot_w, K, _ = w_oihw.shape
    Cout = Cout4 // 4
    assert K == kernel_size and padding == (kernel_size - 1) // 2

    if states is None:
        z = jnp.zeros((B, Cout, H, W), x_nchw.dtype)
        states = (z, z)
    if not isinstance(states, tuple):
        raise TypeError('states type is not right')
    c, h = states
    if not (c.ndim == 4 and h.ndim == 4 and x_nchw.ndim == 4):
        raise TypeError('')

    Cin_tot = Cin + Cout
    assert Cin_tot == Cin_tot_w

    # Glue (plain JAX, layout only): channel concat (== torch.cat(dim=1)),
    # NCHW -> NHWC, "same" zero-padding, weights OIHW -> (K*K*Cin_tot, 4*Cout)
    # with rows ordered (kh, kw, cin) to match the kernel's im2col, forget_bias
    # folded into the f-gate bias slot, bf16 MXU operands.
    xh = jnp.transpose(jnp.concatenate((x_nchw, h), axis=1), (0, 2, 3, 1))
    xh_pad = jnp.pad(xh, ((0, 0), (padding, padding), (padding, padding), (0, 0)))
    xh_pad = xh_pad.astype(jnp.bfloat16)

    c_2d = jnp.transpose(c, (0, 2, 3, 1)).reshape(B, H * W, Cout)

    w_mat = jnp.transpose(w_oihw, (2, 3, 1, 0)).reshape(K * K * Cin_tot, 4 * Cout)
    w_mat = w_mat.astype(jnp.bfloat16)

    bias_f = bias.astype(jnp.float32)
    bias_f = bias_f.at[2 * Cout:3 * Cout].add(jnp.float32(forget_bias))
    bias2d = bias_f.reshape(1, 4 * Cout)

    Hp, Wp = H + 2 * padding, W + 2 * padding

    kernel = functools.partial(_convlstm_kernel, H=H, W=W, K=K,
                               Cin_tot=Cin_tot, Cout=Cout)

    new_c_2d, new_h_2d = pl.pallas_call(
        kernel,
        out_shape=(jax.ShapeDtypeStruct((B, H * W, Cout), x_nchw.dtype),
                   jax.ShapeDtypeStruct((B, H * W, Cout), x_nchw.dtype)),
        grid=(B,),
        in_specs=[
            pl.BlockSpec((1, Hp, Wp, Cin_tot), lambda b: (b, 0, 0, 0)),
            pl.BlockSpec((1, H * W, Cout), lambda b: (b, 0, 0)),
            pl.BlockSpec((K * K * Cin_tot, 4 * Cout), lambda b: (0, 0)),
            pl.BlockSpec((1, 4 * Cout), lambda b: (0, 0)),
        ],
        out_specs=(
            pl.BlockSpec((1, H * W, Cout), lambda b: (b, 0, 0)),
            pl.BlockSpec((1, H * W, Cout), lambda b: (b, 0, 0)),
        ),
        compiler_params=pltpu.CompilerParams(
            dimension_semantics=("parallel",)),
    )(xh_pad, c_2d, w_mat, bias2d)

    new_c = jnp.transpose(new_c_2d.reshape(B, H, W, Cout), (0, 3, 1, 2))
    new_h = jnp.transpose(new_h_2d.reshape(B, H, W, Cout), (0, 3, 1, 2))
    return new_h, (new_c, new_h)


def convlstm_reference(x_nchw, states, w_oihw, bias, *,
                       forget_bias=1.0, padding=2):
    """Pure-JAX f32 reference matching the PyTorch module (NCHW)."""
    B, Cin, H, W = x_nchw.shape
    Cout = w_oihw.shape[0] // 4
    if states is None:
        z = jnp.zeros((B, Cout, H, W), x_nchw.dtype)
        states = (z, z)
    c, h = states
    xh = jnp.concatenate((x_nchw, h), axis=1)
    gates = lax.conv_general_dilated(
        xh, w_oihw, window_strides=(1, 1),
        padding=[(padding, padding), (padding, padding)],
        dimension_numbers=('NCHW', 'OIHW', 'NCHW'))
    gates = gates + bias.reshape(1, -1, 1, 1)
    i, j, f, o = jnp.split(gates, 4, axis=1)
    new_c = c * jax.nn.sigmoid(f + forget_bias) + jax.nn.sigmoid(i) * jnp.tanh(j)
    new_h = jnp.tanh(new_c) * jax.nn.sigmoid(o)
    return new_h, (new_c, new_h)


if __name__ == "__main__":
    B, Cin, H, W = 2, 4, 16, 16
    Cout, K, PAD = 32, 5, 2
    forget_bias = 1.0

    key = jax.random.PRNGKey(0)
    kx, kc, kh, kw, kb = jax.random.split(key, 5)

    x = jax.random.normal(kx, (B, Cin, H, W), jnp.float32)
    c0 = jax.random.normal(kc, (B, Cout, H, W), jnp.float32)
    h0 = jax.random.normal(kh, (B, Cout, H, W), jnp.float32)

    # Deterministic synthetic conv parameters (same shapes as nn.Conv2d(in=Cin+Cout,
    # out=4*Cout, k=5)): weight OIHW (4*Cout, Cin+Cout, 5, 5), bias (4*Cout,).
    w_oihw = jax.random.normal(kw, (4 * Cout, Cin + Cout, K, K), jnp.float32) * 0.05
    bias = jax.random.normal(kb, (4 * Cout,), jnp.float32) * 0.05

    new_h, (new_c, new_h2) = convlstm_pallas(
        x, (c0, h0), w_oihw, bias,
        kernel_size=K, forget_bias=forget_bias, padding=PAD)
    jax.block_until_ready((new_h, new_c, new_h2))

    # Also exercise the states=None path (zero states), as in the module.
    nh0, (nc0, _) = convlstm_pallas(
        x, None, w_oihw, bias,
        kernel_size=K, forget_bias=forget_bias, padding=PAD)
    jax.block_until_ready((nh0, nc0))

    # Correctness check vs a pure-JAX f32 reference of the PyTorch forward.
    # Tolerance loosened because the MXU operands are bf16 (f32 accumulation).
    ref_h, (ref_c, _) = convlstm_reference(
        x, (c0, h0), w_oihw, bias, forget_bias=forget_bias, padding=PAD)
    ref_h0, (ref_c0, _) = convlstm_reference(
        x, None, w_oihw, bias, forget_bias=forget_bias, padding=PAD)

    ATOL = RTOL = 5e-2
    assert jnp.allclose(new_h, ref_h, atol=ATOL, rtol=RTOL)
    assert jnp.allclose(new_c, ref_c, atol=ATOL, rtol=RTOL)
    assert jnp.allclose(nh0, ref_h0, atol=ATOL, rtol=RTOL)
    assert jnp.allclose(nc0, ref_c0, atol=ATOL, rtol=RTOL)

    print("KERNEL_OK")
</pallas_src>

<mosaic_0001>
module attributes {stable_mosaic.version = 11 : i64} {
  func.func @_convlstm_kernel(%arg0: i32, %arg1: memref<1x20x20x36xbf16, #tpu.memory_space<vmem>>, %arg2: memref<1x256x32xf32, #tpu.memory_space<vmem>>, %arg3: memref<900x128xbf16, #tpu.memory_space<vmem>>, %arg4: memref<1x128xf32, #tpu.memory_space<vmem>>, %arg5: memref<1x256x32xf32, #tpu.memory_space<vmem>>, %arg6: memref<1x256x32xf32, #tpu.memory_space<vmem>>) attributes {dimension_semantics = [#tpu.dimension_semantics<parallel>], iteration_bounds = array<i64: 2>, scalar_prefetch = 0 : i64, scratch_operands = 0 : i64, tpu.core_type = #tpu.core_type<tc>, window_params = [{transform_indices = @transform_0, window_bounds = array<i64: 1, 20, 20, 36>}, {transform_indices = @transform_1, window_bounds = array<i64: 1, 256, 32>}, {pipeline_mode = #tpu.pipeline_mode<synchronous>, transform_indices = @transform_2, window_bounds = array<i64: 900, 128>}, {pipeline_mode = #tpu.pipeline_mode<synchronous>, transform_indices = @transform_3, window_bounds = array<i64: 1, 128>}, {transform_indices = @transform_4, window_bounds = array<i64: 1, 256, 32>}, {transform_indices = @transform_5, window_bounds = array<i64: 1, 256, 32>}]} {
    %c0 = arith.constant 0 : index
    %c0_0 = arith.constant 0 : index
    %c0_1 = arith.constant 0 : index
    %c0_2 = arith.constant 0 : index
    %0 = vector.load %arg1[%c0, %c0_0, %c0_1, %c0_2] : memref<1x20x20x36xbf16, #tpu.memory_space<vmem>>, vector<1x20x20x36xbf16>
    %1 = vector.shape_cast %0 : vector<1x20x20x36xbf16> to vector<20x20x36xbf16>
    %2 = vector.extract_strided_slice %1 {offsets = [0, 0, 0], sizes = [16, 16, 36], strides = [1, 1, 1]} : vector<20x20x36xbf16> to vector<16x16x36xbf16>
    %3 = vector.extract_strided_slice %1 {offsets = [0, 1, 0], sizes = [16, 16, 36], strides = [1, 1, 1]} : vector<20x20x36xbf16> to vector<16x16x36xbf16>
    %4 = vector.extract_strided_slice %1 {offsets = [0, 2, 0], sizes = [16, 16, 36], strides = [1, 1, 1]} : vector<20x20x36xbf16> to vector<16x16x36xbf16>
    %5 = vector.extract_strided_slice %1 {offsets = [0, 3, 0], sizes = [16, 16, 36], strides = [1, 1, 1]} : vector<20x20x36xbf16> to vector<16x16x36xbf16>
    %6 = vector.extract_strided_slice %1 {offsets = [0, 4, 0], sizes = [16, 16, 36], strides = [1, 1, 1]} : vector<20x20x36xbf16> to vector<16x16x36xbf16>
    %7 = vector.extract_strided_slice %1 {offsets = [1, 0, 0], sizes = [16, 16, 36], strides = [1, 1, 1]} : vector<20x20x36xbf16> to vector<16x16x36xbf16>
    %8 = vector.extract_strided_slice %1 {offsets = [1, 1, 0], sizes = [16, 16, 36], strides = [1, 1, 1]} : vector<20x20x36xbf16> to vector<16x16x36xbf16>
    %9 = vector.extract_strided_slice %1 {offsets = [1, 2, 0], sizes = [16, 16, 36], strides = [1, 1, 1]} : vector<20x20x36xbf16> to vector<16x16x36xbf16>
    %10 = vector.extract_strided_slice %1 {offsets = [1, 3, 0], sizes = [16, 16, 36], strides = [1, 1, 1]} : vector<20x20x36xbf16> to vector<16x16x36xbf16>
    %11 = vector.extract_strided_slice %1 {offsets = [1, 4, 0], sizes = [16, 16, 36], strides = [1, 1, 1]} : vector<20x20x36xbf16> to vector<16x16x36xbf16>
    %12 = vector.extract_strided_slice %1 {offsets = [2, 0, 0], sizes = [16, 16, 36], strides = [1, 1, 1]} : vector<20x20x36xbf16> to vector<16x16x36xbf16>
    %13 = vector.extract_strided_slice %1 {offsets = [2, 1, 0], sizes = [16, 16, 36], strides = [1, 1, 1]} : vector<20x20x36xbf16> to vector<16x16x36xbf16>
    %14 = vector.extract_strided_slice %1 {offsets = [2, 2, 0], sizes = [16, 16, 36], strides = [1, 1, 1]} : vector<20x20x36xbf16> to vector<16x16x36xbf16>
    %15 = vector.extract_strided_slice %1 {offsets = [2, 3, 0], sizes = [16, 16, 36], strides = [1, 1, 1]} : vector<20x20x36xbf16> to vector<16x16x36xbf16>
    %16 = vector.extract_strided_slice %1 {offsets = [2, 4, 0], sizes = [16, 16, 36], strides = [1, 1, 1]} : vector<20x20x36xbf16> to vector<16x16x36xbf16>
    %17 = vector.extract_strided_slice %1 {offsets = [3, 0, 0], sizes = [16, 16, 36], strides = [1, 1, 1]} : vector<20x20x36xbf16> to vector<16x16x36xbf16>
    %18 = vector.extract_strided_slice %1 {offsets = [3, 1, 0], sizes = [16, 16, 36], strides = [1, 1, 1]} : vector<20x20x36xbf16> to vector<16x16x36xbf16>
    %19 = vector.extract_strided_slice %1 {offsets = [3, 2, 0], sizes = [16, 16, 36], strides = [1, 1, 1]} : vector<20x20x36xbf16> to vector<16x16x36xbf16>
    %20 = vector.extract_strided_slice %1 {offsets = [3, 3, 0], sizes = [16, 16, 36], strides = [1, 1, 1]} : vector<20x20x36xbf16> to vector<16x16x36xbf16>
    %21 = vector.extract_strided_slice %1 {offsets = [3, 4, 0], sizes = [16, 16, 36], strides = [1, 1, 1]} : vector<20x20x36xbf16> to vector<16x16x36xbf16>
    %22 = vector.extract_strided_slice %1 {offsets = [4, 0, 0], sizes = [16, 16, 36], strides = [1, 1, 1]} : vector<20x20x36xbf16> to vector<16x16x36xbf16>
    %23 = vector.extract_strided_slice %1 {offsets = [4, 1, 0], sizes = [16, 16, 36], strides = [1, 1, 1]} : vector<20x20x36xbf16> to vector<16x16x36xbf16>
    %24 = vector.extract_strided_slice %1 {offsets = [4, 2, 0], sizes = [16, 16, 36], strides = [1, 1, 1]} : vector<20x20x36xbf16> to vector<16x16x36xbf16>
    %25 = vector.extract_strided_slice %1 {offsets = [4, 3, 0], sizes = [16, 16, 36], strides = [1, 1, 1]} : vector<20x20x36xbf16> to vector<16x16x36xbf16>
    %26 = vector.extract_strided_slice %1 {offsets = [4, 4, 0], sizes = [16, 16, 36], strides = [1, 1, 1]} : vector<20x20x36xbf16> to vector<16x16x36xbf16>
    %27 = tpu.concatenate %2, %3, %4, %5, %6, %7, %8, %9, %10, %11, %12, %13, %14, %15, %16, %17 in 2 : vector<16x16x36xbf16>, vector<16x16x36xbf16>, vector<16x16x36xbf16>, vector<16x16x36xbf16>, vector<16x16x36xbf16>, vector<16x16x36xbf16>, vector<16x16x36xbf16>, vector<16x16x36xbf16>, vector<16x16x36xbf16>, vector<16x16x36xbf16>, vector<16x16x36xbf16>, vector<16x16x36xbf16>, vector<16x16x36xbf16>, vector<16x16x36xbf16>, vector<16x16x36xbf16>, vector<16x16x36xbf16> -> vector<16x16x576xbf16>
    %28 = tpu.concatenate %18, %19, %20, %21, %22, %23, %24, %25, %26 in 2 : vector<16x16x36xbf16>, vector<16x16x36xbf16>, vector<16x16x36xbf16>, vector<16x16x36xbf16>, vector<16x16x36xbf16>, vector<16x16x36xbf16>, vector<16x16x36xbf16>, vector<16x16x36xbf16>, vector<16x16x36xbf16> -> vector<16x16x324xbf16>
    %29 = tpu.concatenate %27, %28 in 2 : vector<16x16x576xbf16>, vector<16x16x324xbf16> -> vector<16x16x900xbf16>
    %30 = vector.shape_cast %29 : vector<16x16x900xbf16> to vector<256x900xbf16>
    %c0_3 = arith.constant 0 : index
    %c0_4 = arith.constant 0 : index
    %31 = vector.load %arg3[%c0_3, %c0_4] : memref<900x128xbf16, #tpu.memory_space<vmem>>, vector<900x128xbf16>
    %cst = arith.constant dense<0.000000e+00> : vector<256x128xf32>
    %32 = tpu.matmul %30, %31, %cst {dimension_numbers = #tpu.dot_dimension_numbers<[1], [0], [0], [1], [0, 0, 1, 1], [], []>} : vector<256x900xbf16>, vector<900x128xbf16>, vector<256x128xf32> -> vector<256x128xf32>
    %c0_5 = arith.constant 0 : index
    %c0_6 = arith.constant 0 : index
    %33 = vector.load %arg4[%c0_5, %c0_6] : memref<1x128xf32, #tpu.memory_space<vmem>>, vector<1x128xf32>
    %34 = vector.broadcast %33 : vector<1x128xf32> to vector<256x128xf32>
    %35 = arith.addf %32, %34 : vector<256x128xf32>
    %36 = arith.negf %35 : vector<256x128xf32>
    %37 = math.exp %36 : vector<256x128xf32>
    %cst_7 = arith.constant 1.000000e+00 : f32
    %38 = vector.broadcast %cst_7 : f32 to vector<256x128xf32>
    %39 = arith.addf %38, %37 : vector<256x128xf32>
    %40 = arith.divf %38, %39 : vector<256x128xf32>
    %41 = vector.extract_strided_slice %40 {offsets = [0, 0], sizes = [256, 32], strides = [1, 1]} : vector<256x128xf32> to vector<256x32xf32>
    %42 = vector.extract_strided_slice %40 {offsets = [0, 64], sizes = [256, 32], strides = [1, 1]} : vector<256x128xf32> to vector<256x32xf32>
    %43 = vector.extract_strided_slice %40 {offsets = [0, 96], sizes = [256, 32], strides = [1, 1]} : vector<256x128xf32> to vector<256x32xf32>
    %44 = vector.extract_strided_slice %35 {offsets = [0, 32], sizes = [256, 32], strides = [1, 1]} : vector<256x128xf32> to vector<256x32xf32>
    %45 = math.tanh %44 : vector<256x32xf32>
    %c0_8 = arith.constant 0 : index
    %c0_9 = arith.constant 0 : index
    %c0_10 = arith.constant 0 : index
    %46 = vector.load %arg2[%c0_8, %c0_9, %c0_10] : memref<1x256x32xf32, #tpu.memory_space<vmem>>, vector<1x256x32xf32>
    %47 = vector.shape_cast %46 : vector<1x256x32xf32> to vector<256x32xf32>
    %48 = arith.mulf %47, %42 : vector<256x32xf32>
    %49 = arith.mulf %41, %45 : vector<256x32xf32>
    %50 = arith.addf %48, %49 : vector<256x32xf32>
    %51 = math.tanh %50 : vector<256x32xf32>
    %52 = arith.mulf %51, %43 : vector<256x32xf32>
    %c0_11 = arith.constant 0 : index
    %c0_12 = arith.constant 0 : index
    %c0_13 = arith.constant 0 : index
    %53 = vector.load %arg5[%c0_11, %c0_12, %c0_13] : memref<1x256x32xf32, #tpu.memory_space<vmem>>, vector<1x256x32xf32>
    %54 = vector.shape_cast %53 : vector<1x256x32xf32> to vector<256x32xf32>
    %55 = vector.shape_cast %50 : vector<256x32xf32> to vector<1x256x32xf32>
    tpu.vector_store %arg5[%c0_11, %c0_12, %c0_13], %55 {strides = array<i32>} : memref<1x256x32xf32, #tpu.memory_space<vmem>>, vector<1x256x32xf32>,
    %c0_14 = arith.constant 0 : index
    %c0_15 = arith.constant 0 : index
    %c0_16 = arith.constant 0 : index
    %56 = vector.load %arg6[%c0_14, %c0_15, %c0_16] : memref<1x256x32xf32, #tpu.memory_space<vmem>>, vector<1x256x32xf32>
    %57 = vector.shape_cast %56 : vector<1x256x32xf32> to vector<256x32xf32>
    %58 = vector.shape_cast %52 : vector<256x32xf32> to vector<1x256x32xf32>
    tpu.vector_store %arg6[%c0_14, %c0_15, %c0_16], %58 {strides = array<i32>} : memref<1x256x32xf32, #tpu.memory_space<vmem>>, vector<1x256x32xf32>,
    return
  }
  func.func @transform_0(%arg0: i32) -> (i32, i32, i32, i32) {
    %c0_i32 = arith.constant 0 : i32
    %c0_i32_0 = arith.constant 0 : i32
    %c0_i32_1 = arith.constant 0 : i32
    %c0_i32_2 = arith.constant 0 : i32
    return %arg0, %c0_i32, %c0_i32_0, %c0_i32_1 : i32, i32, i32, i32
  }
  func.func @transform_1(%arg0: i32) -> (i32, i32, i32) {
    %c0_i32 = arith.constant 0 : i32
    %c0_i32_0 = arith.constant 0 : i32
    %c0_i32_1 = arith.constant 0 : i32
    return %arg0, %c0_i32, %c0_i32_0 : i32, i32, i32
  }
  func.func @transform_2(%arg0: i32) -> (i32, i32) {
    %c0_i32 = arith.constant 0 : i32
    %c0_i32_0 = arith.constant 0 : i32
    %c0_i32_1 = arith.constant 0 : i32
    return %c0_i32, %c0_i32_0 : i32, i32
  }
  func.func @transform_3(%arg0: i32) -> (i32, i32) {
    %c0_i32 = arith.constant 0 : i32
    %c0_i32_0 = arith.constant 0 : i32
    %c0_i32_1 = arith.constant 0 : i32
    return %c0_i32, %c0_i32_0 : i32, i32
  }
  func.func @transform_4(%arg0: i32) -> (i32, i32, i32) {
    %c0_i32 = arith.constant 0 : i32
    %c0_i32_0 = arith.constant 0 : i32
    %c0_i32_1 = arith.constant 0 : i32
    return %arg0, %c0_i32, %c0_i32_0 : i32, i32, i32
  }
  func.func @transform_5(%arg0: i32) -> (i32, i32, i32) {
    %c0_i32 = arith.constant 0 : i32
    %c0_i32_0 = arith.constant 0 : i32
    %c0_i32_1 = arith.constant 0 : i32
    return %arg0, %c0_i32, %c0_i32_0 : i32, i32, i32
  }
}

</mosaic_0001>

<llo_original>
// kernel: tpu_custom_call.1
$region0: #{tpu_custom_call.1}
  #allocation0 [shape = 'u32[]', space=smem, size = 0x4, offset = 0x4, fixed_abs, tag = 'smem constant byte address 0x4 - core index']
  #allocation1 [shape = 'u32[144,128]{1,0:T(1,128)}', space=vmem, size = 0x12000, scoped, tag = 'internal scratch']
  %s0 = inlined_call_operand.vmem [shape: bf16[2,20,20,36], index: 0, kind: input, shape index: {}]
  %s1 = inlined_call_operand.vmem [shape: f32[2,256,32], index: 1, kind: input, shape index: {}]
  %s2 = inlined_call_operand.vmem [shape: bf16[900,128], index: 2, kind: input, shape index: {}]
  %s3 = inlined_call_operand.vmem [shape: f32[1,128], index: 3, kind: input, shape index: {}]
  %s4 = inlined_call_operand.vmem [shape: f32[2,256,32], index: 4, kind: output, shape index: {0}]
  %s5 = inlined_call_operand.vmem [shape: f32[2,256,32], index: 5, kind: output, shape index: {1}]
  %6 = xla_tuple %s4, %s5
  %s7 = sld [smem:[#allocation0]]
  $region57: #{tpu_custom_call.1} parent=0
    _
  %s9 = ssub.s32 1, %s7
  %s10 = scalar_select 0, %s9, %s7
  loop: start=0, step=1, limit=4
  $region2: #{tpu_custom_call.1} parent=0 // loop_pre_header
    _
  $region3: #{tpu_custom_call.1} parent=0 // loop_header
    %s12 = sphi 0, %s16
    %p13 = scmp.ge.s32.totalorder %s12, 4
    %s22 = sphi 0, %s24
    %s25 = sphi 0, %s22
    %s26 = sphi 0, %s25
    %s42 = sphi 0, %s26
    %s48 = sphi 0, %s50
    %s51 = sphi 0, %s48
    %s52 = sphi 0, %s51
    %s68 = sphi 0, %s52
    %s72 = sphi 0, %s72
    %s74 = sphi 0, %s72
    %s75 = sphi 0, %s74
    %s89 = sphi 0, %s75
    %s93 = sphi 0, %s93
    %s95 = sphi 0, %s93
    %s96 = sphi 0, %s95
    %s110 = sphi 0, %s96
    %s116 = sphi 0, %s118
    %s119 = sphi 0, %s116
    %s120 = sphi 0, %s119
    %s136 = sphi 0, %s120
    %s142 = sphi 0, %s144
    %s145 = sphi 0, %s142
    %s146 = sphi 0, %s145
    %s162 = sphi 0, %s146
  $region4: #{tpu_custom_call.1} parent=0 // loop_header_branch
    %15 = sbr.rel (%p13) target = $region8
  $region5: #{tpu_custom_call.1} parent=0 // loop_body
    %s17 = ssub.s32 %s12, 1
    %s18 = ssub.s32 %s12, 2
    %s19 = sadd.s32 %s12, 1
    %s20 = ssub.s32 %s12, %s19
    %p21 = scmp.eq.s32.totalorder %s20, 0
    %s23 = sadd.s32 %s22, 1
    %s24 = scalar_select %p21, %s22, %s23
    %p27 = pneg %p21
    %p28 = scmp.eq.s32.totalorder %s12, 1
    %p29 = por %p27, %p28
    %p30 = scmp.ne.s32.totalorder %s22, %s25
    %p31 = scmp.eq.s32.totalorder %s12, 0
    %p32 = por %p30, %p31
    %p33 = scmp.ne.s32.totalorder %s22, %s25
    %p34 = scmp.eq.s32.totalorder %s17, 1
    %p35 = por %p33, %p34
    %p36 = scmp.ne.s32.totalorder %s25, %s26
    %p37 = scmp.eq.s32.totalorder %s17, 0
    %p38 = por %p36, %p37
    %p39 = scmp.ne.s32.totalorder %s25, %s26
    %p40 = scmp.eq.s32.totalorder %s18, 1
    %p41 = por %p39, %p40
    %p43 = scmp.ne.s32.totalorder %s26, %s42
    %p44 = scmp.eq.s32.totalorder %s18, 0
    %p45 = por %p43, %p44
    %s46 = ssub.s32 %s12, %s19
    %p47 = scmp.eq.s32.totalorder %s46, 0
    %s49 = sadd.s32 %s48, 1
    %s50 = scalar_select %p47, %s48, %s49
    %p53 = pneg %p47
    %p54 = scmp.eq.s32.totalorder %s12, 1
    %p55 = por %p53, %p54
    %p56 = scmp.ne.s32.totalorder %s48, %s51
    %p57 = scmp.eq.s32.totalorder %s12, 0
    %p58 = por %p56, %p57
    %p59 = scmp.ne.s32.totalorder %s48, %s51
    %p60 = scmp.eq.s32.totalorder %s17, 1
    %p61 = por %p59, %p60
    %p62 = scmp.ne.s32.totalorder %s51, %s52
    %p63 = scmp.eq.s32.totalorder %s17, 0
    %p64 = por %p62, %p63
    %p65 = scmp.ne.s32.totalorder %s51, %s52
    %p66 = scmp.eq.s32.totalorder %s18, 1
    %p67 = por %p65, %p66
    %p69 = scmp.ne.s32.totalorder %s52, %s68
    %p70 = scmp.eq.s32.totalorder %s18, 0
    %p71 = por %p69, %p70
    %s73 = sadd.s32 %s72, 1
    %p76 = scmp.eq.s32.totalorder %s12, 1
    %p77 = scmp.ne.s32.totalorder %s72, %s74
    %p78 = scmp.eq.s32.totalorder %s12, 0
    %p79 = por %p77, %p78
    %p80 = scmp.ne.s32.totalorder %s72, %s74
    %p81 = scmp.eq.s32.totalorder %s17, 1
    %p82 = por %p80, %p81
    %p83 = scmp.ne.s32.totalorder %s74, %s75
    %p84 = scmp.eq.s32.totalorder %s17, 0
    %p85 = por %p83, %p84
    %p86 = scmp.ne.s32.totalorder %s74, %s75
    %p87 = scmp.eq.s32.totalorder %s18, 1
    %p88 = por %p86, %p87
    %p90 = scmp.ne.s32.totalorder %s75, %s89
    %p91 = scmp.eq.s32.totalorder %s18, 0
    %p92 = por %p90, %p91
    %s94 = sadd.s32 %s93, 1
    %p97 = scmp.eq.s32.totalorder %s12, 1
    %p98 = scmp.ne.s32.totalorder %s93, %s95
    %p99 = scmp.eq.s32.totalorder %s12, 0
    %p100 = por %p98, %p99
    %p101 = scmp.ne.s32.totalorder %s93, %s95
    %p102 = scmp.eq.s32.totalorder %s17, 1
    %p103 = por %p101, %p102
    %p104 = scmp.ne.s32.totalorder %s95, %s96
    %p105 = scmp.eq.s32.totalorder %s17, 0
    %p106 = por %p104, %p105
    %p107 = scmp.ne.s32.totalorder %s95, %s96
    %p108 = scmp.eq.s32.totalorder %s18, 1
    %p109 = por %p107, %p108
    %p111 = scmp.ne.s32.totalorder %s96, %s110
    %p112 = scmp.eq.s32.totalorder %s18, 0
    %p113 = por %p111, %p112
    %s114 = ssub.s32 %s12, %s19
    %p115 = scmp.eq.s32.totalorder %s114, 0
    %s117 = sadd.s32 %s116, 1
    %s118 = scalar_select %p115, %s116, %s117
    %p121 = pneg %p115
    %p122 = scmp.eq.s32.totalorder %s12, 1
    %p123 = por %p121, %p122
    %p124 = scmp.ne.s32.totalorder %s116, %s119
    %p125 = scmp.eq.s32.totalorder %s12, 0
    %p126 = por %p124, %p125
    %p127 = scmp.ne.s32.totalorder %s116, %s119
    %p128 = scmp.eq.s32.totalorder %s17, 1
    %p129 = por %p127, %p128
    %p130 = scmp.ne.s32.totalorder %s119, %s120
    %p131 = scmp.eq.s32.totalorder %s17, 0
    %p132 = por %p130, %p131
    %p133 = scmp.ne.s32.totalorder %s119, %s120
    %p134 = scmp.eq.s32.totalorder %s18, 1
    %p135 = por %p133, %p134
    %p137 = scmp.ne.s32.totalorder %s120, %s136
    %p138 = scmp.eq.s32.totalorder %s18, 0
    %p139 = por %p137, %p138
    %s140 = ssub.s32 %s12, %s19
    %p141 = scmp.eq.s32.totalorder %s140, 0
    %s143 = sadd.s32 %s142, 1
    %s144 = scalar_select %p141, %s142, %s143
    %p147 = pneg %p141
    %p148 = scmp.eq.s32.totalorder %s12, 1
    %p149 = por %p147, %p148
    %p150 = scmp.ne.s32.totalorder %s142, %s145
    %p151 = scmp.eq.s32.totalorder %s12, 0
    %p152 = por %p150, %p151
    %p153 = scmp.ne.s32.totalorder %s142, %s145
    %p154 = scmp.eq.s32.totalorder %s17, 1
    %p155 = por %p153, %p154
    %p156 = scmp.ne.s32.totalorder %s145, %s146
    %p157 = scmp.eq.s32.totalorder %s17, 0
    %p158 = por %p156, %p157
    %p159 = scmp.ne.s32.totalorder %s145, %s146
    %p160 = scmp.eq.s32.totalorder %s18, 1
    %p161 = por %p159, %p160
    %p163 = scmp.ne.s32.totalorder %s146, %s162
    %p164 = scmp.eq.s32.totalorder %s18, 0
    %p165 = por %p163, %p164
    %p166 = scmp.le.s32.totalorder 1, %s12
    %p167 = scmp.lt.s32.totalorder %s12, 3
    %p168 = pnand %p166, %p167
    %p169 = pneg %p168
    // Predicated region
    $region9: #{tpu_custom_call.1} parent=5 // pred_check
      _
    $region10: #{tpu_custom_call.1} parent=5 // pred_check_branch
      %171 = sbr.rel (%p168) target = $region12
    $region11: #{tpu_custom_call.1} parent=5 // pred_region
      %s172 = ssub.s32 %s12, 1
      // Predicated region
      $region13: #{tpu_custom_call.1} parent=11 // pred_check
        %p173 = pneg %p85
      $region14: #{tpu_custom_call.1} parent=11 // pred_check_branch
        %175 = sbr.rel (%p173) target = $region16
      $region15: #{tpu_custom_call.1} parent=11 // pred_region
        _
      $region16: #{tpu_custom_call.1} parent=11 // pred_fallthru
        _
      // Predicated region
      $region17: #{tpu_custom_call.1} parent=11 // pred_check
        %p176 = pneg %p106
      $region18: #{tpu_custom_call.1} parent=11 // pred_check_branch
        %178 = sbr.rel (%p176) target = $region20
      $region19: #{tpu_custom_call.1} parent=11 // pred_region
        _
      $region20: #{tpu_custom_call.1} parent=11 // pred_fallthru
        _
    $region12: #{tpu_custom_call.1} parent=5 // pred_fallthru
      _
    %p179 = scmp.lt.s32.totalorder %s12, 2
    // Predicated region
    $region21: #{tpu_custom_call.1} parent=5 // pred_check
      %p180 = pneg %p179
    $region22: #{tpu_custom_call.1} parent=5 // pred_check_branch
      %182 = sbr.rel (%p180) target = $region24
    $region23: #{tpu_custom_call.1} parent=5 // pred_region
      // Predicated region
      $region25: #{tpu_custom_call.1} parent=23 // pred_check
        %p183 = pneg %p32
      $region26: #{tpu_custom_call.1} parent=23 // pred_check_branch
        %185 = sbr.rel (%p183) target = $region28
      $region27: #{tpu_custom_call.1} parent=23 // pred_region
        %p186 = scmp.lt.s32.totalorder %s12, 1
        %s187 = scalar_select %p186, %s12, 1
        %s188 = smul.addr %s187, 60
        %s189 = smul.addr %s188, 4
        %s190 = scalar_lea.vmem %s0, %s189
      $region28: #{tpu_custom_call.1} parent=23 // pred_fallthru
        _
      // Predicated region
      $region29: #{tpu_custom_call.1} parent=23 // pred_check
        %p191 = pneg %p58
      $region30: #{tpu_custom_call.1} parent=23 // pred_check_branch
        %193 = sbr.rel (%p191) target = $region32
      $region31: #{tpu_custom_call.1} parent=23 // pred_region
        %p194 = scmp.lt.s32.totalorder %s12, 1
        %s195 = scalar_select %p194, %s12, 1
        %s196 = smul.addr %s195, 32
        %s197 = smul.addr %s196, 8
        %s198 = scalar_lea.vmem %s1, %s197
      $region32: #{tpu_custom_call.1} parent=23 // pred_fallthru
        _
    $region24: #{tpu_custom_call.1} parent=5 // pred_fallthru
      _
    %p199 = scmp.le.s32.totalorder 1, %s12
    %p200 = scmp.lt.s32.totalorder %s12, 3
    %p201 = pnand %p199, %p200
    %p202 = pneg %p201
    // Predicated region
    $region33: #{tpu_custom_call.1} parent=5 // pred_check
      _
    $region34: #{tpu_custom_call.1} parent=5 // pred_check_branch
      %204 = sbr.rel (%p201) target = $region36
    $region35: #{tpu_custom_call.1} parent=5 // pred_region
      %s205 = ssub.s32 %s12, 1
      %p206 = scmp.lt.s32.totalorder %s17, 1
      %s207 = scalar_select %p206, %s17, 1
      %s208 = smul.addr %s207, 60
      %s209 = smul.addr %s208, 4
      %s210 = scalar_lea.vmem %s0, %s209
      %p211 = pneg %p38
      %p212 = pneg %p35
      %p213 = scmp.lt.s32.totalorder %s17, 1
      %s214 = scalar_select %p213, %s17, 1
      %s215 = smul.addr %s214, 32
      %s216 = smul.addr %s215, 8
      %s217 = scalar_lea.vmem %s1, %s216
      %p218 = pneg %p64
      %p219 = pneg %p61
      %p220 = pneg %p85
      %p221 = pneg %p82
      %p222 = pneg %p106
      %p223 = pneg %p103
      %p224 = pneg %p132
      %p225 = pneg %p129
      %p226 = scmp.lt.s32.totalorder %s17, 1
      %s227 = scalar_select %p226, %s17, 1
      %s228 = smul.addr %s227, 32
      %s229 = smul.addr %s228, 8
      %s230 = scalar_lea.vmem %s4, %s229
      %p231 = pneg %p158
      %p232 = pneg %p155
      %p233 = scmp.lt.s32.totalorder %s17, 1
      %s234 = scalar_select %p233, %s17, 1
      %s235 = smul.addr %s234, 32
      %s236 = smul.addr %s235, 8
      %s237 = scalar_lea.vmem %s5, %s236
      %p238 = scmp.lt.s32.totalorder %s17, 1
      %s239 = scalar_select %p238, %s17, 1
      %s240 = smul.addr %s239, 60
      %s241 = smul.addr %s240, 4
      %s242 = scalar_lea.vmem %s0, %s241
      %p243 = scmp.lt.s32.totalorder %s17, 1
      %s244 = scalar_select %p243, %s17, 1
      %s245 = smul.addr %s244, 32
      %s246 = smul.addr %s245, 8
      %s247 = scalar_lea.vmem %s1, %s246
      %p248 = scmp.lt.s32.totalorder %s17, 1
      %s249 = scalar_select %p248, %s17, 1
      %s250 = smul.addr %s249, 32
      %s251 = smul.addr %s250, 8
      %s252 = scalar_lea.vmem %s4, %s251
      %p253 = scmp.lt.s32.totalorder %s17, 1
      %s254 = scalar_select %p253, %s17, 1
      %s255 = smul.addr %s254, 32
      %s256 = smul.addr %s255, 8
      %s257 = scalar_lea.vmem %s5, %s256
      %v259 = vld [vmem:[%s242] sm:$0xf]
      %v260 = vld [vmem:[%s242 + $0x4] sm:$0xf]
      %v261 = vld [vmem:[%s242 + $0x8] sm:$0x3]
      %v262 = vld [vmem:[%s242 + $0xc] sm:$0xf]
      %v263 = vld [vmem:[%s242 + $0x10] sm:$0xf]
      %v264 = vld [vmem:[%s242 + $0x14] sm:$0x3]
      %v265 = vld [vmem:[%s242 + $0x18] sm:$0xf]
      %v266 = vld [vmem:[%s242 + $0x1c] sm:$0xf]
      %v267 = vld [vmem:[%s242 + $0x20] sm:$0x3]
      %v268 = vld [vmem:[%s242 + $0x24] sm:$0xf]
      %v269 = vld [vmem:[%s242 + $0x28] sm:$0xf]
      %v270 = vld [vmem:[%s242 + $0x2c] sm:$0x3]
      %v271 = vld [vmem:[%s242 + $0x30] sm:$0xf]
      %v272 = vld [vmem:[%s242 + $0x34] sm:$0xf]
      %v273 = vld [vmem:[%s242 + $0x38] sm:$0x3]
      %v274 = vld [vmem:[%s242 + $0x3c] sm:$0xf]
      %v275 = vld [vmem:[%s242 + $0x40] sm:$0xf]
      %v276 = vld [vmem:[%s242 + $0x44] sm:$0x3]
      %v277 = vld [vmem:[%s242 + $0x48] sm:$0xf]
      %v278 = vld [vmem:[%s242 + $0x4c] sm:$0xf]
      %v279 = vld [vmem:[%s242 + $0x50] sm:$0x3]
      %v280 = vld [vmem:[%s242 + $0x54] sm:$0xf]
      %v281 = vld [vmem:[%s242 + $0x58] sm:$0xf]
      %v282 = vld [vmem:[%s242 + $0x5c] sm:$0x3]
      %v283 = vld [vmem:[%s242 + $0x60] sm:$0xf]
      %v284 = vld [vmem:[%s242 + $0x64] sm:$0xf]
      %v285 = vld [vmem:[%s242 + $0x68] sm:$0x3]
      %v286 = vld [vmem:[%s242 + $0x6c] sm:$0xf]
      %v287 = vld [vmem:[%s242 + $0x70] sm:$0xf]
      %v288 = vld [vmem:[%s242 + $0x74] sm:$0x3]
      %v289 = vld [vmem:[%s242 + $0x78] sm:$0xf]
      %v290 = vld [vmem:[%s242 + $0x7c] sm:$0xf]
      %v291 = vld [vmem:[%s242 + $0x80] sm:$0x3]
      %v292 = vld [vmem:[%s242 + $0x84] sm:$0xf]
      %v293 = vld [vmem:[%s242 + $0x88] sm:$0xf]
      %v294 = vld [vmem:[%s242 + $0x8c] sm:$0x3]
      %v295 = vld [vmem:[%s242 + $0x90] sm:$0xf]
      %v296 = vld [vmem:[%s242 + $0x94] sm:$0xf]
      %v297 = vld [vmem:[%s242 + $0x98] sm:$0x3]
      %v298 = vld [vmem:[%s242 + $0x9c] sm:$0xf]
      %v299 = vld [vmem:[%s242 + $0xa0] sm:$0xf]
      %v300 = vld [vmem:[%s242 + $0xa4] sm:$0x3]
      %v301 = vld [vmem:[%s242 + $0xa8] sm:$0xf]
      %v302 = vld [vmem:[%s242 + $0xac] sm:$0xf]
      %v303 = vld [vmem:[%s242 + $0xb0] sm:$0x3]
      %v304 = vld [vmem:[%s242 + $0xb4] sm:$0xf]
      %v305 = vld [vmem:[%s242 + $0xb8] sm:$0xf]
      %v306 = vld [vmem:[%s242 + $0xbc] sm:$0x3]
      %v307 = vld [vmem:[%s242 + $0xc0] sm:$0xf]
      %v308 = vld [vmem:[%s242 + $0xc4] sm:$0xf]
      %v309 = vld [vmem:[%s242 + $0xc8] sm:$0x3]
      %v310 = vld [vmem:[%s242 + $0xcc] sm:$0xf]
      %v311 = vld [vmem:[%s242 + $0xd0] sm:$0xf]
      %v312 = vld [vmem:[%s242 + $0xd4] sm:$0x3]
      %v313 = vld [vmem:[%s242 + $0xd8] sm:$0xf]
      %v314 = vld [vmem:[%s242 + $0xdc] sm:$0xf]
      %v315 = vld [vmem:[%s242 + $0xe0] sm:$0x3]
      %v316 = vld [vmem:[%s242 + $0xe4] sm:$0xf]
      %v317 = vld [vmem:[%s242 + $0xe8] sm:$0xf]
      %v318 = vld [vmem:[%s242 + $0xec] sm:$0x3]
      %v351 = vunpack.c.l.b16 %v259
      %v352 = vunpack.c.l.b16 %v260
      %v353 = vunpack.c.l.b16 %v262
      %v354 = vunpack.c.l.b16 %v263
      %v355 = vunpack.c.l.b16 %v265
      %v356 = vunpack.c.l.b16 %v266
      %v357 = vunpack.c.l.b16 %v268
      %v358 = vunpack.c.l.b16 %v269
      %v359 = vunpack.c.l.b16 %v271
      %v360 = vunpack.c.l.b16 %v272
      %v361 = vunpack.c.l.b16 %v274
      %v362 = vunpack.c.l.b16 %v275
      %v363 = vunpack.c.l.b16 %v277
      %v364 = vunpack.c.l.b16 %v278
      %v365 = vunpack.c.l.b16 %v280
      %v366 = vunpack.c.l.b16 %v281
      %v367 = vunpack.c.l.b16 %v283
      %v368 = vunpack.c.l.b16 %v284
      %v369 = vunpack.c.l.b16 %v286
      %v370 = vunpack.c.l.b16 %v287
      %v371 = vunpack.c.l.b16 %v289
      %v372 = vunpack.c.l.b16 %v290
      %v373 = vunpack.c.l.b16 %v292
      %v374 = vunpack.c.l.b16 %v293
      %v375 = vunpack.c.l.b16 %v295
      %v376 = vunpack.c.l.b16 %v296
      %v377 = vunpack.c.l.b16 %v298
      %v378 = vunpack.c.l.b16 %v299
      %v379 = vunpack.c.l.b16 %v301
      %v380 = vunpack.c.l.b16 %v302
      %v381 = vunpack.c.l.b16 %v304
      %v382 = vunpack.c.l.b16 %v305
      %v383 = vpack.c.b16 %v352, %v351
      %v384 = vpack.c.b16 %v354, %v353
      %v385 = vpack.c.b16 %v356, %v355
      %v386 = vpack.c.b16 %v358, %v357
      %v387 = vpack.c.b16 %v360, %v359
      %v388 = vpack.c.b16 %v362, %v361
      %v389 = vpack.c.b16 %v364, %v363
      %v390 = vpack.c.b16 %v366, %v365
      %v391 = vpack.c.b16 %v368, %v367
      %v392 = vpack.c.b16 %v370, %v369
      %v393 = vpack.c.b16 %v372, %v371
      %v394 = vpack.c.b16 %v374, %v373
      %v395 = vpack.c.b16 %v376, %v375
      %v396 = vpack.c.b16 %v378, %v377
      %v397 = vpack.c.b16 %v380, %v379
      %v398 = vpack.c.b16 %v382, %v381
      %v415 = vunpack.c.l.b16 %v261
      %v416 = vunpack.c.l.b16 %v264
      %v417 = vunpack.c.l.b16 %v267
      %v418 = vunpack.c.l.b16 %v270
      %v419 = vunpack.c.l.b16 %v273
      %v420 = vunpack.c.l.b16 %v276
      %v421 = vunpack.c.l.b16 %v279
      %v422 = vunpack.c.l.b16 %v282
      %v423 = vunpack.c.l.b16 %v285
      %v424 = vunpack.c.l.b16 %v288
      %v425 = vunpack.c.l.b16 %v291
      %v426 = vunpack.c.l.b16 %v294
      %v427 = vunpack.c.l.b16 %v297
      %v428 = vunpack.c.l.b16 %v300
      %v429 = vunpack.c.l.b16 %v303
      %v430 = vunpack.c.l.b16 %v306
      %v431 = vpack.c.b16 %v415, %v415
      %v432 = vpack.c.b16 %v416, %v416
      %v433 = vpack.c.b16 %v417, %v417
      %v434 = vpack.c.b16 %v418, %v418
      %v435 = vpack.c.b16 %v419, %v419
      %v436 = vpack.c.b16 %v420, %v420
      %v437 = vpack.c.b16 %v421, %v421
      %v438 = vpack.c.b16 %v422, %v422
      %v439 = vpack.c.b16 %v423, %v423
      %v440 = vpack.c.b16 %v424, %v424
      %v441 = vpack.c.b16 %v425, %v425
      %v442 = vpack.c.b16 %v426, %v426
      %v443 = vpack.c.b16 %v427, %v427
      %v444 = vpack.c.b16 %v428, %v428
      %v445 = vpack.c.b16 %v429, %v429
      %v446 = vpack.c.b16 %v430, %v430
      %vm447 = vsmask.f32 7424
      %v449 = vshrl.u32 %v383, 16
      %v451 = vshll.u32 %v383, 16
      %v453 = vrot.slane %v451, 1
      %v454 = vor.u32 %v449, %v453
      %v456 = vshll.u32 %v431, 16
      %v458 = vrot.slane %v456, 1
      %v459 = vsel %vm447, %v454, %v458
      %v461 = vshrl.u32 %v384, 16
      %v463 = vshll.u32 %v384, 16
      %v465 = vrot.slane %v463, 1
      %v466 = vor.u32 %v461, %v465
      %v468 = vshll.u32 %v432, 16
      %v470 = vrot.slane %v468, 1
      %v471 = vsel %vm447, %v466, %v470
      %v473 = vshrl.u32 %v385, 16
      %v475 = vshll.u32 %v385, 16
      %v477 = vrot.slane %v475, 1
      %v478 = vor.u32 %v473, %v477
      %v480 = vshll.u32 %v433, 16
      %v482 = vrot.slane %v480, 1
      %v483 = vsel %vm447, %v478, %v482
      %v485 = vshrl.u32 %v386, 16
      %v487 = vshll.u32 %v386, 16
      %v489 = vrot.slane %v487, 1
      %v490 = vor.u32 %v485, %v489
      %v492 = vshll.u32 %v434, 16
      %v494 = vrot.slane %v492, 1
      %v495 = vsel %vm447, %v490, %v494
      %v497 = vshrl.u32 %v387, 16
      %v499 = vshll.u32 %v387, 16
      %v501 = vrot.slane %v499, 1
      %v502 = vor.u32 %v497, %v501
      %v504 = vshll.u32 %v435, 16
      %v506 = vrot.slane %v504, 1
      %v507 = vsel %vm447, %v502, %v506
      %v509 = vshrl.u32 %v388, 16
      %v511 = vshll.u32 %v388, 16
      %v513 = vrot.slane %v511, 1
      %v514 = vor.u32 %v509, %v513
      %v516 = vshll.u32 %v436, 16
      %v518 = vrot.slane %v516, 1
      %v519 = vsel %vm447, %v514, %v518
      %v521 = vshrl.u32 %v389, 16
      %v523 = vshll.u32 %v389, 16
      %v525 = vrot.slane %v523, 1
      %v526 = vor.u32 %v521, %v525
      %v528 = vshll.u32 %v437, 16
      %v530 = vrot.slane %v528, 1
      %v531 = vsel %vm447, %v526, %v530
      %v533 = vshrl.u32 %v390, 16
      %v535 = vshll.u32 %v390, 16
      %v537 = vrot.slane %v535, 1
      %v538 = vor.u32 %v533, %v537
      %v540 = vshll.u32 %v438, 16
      %v542 = vrot.slane %v540, 1
      %v543 = vsel %vm447, %v538, %v542
      %v545 = vshrl.u32 %v391, 16
      %v547 = vshll.u32 %v391, 16
      %v549 = vrot.slane %v547, 1
      %v550 = vor.u32 %v545, %v549
      %v552 = vshll.u32 %v439, 16
      %v554 = vrot.slane %v552, 1
      %v555 = vsel %vm447, %v550, %v554
      %v557 = vshrl.u32 %v392, 16
      %v559 = vshll.u32 %v392, 16
      %v561 = vrot.slane %v559, 1
      %v562 = vor.u32 %v557, %v561
      %v564 = vshll.u32 %v440, 16
      %v566 = vrot.slane %v564, 1
      %v567 = vsel %vm447, %v562, %v566
      %v569 = vshrl.u32 %v393, 16
      %v571 = vshll.u32 %v393, 16
      %v573 = vrot.slane %v571, 1
      %v574 = vor.u32 %v569, %v573
      %v576 = vshll.u32 %v441, 16
      %v578 = vrot.slane %v576, 1
      %v579 = vsel %vm447, %v574, %v578
      %v581 = vshrl.u32 %v394, 16
      %v583 = vshll.u32 %v394, 16
      %v585 = vrot.slane %v583, 1
      %v586 = vor.u32 %v581, %v585
      %v588 = vshll.u32 %v442, 16
      %v590 = vrot.slane %v588, 1
      %v591 = vsel %vm447, %v586, %v590
      %v593 = vshrl.u32 %v395, 16
      %v595 = vshll.u32 %v395, 16
      %v597 = vrot.slane %v595, 1
      %v598 = vor.u32 %v593, %v597
      %v600 = vshll.u32 %v443, 16
      %v602 = vrot.slane %v600, 1
      %v603 = vsel %vm447, %v598, %v602
      %v605 = vshrl.u32 %v396, 16
      %v607 = vshll.u32 %v396, 16
      %v609 = vrot.slane %v607, 1
      %v610 = vor.u32 %v605, %v609
      %v612 = vshll.u32 %v444, 16
      %v614 = vrot.slane %v612, 1
      %v615 = vsel %vm447, %v610, %v614
      %v617 = vshrl.u32 %v397, 16
      %v619 = vshll.u32 %v397, 16
      %v621 = vrot.slane %v619, 1
      %v622 = vor.u32 %v617, %v621
      %v624 = vshll.u32 %v445, 16
      %v626 = vrot.slane %v624, 1
      %v627 = vsel %vm447, %v622, %v626
      %v629 = vshrl.u32 %v398, 16
      %v631 = vshll.u32 %v398, 16
      %v633 = vrot.slane %v631, 1
      %v634 = vor.u32 %v629, %v633
      %v636 = vshll.u32 %v446, 16
      %v638 = vrot.slane %v636, 1
      %v639 = vsel %vm447, %v634, %v638
      %640 = vrot.lane.b32.xlu0 %v459, 36
      %v641 = vpop.permute.xlu0 %640
      %642 = vrot.lane.b32.xlu0 %v471, 36
      %v643 = vpop.permute.xlu0 %642
      %644 = vrot.lane.b32.xlu0 %v483, 36
      %v645 = vpop.permute.xlu0 %644
      %646 = vrot.lane.b32.xlu0 %v495, 36
      %v647 = vpop.permute.xlu0 %646
      %648 = vrot.lane.b32.xlu0 %v507, 36
      %v649 = vpop.permute.xlu0 %648
      %650 = vrot.lane.b32.xlu0 %v519, 36
      %v651 = vpop.permute.xlu0 %650
      %652 = vrot.lane.b32.xlu0 %v531, 36
      %v653 = vpop.permute.xlu0 %652
      %654 = vrot.lane.b32.xlu0 %v543, 36
      %v655 = vpop.permute.xlu0 %654
      %656 = vrot.lane.b32.xlu0 %v555, 36
      %v657 = vpop.permute.xlu0 %656
      %658 = vrot.lane.b32.xlu0 %v567, 36
      %v659 = vpop.permute.xlu0 %658
      %660 = vrot.lane.b32.xlu0 %v579, 36
      %v661 = vpop.permute.xlu0 %660
      %662 = vrot.lane.b32.xlu0 %v591, 36
      %v663 = vpop.permute.xlu0 %662
      %664 = vrot.lane.b32.xlu0 %v603, 36
      %v665 = vpop.permute.xlu0 %664
      %666 = vrot.lane.b32.xlu0 %v615, 36
      %v667 = vpop.permute.xlu0 %666
      %668 = vrot.lane.b32.xlu0 %v627, 36
      %v669 = vpop.permute.xlu0 %668
      %670 = vrot.lane.b32.xlu0 %v639, 36
      %v671 = vpop.permute.xlu0 %670
      %vm672 = vcmask 1046528
      %v673 = vrot.slane %v383, 1
      %v674 = vrot.slane %v431, 1
      %v675 = vsel %vm672, %v673, %v674
      %v676 = vrot.slane %v384, 1
      %v677 = vrot.slane %v432, 1
      %v678 = vsel %vm672, %v676, %v677
      %v679 = vrot.slane %v385, 1
      %v680 = vrot.slane %v433, 1
      %v681 = vsel %vm672, %v679, %v680
      %v682 = vrot.slane %v386, 1
      %v683 = vrot.slane %v434, 1
      %v684 = vsel %vm672, %v682, %v683
      %v685 = vrot.slane %v387, 1
      %v686 = vrot.slane %v435, 1
      %v687 = vsel %vm672, %v685, %v686
      %v688 = vrot.slane %v388, 1
      %v689 = vrot.slane %v436, 1
      %v690 = vsel %vm672, %v688, %v689
      %v691 = vrot.slane %v389, 1
      %v692 = vrot.slane %v437, 1
      %v693 = vsel %vm672, %v691, %v692
      %v694 = vrot.slane %v390, 1
      %v695 = vrot.slane %v438, 1
      %v696 = vsel %vm672, %v694, %v695
      %v697 = vrot.slane %v391, 1
      %v698 = vrot.slane %v439, 1
      %v699 = vsel %vm672, %v697, %v698
      %v700 = vrot.slane %v392, 1
      %v701 = vrot.slane %v440, 1
      %v702 = vsel %vm672, %v700, %v701
      %v703 = vrot.slane %v393, 1
      %v704 = vrot.slane %v441, 1
      %v705 = vsel %vm672, %v703, %v704
      %v706 = vrot.slane %v394, 1
      %v707 = vrot.slane %v442, 1
      %v708 = vsel %vm672, %v706, %v707
      %v709 = vrot.slane %v395, 1
      %v710 = vrot.slane %v443, 1
      %v711 = vsel %vm672, %v709, %v710
      %v712 = vrot.slane %v396, 1
      %v713 = vrot.slane %v444, 1
      %v714 = vsel %vm672, %v712, %v713
      %v715 = vrot.slane %v397, 1
      %v716 = vrot.slane %v445, 1
      %v717 = vsel %vm672, %v715, %v716
      %v718 = vrot.slane %v398, 1
      %v719 = vrot.slane %v446, 1
      %v720 = vsel %vm672, %v718, %v719
      %721 = vrot.lane.b32.xlu0 %v675, 72
      %v722 = vpop.permute.xlu0 %721
      %723 = vrot.lane.b32.xlu0 %v678, 72
      %v724 = vpop.permute.xlu0 %723
      %725 = vrot.lane.b32.xlu0 %v681, 72
      %v726 = vpop.permute.xlu0 %725
      %727 = vrot.lane.b32.xlu0 %v684, 72
      %v728 = vpop.permute.xlu0 %727
      %729 = vrot.lane.b32.xlu0 %v687, 72
      %v730 = vpop.permute.xlu0 %729
      %731 = vrot.lane.b32.xlu0 %v690, 72
      %v732 = vpop.permute.xlu0 %731
      %733 = vrot.lane.b32.xlu0 %v693, 72
      %v734 = vpop.permute.xlu0 %733
      %735 = vrot.lane.b32.xlu0 %v696, 72
      %v736 = vpop.permute.xlu0 %735
      %737 = vrot.lane.b32.xlu0 %v699, 72
      %v738 = vpop.permute.xlu0 %737
      %739 = vrot.lane.b32.xlu0 %v702, 72
      %v740 = vpop.permute.xlu0 %739
      %741 = vrot.lane.b32.xlu0 %v705, 72
      %v742 = vpop.permute.xlu0 %741
      %743 = vrot.lane.b32.xlu0 %v708, 72
      %v744 = vpop.permute.xlu0 %743
      %745 = vrot.lane.b32.xlu0 %v711, 72
      %v746 = vpop.permute.xlu0 %745
      %747 = vrot.lane.b32.xlu0 %v714, 72
      %v748 = vpop.permute.xlu0 %747
      %749 = vrot.lane.b32.xlu0 %v717, 72
      %v750 = vpop.permute.xlu0 %749
      %751 = vrot.lane.b32.xlu0 %v720, 72
      %v752 = vpop.permute.xlu0 %751
      %vm753 = vsmask.f32 6400
      %v754 = vrot.slane %v449, 1
      %v755 = vrot.slane %v451, 2
      %v756 = vor.u32 %v754, %v755
      %v757 = vshrl.u32 %v431, 16
      %v759 = vrot.slane %v757, 1
      %v760 = vrot.slane %v456, 2
      %v761 = vor.u32 %v759, %v760
      %v762 = vsel %vm753, %v756, %v761
      %v763 = vrot.slane %v461, 1
      %v764 = vrot.slane %v463, 2
      %v765 = vor.u32 %v763, %v764
      %v766 = vshrl.u32 %v432, 16
      %v768 = vrot.slane %v766, 1
      %v769 = vrot.slane %v468, 2
      %v770 = vor.u32 %v768, %v769
      %v771 = vsel %vm753, %v765, %v770
      %v772 = vrot.slane %v473, 1
      %v773 = vrot.slane %v475, 2
      %v774 = vor.u32 %v772, %v773
      %v775 = vshrl.u32 %v433, 16
      %v777 = vrot.slane %v775, 1
      %v778 = vrot.slane %v480, 2
      %v779 = vor.u32 %v777, %v778
      %v780 = vsel %vm753, %v774, %v779
      %v781 = vrot.slane %v485, 1
      %v782 = vrot.slane %v487, 2
      %v783 = vor.u32 %v781, %v782
      %v784 = vshrl.u32 %v434, 16
      %v786 = vrot.slane %v784, 1
      %v787 = vrot.slane %v492, 2
      %v788 = vor.u32 %v786, %v787
      %v789 = vsel %vm753, %v783, %v788
      %v790 = vrot.slane %v497, 1
      %v791 = vrot.slane %v499, 2
      %v792 = vor.u32 %v790, %v791
      %v793 = vshrl.u32 %v435, 16
      %v795 = vrot.slane %v793, 1
      %v796 = vrot.slane %v504, 2
      %v797 = vor.u32 %v795, %v796
      %v798 = vsel %vm753, %v792, %v797
      %v799 = vrot.slane %v509, 1
      %v800 = vrot.slane %v511, 2
      %v801 = vor.u32 %v799, %v800
      %v802 = vshrl.u32 %v436, 16
      %v804 = vrot.slane %v802, 1
      %v805 = vrot.slane %v516, 2
      %v806 = vor.u32 %v804, %v805
      %v807 = vsel %vm753, %v801, %v806
      %v808 = vrot.slane %v521, 1
      %v809 = vrot.slane %v523, 2
      %v810 = vor.u32 %v808, %v809
      %v811 = vshrl.u32 %v437, 16
      %v813 = vrot.slane %v811, 1
      %v814 = vrot.slane %v528, 2
      %v815 = vor.u32 %v813, %v814
      %v816 = vsel %vm753, %v810, %v815
      %v817 = vrot.slane %v533, 1
      %v818 = vrot.slane %v535, 2
      %v819 = vor.u32 %v817, %v818
      %v820 = vshrl.u32 %v438, 16
      %v822 = vrot.slane %v820, 1
      %v823 = vrot.slane %v540, 2
      %v824 = vor.u32 %v822, %v823
      %v825 = vsel %vm753, %v819, %v824
      %v826 = vrot.slane %v545, 1
      %v827 = vrot.slane %v547, 2
      %v828 = vor.u32 %v826, %v827
      %v829 = vshrl.u32 %v439, 16
      %v831 = vrot.slane %v829, 1
      %v832 = vrot.slane %v552, 2
      %v833 = vor.u32 %v831, %v832
      %v834 = vsel %vm753, %v828, %v833
      %v835 = vrot.slane %v557, 1
      %v836 = vrot.slane %v559, 2
      %v837 = vor.u32 %v835, %v836
      %v838 = vshrl.u32 %v440, 16
      %v840 = vrot.slane %v838, 1
      %v841 = vrot.slane %v564, 2
      %v842 = vor.u32 %v840, %v841
      %v843 = vsel %vm753, %v837, %v842
      %v844 = vrot.slane %v569, 1
      %v845 = vrot.slane %v571, 2
      %v846 = vor.u32 %v844, %v845
      %v847 = vshrl.u32 %v441, 16
      %v849 = vrot.slane %v847, 1
      %v850 = vrot.slane %v576, 2
      %v851 = vor.u32 %v849, %v850
      %v852 = vsel %vm753, %v846, %v851
      %v853 = vrot.slane %v581, 1
      %v854 = vrot.slane %v583, 2
      %v855 = vor.u32 %v853, %v854
      %v856 = vshrl.u32 %v442, 16
      %v858 = vrot.slane %v856, 1
      %v859 = vrot.slane %v588, 2
      %v860 = vor.u32 %v858, %v859
      %v861 = vsel %vm753, %v855, %v860
      %v862 = vrot.slane %v593, 1
      %v863 = vrot.slane %v595, 2
      %v864 = vor.u32 %v862, %v863
      %v865 = vshrl.u32 %v443, 16
      %v867 = vrot.slane %v865, 1
      %v868 = vrot.slane %v600, 2
      %v869 = vor.u32 %v867, %v868
      %v870 = vsel %vm753, %v864, %v869
      %v871 = vrot.slane %v605, 1
      %v872 = vrot.slane %v607, 2
      %v873 = vor.u32 %v871, %v872
      %v874 = vshrl.u32 %v444, 16
      %v876 = vrot.slane %v874, 1
      %v877 = vrot.slane %v612, 2
      %v878 = vor.u32 %v876, %v877
      %v879 = vsel %vm753, %v873, %v878
      %v880 = vrot.slane %v617, 1
      %v881 = vrot.slane %v619, 2
      %v882 = vor.u32 %v880, %v881
      %v883 = vshrl.u32 %v445, 16
      %v885 = vrot.slane %v883, 1
      %v886 = vrot.slane %v624, 2
      %v887 = vor.u32 %v885, %v886
      %v888 = vsel %vm753, %v882, %v887
      %v889 = vrot.slane %v629, 1
      %v890 = vrot.slane %v631, 2
      %v891 = vor.u32 %v889, %v890
      %v892 = vshrl.u32 %v446, 16
      %v894 = vrot.slane %v892, 1
      %v895 = vrot.slane %v636, 2
      %v896 = vor.u32 %v894, %v895
      %v897 = vsel %vm753, %v891, %v896
      %898 = vrot.lane.b32.xlu0 %v762, 108
      %v899 = vpop.permute.xlu0 %898
      %900 = vrot.lane.b32.xlu0 %v771, 108
      %v901 = vpop.permute.xlu0 %900
      %902 = vrot.lane.b32.xlu0 %v780, 108
      %v903 = vpop.permute.xlu0 %902
      %904 = vrot.lane.b32.xlu0 %v789, 108
      %v905 = vpop.permute.xlu0 %904
      %906 = vrot.lane.b32.xlu0 %v798, 108
      %v907 = vpop.permute.xlu0 %906
      %908 = vrot.lane.b32.xlu0 %v807, 108
      %v909 = vpop.permute.xlu0 %908
      %910 = vrot.lane.b32.xlu0 %v816, 108
      %v911 = vpop.permute.xlu0 %910
      %912 = vrot.lane.b32.xlu0 %v825, 108
      %v913 = vpop.permute.xlu0 %912
      %914 = vrot.lane.b32.xlu0 %v834, 108
      %v915 = vpop.permute.xlu0 %914
      %916 = vrot.lane.b32.xlu0 %v843, 108
      %v917 = vpop.permute.xlu0 %916
      %918 = vrot.lane.b32.xlu0 %v852, 108
      %v919 = vpop.permute.xlu0 %918
      %920 = vrot.lane.b32.xlu0 %v861, 108
      %v921 = vpop.permute.xlu0 %920
      %922 = vrot.lane.b32.xlu0 %v870, 108
      %v923 = vpop.permute.xlu0 %922
      %924 = vrot.lane.b32.xlu0 %v879, 108
      %v925 = vpop.permute.xlu0 %924
      %926 = vrot.lane.b32.xlu0 %v888, 108
      %v927 = vpop.permute.xlu0 %926
      %928 = vrot.lane.b32.xlu0 %v897, 108
      %v929 = vpop.permute.xlu0 %928
      %vm930 = vcmask 1045504
      %v931 = vrot.slane %v383, 2
      %v932 = vrot.slane %v431, 2
      %v933 = vsel %vm930, %v931, %v932
      %v934 = vrot.slane %v384, 2
      %v935 = vrot.slane %v432, 2
      %v936 = vsel %vm930, %v934, %v935
      %v937 = vrot.slane %v385, 2
      %v938 = vrot.slane %v433, 2
      %v939 = vsel %vm930, %v937, %v938
      %v940 = vrot.slane %v386, 2
      %v941 = vrot.slane %v434, 2
      %v942 = vsel %vm930, %v940, %v941
      %v943 = vrot.slane %v387, 2
      %v944 = vrot.slane %v435, 2
      %v945 = vsel %vm930, %v943, %v944
      %v946 = vrot.slane %v388, 2
      %v947 = vrot.slane %v436, 2
      %v948 = vsel %vm930, %v946, %v947
      %v949 = vrot.slane %v389, 2
      %v950 = vrot.slane %v437, 2
      %v951 = vsel %vm930, %v949, %v950
      %v952 = vrot.slane %v390, 2
      %v953 = vrot.slane %v438, 2
      %v954 = vsel %vm930, %v952, %v953
      %v955 = vrot.slane %v391, 2
      %v956 = vrot.slane %v439, 2
      %v957 = vsel %vm930, %v955, %v956
      %v958 = vrot.slane %v392, 2
      %v959 = vrot.slane %v440, 2
      %v960 = vsel %vm930, %v958, %v959
      %v961 = vrot.slane %v393, 2
      %v962 = vrot.slane %v441, 2
      %v963 = vsel %vm930, %v961, %v962
      %v964 = vrot.slane %v394, 2
      %v965 = vrot.slane %v442, 2
      %v966 = vsel %vm930, %v964, %v965
      %v967 = vrot.slane %v395, 2
      %v968 = vrot.slane %v443, 2
      %v969 = vsel %vm930, %v967, %v968
      %v970 = vrot.slane %v396, 2
      %v971 = vrot.slane %v444, 2
      %v972 = vsel %vm930, %v970, %v971
      %v973 = vrot.slane %v397, 2
      %v974 = vrot.slane %v445, 2
      %v975 = vsel %vm930, %v973, %v974
      %v976 = vrot.slane %v398, 2
      %v977 = vrot.slane %v446, 2
      %v978 = vsel %vm930, %v976, %v977
      %979 = vrot.lane.b32.xlu0 %v933, 16
      %v980 = vpop.permute.xlu0 %979
      %981 = vrot.lane.b32.xlu0 %v936, 16
      %v982 = vpop.permute.xlu0 %981
      %983 = vrot.lane.b32.xlu0 %v939, 16
      %v984 = vpop.permute.xlu0 %983
      %985 = vrot.lane.b32.xlu0 %v942, 16
      %v986 = vpop.permute.xlu0 %985
      %987 = vrot.lane.b32.xlu0 %v945, 16
      %v988 = vpop.permute.xlu0 %987
      %989 = vrot.lane.b32.xlu0 %v948, 16
      %v990 = vpop.permute.xlu0 %989
      %991 = vrot.lane.b32.xlu0 %v951, 16
      %v992 = vpop.permute.xlu0 %991
      %993 = vrot.lane.b32.xlu0 %v954, 16
      %v994 = vpop.permute.xlu0 %993
      %995 = vrot.lane.b32.xlu0 %v957, 16
      %v996 = vpop.permute.xlu0 %995
      %997 = vrot.lane.b32.xlu0 %v960, 16
      %v998 = vpop.permute.xlu0 %997
      %999 = vrot.lane.b32.xlu0 %v963, 16
      %v1000 = vpop.permute.xlu0 %999
      %1001 = vrot.lane.b32.xlu0 %v966, 16
      %v1002 = vpop.permute.xlu0 %1001
      %1003 = vrot.lane.b32.xlu0 %v969, 16
      %v1004 = vpop.permute.xlu0 %1003
      %1005 = vrot.lane.b32.xlu0 %v972, 16
      %v1006 = vpop.permute.xlu0 %1005
      %1007 = vrot.lane.b32.xlu0 %v975, 16
      %v1008 = vpop.permute.xlu0 %1007
      %1009 = vrot.lane.b32.xlu0 %v978, 16
      %v1010 = vpop.permute.xlu0 %1009
      %v1013 = vunpack.c.l.b16 %v307
      %v1014 = vunpack.c.l.b16 %v308
      %v1015 = vpack.c.b16 %v1014, %v1013
      %1016 = vrot.lane.b32.xlu0 %v384, 52
      %v1017 = vpop.permute.xlu0 %1016
      %1018 = vrot.lane.b32.xlu0 %v385, 52
      %v1019 = vpop.permute.xlu0 %1018
      %1020 = vrot.lane.b32.xlu0 %v386, 52
      %v1021 = vpop.permute.xlu0 %1020
      %1022 = vrot.lane.b32.xlu0 %v387, 52
      %v1023 = vpop.permute.xlu0 %1022
      %1024 = vrot.lane.b32.xlu0 %v388, 52
      %v1025 = vpop.permute.xlu0 %1024
      %1026 = vrot.lane.b32.xlu0 %v389, 52
      %v1027 = vpop.permute.xlu0 %1026
      %1028 = vrot.lane.b32.xlu0 %v390, 52
      %v1029 = vpop.permute.xlu0 %1028
      %1030 = vrot.lane.b32.xlu0 %v391, 52
      %v1031 = vpop.permute.xlu0 %1030
      %1032 = vrot.lane.b32.xlu0 %v392, 52
      %v1033 = vpop.permute.xlu0 %1032
      %1034 = vrot.lane.b32.xlu0 %v393, 52
      %v1035 = vpop.permute.xlu0 %1034
      %1036 = vrot.lane.b32.xlu0 %v394, 52
      %v1037 = vpop.permute.xlu0 %1036
      %1038 = vrot.lane.b32.xlu0 %v395, 52
      %v1039 = vpop.permute.xlu0 %1038
      %1040 = vrot.lane.b32.xlu0 %v396, 52
      %v1041 = vpop.permute.xlu0 %1040
      %1042 = vrot.lane.b32.xlu0 %v397, 52
      %v1043 = vpop.permute.xlu0 %1042
      %1044 = vrot.lane.b32.xlu0 %v398, 52
      %v1045 = vpop.permute.xlu0 %1044
      %1046 = vrot.lane.b32.xlu0 %v1015, 52
      %v1047 = vpop.permute.xlu0 %1046
      %v1049 = vunpack.c.l.b16 %v309
      %v1050 = vpack.c.b16 %v1049, %v1049
      %v1052 = vshrl.u32 %v1015, 16
      %v1054 = vshll.u32 %v1015, 16
      %v1056 = vrot.slane %v1054, 1
      %v1057 = vor.u32 %v1052, %v1056
      %v1059 = vshll.u32 %v1050, 16
      %v1061 = vrot.slane %v1059, 1
      %v1062 = vsel %vm447, %v1057, %v1061
      %1063 = vrot.lane.b32.xlu0 %v471, 88
      %v1064 = vpop.permute.xlu0 %1063
      %1065 = vrot.lane.b32.xlu0 %v483, 88
      %v1066 = vpop.permute.xlu0 %1065
      %1067 = vrot.lane.b32.xlu0 %v495, 88
      %v1068 = vpop.permute.xlu0 %1067
      %1069 = vrot.lane.b32.xlu0 %v507, 88
      %v1070 = vpop.permute.xlu0 %1069
      %1071 = vrot.lane.b32.xlu0 %v519, 88
      %v1072 = vpop.permute.xlu0 %1071
      %1073 = vrot.lane.b32.xlu0 %v531, 88
      %v1074 = vpop.permute.xlu0 %1073
      %1075 = vrot.lane.b32.xlu0 %v543, 88
      %v1076 = vpop.permute.xlu0 %1075
      %1077 = vrot.lane.b32.xlu0 %v555, 88
      %v1078 = vpop.permute.xlu0 %1077
      %1079 = vrot.lane.b32.xlu0 %v567, 88
      %v1080 = vpop.permute.xlu0 %1079
      %1081 = vrot.lane.b32.xlu0 %v579, 88
      %v1082 = vpop.permute.xlu0 %1081
      %1083 = vrot.lane.b32.xlu0 %v591, 88
      %v1084 = vpop.permute.xlu0 %1083
      %1085 = vrot.lane.b32.xlu0 %v603, 88
      %v1086 = vpop.permute.xlu0 %1085
      %1087 = vrot.lane.b32.xlu0 %v615, 88
      %v1088 = vpop.permute.xlu0 %1087
      %1089 = vrot.lane.b32.xlu0 %v627, 88
      %v1090 = vpop.permute.xlu0 %1089
      %1091 = vrot.lane.b32.xlu0 %v639, 88
      %v1092 = vpop.permute.xlu0 %1091
      %1093 = vrot.lane.b32.xlu0 %v1062, 88
      %v1094 = vpop.permute.xlu0 %1093
      %v1095 = vrot.slane %v1015, 1
      %v1096 = vrot.slane %v1050, 1
      %v1097 = vsel %vm672, %v1095, %v1096
      %1098 = vrot.lane.b32.xlu0 %v678, 124
      %v1099 = vpop.permute.xlu0 %1098
      %1100 = vrot.lane.b32.xlu0 %v681, 124
      %v1101 = vpop.permute.xlu0 %1100
      %1102 = vrot.lane.b32.xlu0 %v684, 124
      %v1103 = vpop.permute.xlu0 %1102
      %1104 = vrot.lane.b32.xlu0 %v687, 124
      %v1105 = vpop.permute.xlu0 %1104
      %1106 = vrot.lane.b32.xlu0 %v690, 124
      %v1107 = vpop.permute.xlu0 %1106
      %1108 = vrot.lane.b32.xlu0 %v693, 124
      %v1109 = vpop.permute.xlu0 %1108
      %1110 = vrot.lane.b32.xlu0 %v696, 124
      %v1111 = vpop.permute.xlu0 %1110
      %1112 = vrot.lane.b32.xlu0 %v699, 124
      %v1113 = vpop.permute.xlu0 %1112
      %1114 = vrot.lane.b32.xlu0 %v702, 124
      %v1115 = vpop.permute.xlu0 %1114
      %1116 = vrot.lane.b32.xlu0 %v705, 124
      %v1117 = vpop.permute.xlu0 %1116
      %1118 = vrot.lane.b32.xlu0 %v708, 124
      %v1119 = vpop.permute.xlu0 %1118
      %1120 = vrot.lane.b32.xlu0 %v711, 124
      %v1121 = vpop.permute.xlu0 %1120
      %1122 = vrot.lane.b32.xlu0 %v714, 124
      %v1123 = vpop.permute.xlu0 %1122
      %1124 = vrot.lane.b32.xlu0 %v717, 124
      %v1125 = vpop.permute.xlu0 %1124
      %1126 = vrot.lane.b32.xlu0 %v720, 124
      %v1127 = vpop.permute.xlu0 %1126
      %1128 = vrot.lane.b32.xlu0 %v1097, 124
      %v1129 = vpop.permute.xlu0 %1128
      %v1130 = vrot.slane %v1052, 1
      %v1131 = vrot.slane %v1054, 2
      %v1132 = vor.u32 %v1130, %v1131
      %v1133 = vshrl.u32 %v1050, 16
      %v1135 = vrot.slane %v1133, 1
      %v1136 = vrot.slane %v1059, 2
      %v1137 = vor.u32 %v1135, %v1136
      %v1138 = vsel %vm753, %v1132, %v1137
      %1139 = vrot.lane.b32.xlu0 %v771, 32
      %v1140 = vpop.permute.xlu0 %1139
      %1141 = vrot.lane.b32.xlu0 %v780, 32
      %v1142 = vpop.permute.xlu0 %1141
      %1143 = vrot.lane.b32.xlu0 %v789, 32
      %v1144 = vpop.permute.xlu0 %1143
      %1145 = vrot.lane.b32.xlu0 %v798, 32
      %v1146 = vpop.permute.xlu0 %1145
      %1147 = vrot.lane.b32.xlu0 %v807, 32
      %v1148 = vpop.permute.xlu0 %1147
      %1149 = vrot.lane.b32.xlu0 %v816, 32
      %v1150 = vpop.permute.xlu0 %1149
      %1151 = vrot.lane.b32.xlu0 %v825, 32
      %v1152 = vpop.permute.xlu0 %1151
      %1153 = vrot.lane.b32.xlu0 %v834, 32
      %v1154 = vpop.permute.xlu0 %1153
      %1155 = vrot.lane.b32.xlu0 %v843, 32
      %v1156 = vpop.permute.xlu0 %1155
      %1157 = vrot.lane.b32.xlu0 %v852, 32
      %v1158 = vpop.permute.xlu0 %1157
      %1159 = vrot.lane.b32.xlu0 %v861, 32
      %v1160 = vpop.permute.xlu0 %1159
      %1161 = vrot.lane.b32.xlu0 %v870, 32
      %v1162 = vpop.permute.xlu0 %1161
      %1163 = vrot.lane.b32.xlu0 %v879, 32
      %v1164 = vpop.permute.xlu0 %1163
      %1165 = vrot.lane.b32.xlu0 %v888, 32
      %v1166 = vpop.permute.xlu0 %1165
      %1167 = vrot.lane.b32.xlu0 %v897, 32
      %v1168 = vpop.permute.xlu0 %1167
      %1169 = vrot.lane.b32.xlu0 %v1138, 32
      %v1170 = vpop.permute.xlu0 %1169
      %v1171 = vrot.slane %v1015, 2
      %v1172 = vrot.slane %v1050, 2
      %v1173 = vsel %vm930, %v1171, %v1172
      %1174 = vrot.lane.b32.xlu0 %v936, 68
      %v1175 = vpop.permute.xlu0 %1174
      %1176 = vrot.lane.b32.xlu0 %v939, 68
      %v1177 = vpop.permute.xlu0 %1176
      %1178 = vrot.lane.b32.xlu0 %v942, 68
      %v1179 = vpop.permute.xlu0 %1178
      %1180 = vrot.lane.b32.xlu0 %v945, 68
      %v1181 = vpop.permute.xlu0 %1180
      %1182 = vrot.lane.b32.xlu0 %v948, 68
      %v1183 = vpop.permute.xlu0 %1182
      %1184 = vrot.lane.b32.xlu0 %v951, 68
      %v1185 = vpop.permute.xlu0 %1184
      %1186 = vrot.lane.b32.xlu0 %v954, 68
      %v1187 = vpop.permute.xlu0 %1186
      %1188 = vrot.lane.b32.xlu0 %v957, 68
      %v1189 = vpop.permute.xlu0 %1188
      %1190 = vrot.lane.b32.xlu0 %v960, 68
      %v1191 = vpop.permute.xlu0 %1190
      %1192 = vrot.lane.b32.xlu0 %v963, 68
      %v1193 = vpop.permute.xlu0 %1192
      %1194 = vrot.lane.b32.xlu0 %v966, 68
      %v1195 = vpop.permute.xlu0 %1194
      %1196 = vrot.lane.b32.xlu0 %v969, 68
      %v1197 = vpop.permute.xlu0 %1196
      %1198 = vrot.lane.b32.xlu0 %v972, 68
      %v1199 = vpop.permute.xlu0 %1198
      %1200 = vrot.lane.b32.xlu0 %v975, 68
      %v1201 = vpop.permute.xlu0 %1200
      %1202 = vrot.lane.b32.xlu0 %v978, 68
      %v1203 = vpop.permute.xlu0 %1202
      %1204 = vrot.lane.b32.xlu0 %v1173, 68
      %v1205 = vpop.permute.xlu0 %1204
      %v1208 = vunpack.c.l.b16 %v310
      %v1209 = vunpack.c.l.b16 %v311
      %v1210 = vpack.c.b16 %v1209, %v1208
      %1211 = vrot.lane.b32.xlu0 %v385, 104
      %v1212 = vpop.permute.xlu0 %1211
      %1213 = vrot.lane.b32.xlu0 %v386, 104
      %v1214 = vpop.permute.xlu0 %1213
      %1215 = vrot.lane.b32.xlu0 %v387, 104
      %v1216 = vpop.permute.xlu0 %1215
      %1217 = vrot.lane.b32.xlu0 %v388, 104
      %v1218 = vpop.permute.xlu0 %1217
      %1219 = vrot.lane.b32.xlu0 %v389, 104
      %v1220 = vpop.permute.xlu0 %1219
      %1221 = vrot.lane.b32.xlu0 %v390, 104
      %v1222 = vpop.permute.xlu0 %1221
      %1223 = vrot.lane.b32.xlu0 %v391, 104
      %v1224 = vpop.permute.xlu0 %1223
      %1225 = vrot.lane.b32.xlu0 %v392, 104
      %v1226 = vpop.permute.xlu0 %1225
      %1227 = vrot.lane.b32.xlu0 %v393, 104
      %v1228 = vpop.permute.xlu0 %1227
      %1229 = vrot.lane.b32.xlu0 %v394, 104
      %v1230 = vpop.permute.xlu0 %1229
      %1231 = vrot.lane.b32.xlu0 %v395, 104
      %v1232 = vpop.permute.xlu0 %1231
      %1233 = vrot.lane.b32.xlu0 %v396, 104
      %v1234 = vpop.permute.xlu0 %1233
      %1235 = vrot.lane.b32.xlu0 %v397, 104
      %v1236 = vpop.permute.xlu0 %1235
      %1237 = vrot.lane.b32.xlu0 %v398, 104
      %v1238 = vpop.permute.xlu0 %1237
      %1239 = vrot.lane.b32.xlu0 %v1015, 104
      %v1240 = vpop.permute.xlu0 %1239
      %1241 = vrot.lane.b32.xlu0 %v1210, 104
      %v1242 = vpop.permute.xlu0 %1241
      %v1244 = vunpack.c.l.b16 %v312
      %v1245 = vpack.c.b16 %v1244, %v1244
      %v1247 = vshrl.u32 %v1210, 16
      %v1249 = vshll.u32 %v1210, 16
      %v1251 = vrot.slane %v1249, 1
      %v1252 = vor.u32 %v1247, %v1251
      %v1254 = vshll.u32 %v1245, 16
      %v1256 = vrot.slane %v1254, 1
      %v1257 = vsel %vm447, %v1252, %v1256
      %1258 = vrot.lane.b32.xlu0 %v483, 12
      %v1259 = vpop.permute.xlu0 %1258
      %1260 = vrot.lane.b32.xlu0 %v495, 12
      %v1261 = vpop.permute.xlu0 %1260
      %1262 = vrot.lane.b32.xlu0 %v507, 12
      %v1263 = vpop.permute.xlu0 %1262
      %1264 = vrot.lane.b32.xlu0 %v519, 12
      %v1265 = vpop.permute.xlu0 %1264
      %1266 = vrot.lane.b32.xlu0 %v531, 12
      %v1267 = vpop.permute.xlu0 %1266
      %1268 = vrot.lane.b32.xlu0 %v543, 12
      %v1269 = vpop.permute.xlu0 %1268
      %1270 = vrot.lane.b32.xlu0 %v555, 12
      %v1271 = vpop.permute.xlu0 %1270
      %1272 = vrot.lane.b32.xlu0 %v567, 12
      %v1273 = vpop.permute.xlu0 %1272
      %1274 = vrot.lane.b32.xlu0 %v579, 12
      %v1275 = vpop.permute.xlu0 %1274
      %1276 = vrot.lane.b32.xlu0 %v591, 12
      %v1277 = vpop.permute.xlu0 %1276
      %1278 = vrot.lane.b32.xlu0 %v603, 12
      %v1279 = vpop.permute.xlu0 %1278
      %1280 = vrot.lane.b32.xlu0 %v615, 12
      %v1281 = vpop.permute.xlu0 %1280
      %1282 = vrot.lane.b32.xlu0 %v627, 12
      %v1283 = vpop.permute.xlu0 %1282
      %1284 = vrot.lane.b32.xlu0 %v639, 12
      %v1285 = vpop.permute.xlu0 %1284
      %1286 = vrot.lane.b32.xlu0 %v1062, 12
      %v1287 = vpop.permute.xlu0 %1286
      %1288 = vrot.lane.b32.xlu0 %v1257, 12
      %v1289 = vpop.permute.xlu0 %1288
      %v1290 = vrot.slane %v1210, 1
      %v1291 = vrot.slane %v1245, 1
      %v1292 = vsel %vm672, %v1290, %v1291
      %1293 = vrot.lane.b32.xlu0 %v681, 48
      %v1294 = vpop.permute.xlu0 %1293
      %1295 = vrot.lane.b32.xlu0 %v684, 48
      %v1296 = vpop.permute.xlu0 %1295
      %1297 = vrot.lane.b32.xlu0 %v687, 48
      %v1298 = vpop.permute.xlu0 %1297
      %1299 = vrot.lane.b32.xlu0 %v690, 48
      %v1300 = vpop.permute.xlu0 %1299
      %1301 = vrot.lane.b32.xlu0 %v693, 48
      %v1302 = vpop.permute.xlu0 %1301
      %1303 = vrot.lane.b32.xlu0 %v696, 48
      %v1304 = vpop.permute.xlu0 %1303
      %1305 = vrot.lane.b32.xlu0 %v699, 48
      %v1306 = vpop.permute.xlu0 %1305
      %1307 = vrot.lane.b32.xlu0 %v702, 48
      %v1308 = vpop.permute.xlu0 %1307
      %1309 = vrot.lane.b32.xlu0 %v705, 48
      %v1310 = vpop.permute.xlu0 %1309
      %1311 = vrot.lane.b32.xlu0 %v708, 48
      %v1312 = vpop.permute.xlu0 %1311
      %1313 = vrot.lane.b32.xlu0 %v711, 48
      %v1314 = vpop.permute.xlu0 %1313
      %1315 = vrot.lane.b32.xlu0 %v714, 48
      %v1316 = vpop.permute.xlu0 %1315
      %1317 = vrot.lane.b32.xlu0 %v717, 48
      %v1318 = vpop.permute.xlu0 %1317
      %1319 = vrot.lane.b32.xlu0 %v720, 48
      %v1320 = vpop.permute.xlu0 %1319
      %1321 = vrot.lane.b32.xlu0 %v1097, 48
      %v1322 = vpop.permute.xlu0 %1321
      %1323 = vrot.lane.b32.xlu0 %v1292, 48
      %v1324 = vpop.permute.xlu0 %1323
      %v1325 = vrot.slane %v1247, 1
      %v1326 = vrot.slane %v1249, 2
      %v1327 = vor.u32 %v1325, %v1326
      %v1328 = vshrl.u32 %v1245, 16
      %v1330 = vrot.slane %v1328, 1
      %v1331 = vrot.slane %v1254, 2
      %v1332 = vor.u32 %v1330, %v1331
      %v1333 = vsel %vm753, %v1327, %v1332
      %1334 = vrot.lane.b32.xlu0 %v780, 84
      %v1335 = vpop.permute.xlu0 %1334
      %1336 = vrot.lane.b32.xlu0 %v789, 84
      %v1337 = vpop.permute.xlu0 %1336
      %1338 = vrot.lane.b32.xlu0 %v798, 84
      %v1339 = vpop.permute.xlu0 %1338
      %1340 = vrot.lane.b32.xlu0 %v807, 84
      %v1341 = vpop.permute.xlu0 %1340
      %1342 = vrot.lane.b32.xlu0 %v816, 84
      %v1343 = vpop.permute.xlu0 %1342
      %1344 = vrot.lane.b32.xlu0 %v825, 84
      %v1345 = vpop.permute.xlu0 %1344
      %1346 = vrot.lane.b32.xlu0 %v834, 84
      %v1347 = vpop.permute.xlu0 %1346
      %1348 = vrot.lane.b32.xlu0 %v843, 84
      %v1349 = vpop.permute.xlu0 %1348
      %1350 = vrot.lane.b32.xlu0 %v852, 84
      %v1351 = vpop.permute.xlu0 %1350
      %1352 = vrot.lane.b32.xlu0 %v861, 84
      %v1353 = vpop.permute.xlu0 %1352
      %1354 = vrot.lane.b32.xlu0 %v870, 84
      %v1355 = vpop.permute.xlu0 %1354
      %1356 = vrot.lane.b32.xlu0 %v879, 84
      %v1357 = vpop.permute.xlu0 %1356
      %1358 = vrot.lane.b32.xlu0 %v888, 84
      %v1359 = vpop.permute.xlu0 %1358
      %1360 = vrot.lane.b32.xlu0 %v897, 84
      %v1361 = vpop.permute.xlu0 %1360
      %1362 = vrot.lane.b32.xlu0 %v1138, 84
      %v1363 = vpop.permute.xlu0 %1362
      %1364 = vrot.lane.b32.xlu0 %v1333, 84
      %v1365 = vpop.permute.xlu0 %1364
      %v1366 = vrot.slane %v1210, 2
      %v1367 = vrot.slane %v1245, 2
      %v1368 = vsel %vm930, %v1366, %v1367
      %1369 = vrot.lane.b32.xlu0 %v939, 120
      %v1370 = vpop.permute.xlu0 %1369
      %1371 = vrot.lane.b32.xlu0 %v942, 120
      %v1372 = vpop.permute.xlu0 %1371
      %1373 = vrot.lane.b32.xlu0 %v945, 120
      %v1374 = vpop.permute.xlu0 %1373
      %1375 = vrot.lane.b32.xlu0 %v948, 120
      %v1376 = vpop.permute.xlu0 %1375
      %1377 = vrot.lane.b32.xlu0 %v951, 120
      %v1378 = vpop.permute.xlu0 %1377
      %1379 = vrot.lane.b32.xlu0 %v954, 120
      %v1380 = vpop.permute.xlu0 %1379
      %1381 = vrot.lane.b32.xlu0 %v957, 120
      %v1382 = vpop.permute.xlu0 %1381
      %1383 = vrot.lane.b32.xlu0 %v960, 120
      %v1384 = vpop.permute.xlu0 %1383
      %1385 = vrot.lane.b32.xlu0 %v963, 120
      %v1386 = vpop.permute.xlu0 %1385
      %1387 = vrot.lane.b32.xlu0 %v966, 120
      %v1388 = vpop.permute.xlu0 %1387
      %1389 = vrot.lane.b32.xlu0 %v969, 120
      %v1390 = vpop.permute.xlu0 %1389
      %1391 = vrot.lane.b32.xlu0 %v972, 120
      %v1392 = vpop.permute.xlu0 %1391
      %1393 = vrot.lane.b32.xlu0 %v975, 120
      %v1394 = vpop.permute.xlu0 %1393
      %1395 = vrot.lane.b32.xlu0 %v978, 120
      %v1396 = vpop.permute.xlu0 %1395
      %1397 = vrot.lane.b32.xlu0 %v1173, 120
      %v1398 = vpop.permute.xlu0 %1397
      %1399 = vrot.lane.b32.xlu0 %v1368, 120
      %v1400 = vpop.permute.xlu0 %1399
      %v1403 = vunpack.c.l.b16 %v313
      %v1404 = vunpack.c.l.b16 %v314
      %v1405 = vpack.c.b16 %v1404, %v1403
      %1406 = vrot.lane.b32.xlu0 %v386, 28
      %v1407 = vpop.permute.xlu0 %1406
      %1408 = vrot.lane.b32.xlu0 %v387, 28
      %v1409 = vpop.permute.xlu0 %1408
      %1410 = vrot.lane.b32.xlu0 %v388, 28
      %v1411 = vpop.permute.xlu0 %1410
      %1412 = vrot.lane.b32.xlu0 %v389, 28
      %v1413 = vpop.permute.xlu0 %1412
      %1414 = vrot.lane.b32.xlu0 %v390, 28
      %v1415 = vpop.permute.xlu0 %1414
      %1416 = vrot.lane.b32.xlu0 %v391, 28
      %v1417 = vpop.permute.xlu0 %1416
      %1418 = vrot.lane.b32.xlu0 %v392, 28
      %v1419 = vpop.permute.xlu0 %1418
      %1420 = vrot.lane.b32.xlu0 %v393, 28
      %v1421 = vpop.permute.xlu0 %1420
      %1422 = vrot.lane.b32.xlu0 %v394, 28
      %v1423 = vpop.permute.xlu0 %1422
      %1424 = vrot.lane.b32.xlu0 %v395, 28
      %v1425 = vpop.permute.xlu0 %1424
      %1426 = vrot.lane.b32.xlu0 %v396, 28
      %v1427 = vpop.permute.xlu0 %1426
      %1428 = vrot.lane.b32.xlu0 %v397, 28
      %v1429 = vpop.permute.xlu0 %1428
      %1430 = vrot.lane.b32.xlu0 %v398, 28
      %v1431 = vpop.permute.xlu0 %1430
      %1432 = vrot.lane.b32.xlu0 %v1015, 28
      %v1433 = vpop.permute.xlu0 %1432
      %1434 = vrot.lane.b32.xlu0 %v1210, 28
      %v1435 = vpop.permute.xlu0 %1434
      %1436 = vrot.lane.b32.xlu0 %v1405, 28
      %v1437 = vpop.permute.xlu0 %1436
      %vm1438 = vcmask 293888
      %v1440 = vsel %vm1438, %v383, %v641
      %v1442 = vsel %vm1438, %v384, %v643
      %v1444 = vsel %vm1438, %v385, %v645
      %v1446 = vsel %vm1438, %v386, %v647
      %v1448 = vsel %vm1438, %v387, %v649
      %v1450 = vsel %vm1438, %v388, %v651
      %v1452 = vsel %vm1438, %v389, %v653
      %v1454 = vsel %vm1438, %v390, %v655
      %v1456 = vsel %vm1438, %v391, %v657
      %v1458 = vsel %vm1438, %v392, %v659
      %v1460 = vsel %vm1438, %v393, %v661
      %v1462 = vsel %vm1438, %v394, %v663
      %v1464 = vsel %vm1438, %v395, %v665
      %v1466 = vsel %vm1438, %v396, %v667
      %v1468 = vsel %vm1438, %v397, %v669
      %v1470 = vsel %vm1438, %v398, %v671
      %vm1471 = vcmask 588800
      %v1473 = vsel %vm1471, %v1440, %v722
      %v1475 = vsel %vm1471, %v1442, %v724
      %v1477 = vsel %vm1471, %v1444, %v726
      %v1479 = vsel %vm1471, %v1446, %v728
      %v1481 = vsel %vm1471, %v1448, %v730
      %v1483 = vsel %vm1471, %v1450, %v732
      %v1485 = vsel %vm1471, %v1452, %v734
      %v1487 = vsel %vm1471, %v1454, %v736
      %v1489 = vsel %vm1471, %v1456, %v738
      %v1491 = vsel %vm1471, %v1458, %v740
      %v1493 = vsel %vm1471, %v1460, %v742
      %v1495 = vsel %vm1471, %v1462, %v744
      %v1497 = vsel %vm1471, %v1464, %v746
      %v1499 = vsel %vm1471, %v1466, %v748
      %v1501 = vsel %vm1471, %v1468, %v750
      %v1503 = vsel %vm1471, %v1470, %v752
      %vm1504 = vcmask 883712
      %v1506 = vsel %vm1504, %v1473, %v899
      %v1509 = vsel %vm1504, %v1475, %v901
      %v1512 = vsel %vm1504, %v1477, %v903
      %v1515 = vsel %vm1504, %v1479, %v905
      %v1518 = vsel %vm1504, %v1481, %v907
      %v1521 = vsel %vm1504, %v1483, %v909
      %v1524 = vsel %vm1504, %v1485, %v911
      %v1527 = vsel %vm1504, %v1487, %v913
      %v1530 = vsel %vm1504, %v1489, %v915
      %v1533 = vsel %vm1504, %v1491, %v917
      %v1536 = vsel %vm1504, %v1493, %v919
      %v1539 = vsel %vm1504, %v1495, %v921
      %v1542 = vsel %vm1504, %v1497, %v923
      %v1545 = vsel %vm1504, %v1499, %v925
      %v1548 = vsel %vm1504, %v1501, %v927
      %v1551 = vsel %vm1504, %v1503, %v929
      %vm1553 = vcmask 130048
      %v1555 = vsel %vm1553, %v899, %v980
      %v1557 = vsel %vm1553, %v901, %v982
      %v1559 = vsel %vm1553, %v903, %v984
      %v1561 = vsel %vm1553, %v905, %v986
      %v1563 = vsel %vm1553, %v907, %v988
      %v1565 = vsel %vm1553, %v909, %v990
      %v1567 = vsel %vm1553, %v911, %v992
      %v1569 = vsel %vm1553, %v913, %v994
      %v1571 = vsel %vm1553, %v915, %v996
      %v1573 = vsel %vm1553, %v917, %v998
      %v1575 = vsel %vm1553, %v919, %v1000
      %v1577 = vsel %vm1553, %v921, %v1002
      %v1579 = vsel %vm1553, %v923, %v1004
      %v1581 = vsel %vm1553, %v925, %v1006
      %v1583 = vsel %vm1553, %v927, %v1008
      %v1585 = vsel %vm1553, %v929, %v1010
      %vm1586 = vcmask 424960
      %v1588 = vsel %vm1586, %v1555, %v1017
      %v1590 = vsel %vm1586, %v1557, %v1019
      %v1592 = vsel %vm1586, %v1559, %v1021
      %v1594 = vsel %vm1586, %v1561, %v1023
      %v1596 = vsel %vm1586, %v1563, %v1025
      %v1598 = vsel %vm1586, %v1565, %v1027
      %v1600 = vsel %vm1586, %v1567, %v1029
      %v1602 = vsel %vm1586, %v1569, %v1031
      %v1604 = vsel %vm1586, %v1571, %v1033
      %v1606 = vsel %vm1586, %v1573, %v1035
      %v1608 = vsel %vm1586, %v1575, %v1037
      %v1610 = vsel %vm1586, %v1577, %v1039
      %v1612 = vsel %vm1586, %v1579, %v1041
      %v1614 = vsel %vm1586, %v1581, %v1043
      %v1616 = vsel %vm1586, %v1583, %v1045
      %v1618 = vsel %vm1586, %v1585, %v1047
      %vm1619 = vcmask 719872
      %v1621 = vsel %vm1619, %v1588, %v1064
      %v1623 = vsel %vm1619, %v1590, %v1066
      %v1625 = vsel %vm1619, %v1592, %v1068
      %v1627 = vsel %vm1619, %v1594, %v1070
      %v1629 = vsel %vm1619, %v1596, %v1072
      %v1631 = vsel %vm1619, %v1598, %v1074
      %v1633 = vsel %vm1619, %v1600, %v1076
      %v1635 = vsel %vm1619, %v1602, %v1078
      %v1637 = vsel %vm1619, %v1604, %v1080
      %v1639 = vsel %vm1619, %v1606, %v1082
      %v1641 = vsel %vm1619, %v1608, %v1084
      %v1643 = vsel %vm1619, %v1610, %v1086
      %v1645 = vsel %vm1619, %v1612, %v1088
      %v1647 = vsel %vm1619, %v1614, %v1090
      %v1649 = vsel %vm1619, %v1616, %v1092
      %v1651 = vsel %vm1619, %v1618, %v1094
      %vm1652 = vcmask 1014784
      %v1654 = vsel %vm1652, %v1621, %v1099
      %v1657 = vsel %vm1652, %v1623, %v1101
      %v1660 = vsel %vm1652, %v1625, %v1103
      %v1663 = vsel %vm1652, %v1627, %v1105
      %v1666 = vsel %vm1652, %v1629, %v1107
      %v1669 = vsel %vm1652, %v1631, %v1109
      %v1672 = vsel %vm1652, %v1633, %v1111
      %v1675 = vsel %vm1652, %v1635, %v1113
      %v1678 = vsel %vm1652, %v1637, %v1115
      %v1681 = vsel %vm1652, %v1639, %v1117
      %v1684 = vsel %vm1652, %v1641, %v1119
      %v1687 = vsel %vm1652, %v1643, %v1121
      %v1690 = vsel %vm1652, %v1645, %v1123
      %v1693 = vsel %vm1652, %v1647, %v1125
      %v1696 = vsel %vm1652, %v1649, %v1127
      %v1699 = vsel %vm1652, %v1651, %v1129
      %vm1701 = vcmask 261120
      %v1703 = vsel %vm1701, %v1099, %v1140
      %v1705 = vsel %vm1701, %v1101, %v1142
      %v1707 = vsel %vm1701, %v1103, %v1144
      %v1709 = vsel %vm1701, %v1105, %v1146
      %v1711 = vsel %vm1701, %v1107, %v1148
      %v1713 = vsel %vm1701, %v1109, %v1150
      %v1715 = vsel %vm1701, %v1111, %v1152
      %v1717 = vsel %vm1701, %v1113, %v1154
      %v1719 = vsel %vm1701, %v1115, %v1156
      %v1721 = vsel %vm1701, %v1117, %v1158
      %v1723 = vsel %vm1701, %v1119, %v1160
      %v1725 = vsel %vm1701, %v1121, %v1162
      %v1727 = vsel %vm1701, %v1123, %v1164
      %v1729 = vsel %vm1701, %v1125, %v1166
      %v1731 = vsel %vm1701, %v1127, %v1168
      %v1733 = vsel %vm1701, %v1129, %v1170
      %vm1734 = vcmask 556032
      %v1736 = vsel %vm1734, %v1703, %v1175
      %v1738 = vsel %vm1734, %v1705, %v1177
      %v1740 = vsel %vm1734, %v1707, %v1179
      %v1742 = vsel %vm1734, %v1709, %v1181
      %v1744 = vsel %vm1734, %v1711, %v1183
      %v1746 = vsel %vm1734, %v1713, %v1185
      %v1748 = vsel %vm1734, %v1715, %v1187
      %v1750 = vsel %vm1734, %v1717, %v1189
      %v1752 = vsel %vm1734, %v1719, %v1191
      %v1754 = vsel %vm1734, %v1721, %v1193
      %v1756 = vsel %vm1734, %v1723, %v1195
      %v1758 = vsel %vm1734, %v1725, %v1197
      %v1760 = vsel %vm1734, %v1727, %v1199
      %v1762 = vsel %vm1734, %v1729, %v1201
      %v1764 = vsel %vm1734, %v1731, %v1203
      %v1766 = vsel %vm1734, %v1733, %v1205
      %vm1767 = vcmask 850944
      %v1769 = vsel %vm1767, %v1736, %v1212
      %v1772 = vsel %vm1767, %v1738, %v1214
      %v1775 = vsel %vm1767, %v1740, %v1216
      %v1778 = vsel %vm1767, %v1742, %v1218
      %v1781 = vsel %vm1767, %v1744, %v1220
      %v1784 = vsel %vm1767, %v1746, %v1222
      %v1787 = vsel %vm1767, %v1748, %v1224
      %v1790 = vsel %vm1767, %v1750, %v1226
      %v1793 = vsel %vm1767, %v1752, %v1228
      %v1796 = vsel %vm1767, %v1754, %v1230
      %v1799 = vsel %vm1767, %v1756, %v1232
      %v1802 = vsel %vm1767, %v1758, %v1234
      %v1805 = vsel %vm1767, %v1760, %v1236
      %v1808 = vsel %vm1767, %v1762, %v1238
      %v1811 = vsel %vm1767, %v1764, %v1240
      %v1814 = vsel %vm1767, %v1766, %v1242
      %vm1816 = vcmask 97280
      %v1818 = vsel %vm1816, %v1212, %v1259
      %v1820 = vsel %vm1816, %v1214, %v1261
      %v1822 = vsel %vm1816, %v1216, %v1263
      %v1824 = vsel %vm1816, %v1218, %v1265
      %v1826 = vsel %vm1816, %v1220, %v1267
      %v1828 = vsel %vm1816, %v1222, %v1269
      %v1830 = vsel %vm1816, %v1224, %v1271
      %v1832 = vsel %vm1816, %v1226, %v1273
      %v1834 = vsel %vm1816, %v1228, %v1275
      %v1836 = vsel %vm1816, %v1230, %v1277
      %v1838 = vsel %vm1816, %v1232, %v1279
      %v1840 = vsel %vm1816, %v1234, %v1281
      %v1842 = vsel %vm1816, %v1236, %v1283
      %v1844 = vsel %vm1816, %v1238, %v1285
      %v1846 = vsel %vm1816, %v1240, %v1287
      %v1848 = vsel %vm1816, %v1242, %v1289
      %vm1849 = vcmask 392192
      %v1851 = vsel %vm1849, %v1818, %v1294
      %v1853 = vsel %vm1849, %v1820, %v1296
      %v1855 = vsel %vm1849, %v1822, %v1298
      %v1857 = vsel %vm1849, %v1824, %v1300
      %v1859 = vsel %vm1849, %v1826, %v1302
      %v1861 = vsel %vm1849, %v1828, %v1304
      %v1863 = vsel %vm1849, %v1830, %v1306
      %v1865 = vsel %vm1849, %v1832, %v1308
      %v1867 = vsel %vm1849, %v1834, %v1310
      %v1869 = vsel %vm1849, %v1836, %v1312
      %v1871 = vsel %vm1849, %v1838, %v1314
      %v1873 = vsel %vm1849, %v1840, %v1316
      %v1875 = vsel %vm1849, %v1842, %v1318
      %v1877 = vsel %vm1849, %v1844, %v1320
      %v1879 = vsel %vm1849, %v1846, %v1322
      %v1881 = vsel %vm1849, %v1848, %v1324
      %vm1882 = vcmask 687104
      %v1884 = vsel %vm1882, %v1851, %v1335
      %v1886 = vsel %vm1882, %v1853, %v1337
      %v1888 = vsel %vm1882, %v1855, %v1339
      %v1890 = vsel %vm1882, %v1857, %v1341
      %v1892 = vsel %vm1882, %v1859, %v1343
      %v1894 = vsel %vm1882, %v1861, %v1345
      %v1896 = vsel %vm1882, %v1863, %v1347
      %v1898 = vsel %vm1882, %v1865, %v1349
      %v1900 = vsel %vm1882, %v1867, %v1351
      %v1902 = vsel %vm1882, %v1869, %v1353
      %v1904 = vsel %vm1882, %v1871, %v1355
      %v1906 = vsel %vm1882, %v1873, %v1357
      %v1908 = vsel %vm1882, %v1875, %v1359
      %v1910 = vsel %vm1882, %v1877, %v1361
      %v1912 = vsel %vm1882, %v1879, %v1363
      %v1914 = vsel %vm1882, %v1881, %v1365
      %vm1915 = vcmask 982016
      %v1917 = vsel %vm1915, %v1884, %v1370
      %v1920 = vsel %vm1915, %v1886, %v1372
      %v1923 = vsel %vm1915, %v1888, %v1374
      %v1926 = vsel %vm1915, %v1890, %v1376
      %v1929 = vsel %vm1915, %v1892, %v1378
      %v1932 = vsel %vm1915, %v1894, %v1380
      %v1935 = vsel %vm1915, %v1896, %v1382
      %v1938 = vsel %vm1915, %v1898, %v1384
      %v1941 = vsel %vm1915, %v1900, %v1386
      %v1944 = vsel %vm1915, %v1902, %v1388
      %v1947 = vsel %vm1915, %v1904, %v1390
      %v1950 = vsel %vm1915, %v1906, %v1392
      %v1953 = vsel %vm1915, %v1908, %v1394
      %v1956 = vsel %vm1915, %v1910, %v1396
      %v1959 = vsel %vm1915, %v1912, %v1398
      %v1962 = vsel %vm1915, %v1914, %v1400
      %vm1964 = vcmask 228352
      %v1966 = vsel %vm1964, %v1370, %v1407
      %v1968 = vsel %vm1964, %v1372, %v1409
      %v1970 = vsel %vm1964, %v1374, %v1411
      %v1972 = vsel %vm1964, %v1376, %v1413
      %v1974 = vsel %vm1964, %v1378, %v1415
      %v1976 = vsel %vm1964, %v1380, %v1417
      %v1978 = vsel %vm1964, %v1382, %v1419
      %v1980 = vsel %vm1964, %v1384, %v1421
      %v1982 = vsel %vm1964, %v1386, %v1423
      %v1984 = vsel %vm1964, %v1388, %v1425
      %v1986 = vsel %vm1964, %v1390, %v1427
      %v1988 = vsel %vm1964, %v1392, %v1429
      %v1990 = vsel %vm1964, %v1394, %v1431
      %v1992 = vsel %vm1964, %v1396, %v1433
      %v1994 = vsel %vm1964, %v1398, %v1435
      %v1996 = vsel %vm1964, %v1400, %v1437
      %v1998 = vunpack.c.l.b16 %v315
      %v1999 = vpack.c.b16 %v1998, %v1998
      %v2001 = vshrl.u32 %v1405, 16
      %v2003 = vshll.u32 %v1405, 16
      %v2005 = vrot.slane %v2003, 1
      %v2006 = vor.u32 %v2001, %v2005
      %v2008 = vshll.u32 %v1999, 16
      %v2010 = vrot.slane %v2008, 1
      %v2011 = vsel %vm447, %v2006, %v2010
      %v2012 = vshrl.u32 %v1999, 16
      %2014 = vrot.lane.b32.xlu0 %v784, 36
      %v2015 = vpop.permute.xlu0 %2014
      %2016 = vrot.lane.b32.xlu0 %v793, 36
      %v2017 = vpop.permute.xlu0 %2016
      %2018 = vrot.lane.b32.xlu0 %v802, 36
      %v2019 = vpop.permute.xlu0 %2018
      %2020 = vrot.lane.b32.xlu0 %v811, 36
      %v2021 = vpop.permute.xlu0 %2020
      %2022 = vrot.lane.b32.xlu0 %v820, 36
      %v2023 = vpop.permute.xlu0 %2022
      %2024 = vrot.lane.b32.xlu0 %v829, 36
      %v2025 = vpop.permute.xlu0 %2024
      %2026 = vrot.lane.b32.xlu0 %v838, 36
      %v2027 = vpop.permute.xlu0 %2026
      %2028 = vrot.lane.b32.xlu0 %v847, 36
      %v2029 = vpop.permute.xlu0 %2028
      %2030 = vrot.lane.b32.xlu0 %v856, 36
      %v2031 = vpop.permute.xlu0 %2030
      %2032 = vrot.lane.b32.xlu0 %v865, 36
      %v2033 = vpop.permute.xlu0 %2032
      %2034 = vrot.lane.b32.xlu0 %v874, 36
      %v2035 = vpop.permute.xlu0 %2034
      %2036 = vrot.lane.b32.xlu0 %v883, 36
      %v2037 = vpop.permute.xlu0 %2036
      %2038 = vrot.lane.b32.xlu0 %v892, 36
      %v2039 = vpop.permute.xlu0 %2038
      %2040 = vrot.lane.b32.xlu0 %v1062, 36
      %v2041 = vpop.permute.xlu0 %2040
      %2042 = vrot.lane.b32.xlu0 %v1133, 36
      %v2043 = vpop.permute.xlu0 %2042
      %2044 = vrot.lane.b32.xlu0 %v1257, 36
      %v2045 = vpop.permute.xlu0 %2044
      %2046 = vrot.lane.b32.xlu0 %v1328, 36
      %v2047 = vpop.permute.xlu0 %2046
      %2048 = vrot.lane.b32.xlu0 %v2011, 36
      %v2049 = vpop.permute.xlu0 %2048
      %2050 = vrot.lane.b32.xlu0 %v2012, 36
      %v2051 = vpop.permute.xlu0 %2050
      %v2052 = vrot.slane %v1405, 1
      %v2053 = vrot.slane %v1999, 1
      %v2054 = vsel %vm672, %v2052, %v2053
      %2055 = vrot.lane.b32.xlu0 %v683, 72
      %v2056 = vpop.permute.xlu0 %2055
      %2057 = vrot.lane.b32.xlu0 %v686, 72
      %v2058 = vpop.permute.xlu0 %2057
      %2059 = vrot.lane.b32.xlu0 %v689, 72
      %v2060 = vpop.permute.xlu0 %2059
      %2061 = vrot.lane.b32.xlu0 %v692, 72
      %v2062 = vpop.permute.xlu0 %2061
      %2063 = vrot.lane.b32.xlu0 %v695, 72
      %v2064 = vpop.permute.xlu0 %2063
      %2065 = vrot.lane.b32.xlu0 %v698, 72
      %v2066 = vpop.permute.xlu0 %2065
      %2067 = vrot.lane.b32.xlu0 %v701, 72
      %v2068 = vpop.permute.xlu0 %2067
      %2069 = vrot.lane.b32.xlu0 %v704, 72
      %v2070 = vpop.permute.xlu0 %2069
      %2071 = vrot.lane.b32.xlu0 %v707, 72
      %v2072 = vpop.permute.xlu0 %2071
      %2073 = vrot.lane.b32.xlu0 %v710, 72
      %v2074 = vpop.permute.xlu0 %2073
      %2075 = vrot.lane.b32.xlu0 %v713, 72
      %v2076 = vpop.permute.xlu0 %2075
      %2077 = vrot.lane.b32.xlu0 %v716, 72
      %v2078 = vpop.permute.xlu0 %2077
      %2079 = vrot.lane.b32.xlu0 %v719, 72
      %v2080 = vpop.permute.xlu0 %2079
      %2081 = vrot.lane.b32.xlu0 %v1097, 72
      %v2082 = vpop.permute.xlu0 %2081
      %2083 = vrot.lane.b32.xlu0 %v1096, 72
      %v2084 = vpop.permute.xlu0 %2083
      %2085 = vrot.lane.b32.xlu0 %v1292, 72
      %v2086 = vpop.permute.xlu0 %2085
      %2087 = vrot.lane.b32.xlu0 %v1291, 72
      %v2088 = vpop.permute.xlu0 %2087
      %2089 = vrot.lane.b32.xlu0 %v2054, 72
      %v2090 = vpop.permute.xlu0 %2089
      %2091 = vrot.lane.b32.xlu0 %v2053, 72
      %v2092 = vpop.permute.xlu0 %2091
      %v2093 = vrot.slane %v2001, 1
      %v2094 = vrot.slane %v2003, 2
      %v2095 = vor.u32 %v2093, %v2094
      %v2096 = vrot.slane %v2012, 1
      %v2097 = vrot.slane %v2008, 2
      %v2098 = vor.u32 %v2096, %v2097
      %v2099 = vsel %vm753, %v2095, %v2098
      %2100 = vrot.lane.b32.xlu0 %v786, 108
      %v2101 = vpop.permute.xlu0 %2100
      %2102 = vrot.lane.b32.xlu0 %v795, 108
      %v2103 = vpop.permute.xlu0 %2102
      %2104 = vrot.lane.b32.xlu0 %v804, 108
      %v2105 = vpop.permute.xlu0 %2104
      %2106 = vrot.lane.b32.xlu0 %v813, 108
      %v2107 = vpop.permute.xlu0 %2106
      %2108 = vrot.lane.b32.xlu0 %v822, 108
      %v2109 = vpop.permute.xlu0 %2108
      %2110 = vrot.lane.b32.xlu0 %v831, 108
      %v2111 = vpop.permute.xlu0 %2110
      %2112 = vrot.lane.b32.xlu0 %v840, 108
      %v2113 = vpop.permute.xlu0 %2112
      %2114 = vrot.lane.b32.xlu0 %v849, 108
      %v2115 = vpop.permute.xlu0 %2114
      %2116 = vrot.lane.b32.xlu0 %v858, 108
      %v2117 = vpop.permute.xlu0 %2116
      %2118 = vrot.lane.b32.xlu0 %v867, 108
      %v2119 = vpop.permute.xlu0 %2118
      %2120 = vrot.lane.b32.xlu0 %v876, 108
      %v2121 = vpop.permute.xlu0 %2120
      %2122 = vrot.lane.b32.xlu0 %v885, 108
      %v2123 = vpop.permute.xlu0 %2122
      %2124 = vrot.lane.b32.xlu0 %v894, 108
      %v2125 = vpop.permute.xlu0 %2124
      %2126 = vrot.lane.b32.xlu0 %v1138, 108
      %v2127 = vpop.permute.xlu0 %2126
      %2128 = vrot.lane.b32.xlu0 %v1135, 108
      %v2129 = vpop.permute.xlu0 %2128
      %2130 = vrot.lane.b32.xlu0 %v1333, 108
      %v2131 = vpop.permute.xlu0 %2130
      %2132 = vrot.lane.b32.xlu0 %v1330, 108
      %v2133 = vpop.permute.xlu0 %2132
      %2134 = vrot.lane.b32.xlu0 %v2099, 108
      %v2135 = vpop.permute.xlu0 %2134
      %2136 = vrot.lane.b32.xlu0 %v2096, 108
      %v2137 = vpop.permute.xlu0 %2136
      %v2140 = vunpack.c.l.b16 %v316
      %v2141 = vunpack.c.l.b16 %v317
      %v2142 = vpack.c.b16 %v2141, %v2140
      %v2143 = vrot.slane %v497, 7
      %v2144 = vor.u32 %v2143, %v499
      %v2145 = vrot.slane %v509, 7
      %v2146 = vor.u32 %v2145, %v511
      %v2147 = vrot.slane %v521, 7
      %v2148 = vor.u32 %v2147, %v523
      %v2149 = vrot.slane %v533, 7
      %v2150 = vor.u32 %v2149, %v535
      %v2151 = vrot.slane %v545, 7
      %v2152 = vor.u32 %v2151, %v547
      %v2153 = vrot.slane %v557, 7
      %v2154 = vor.u32 %v2153, %v559
      %v2155 = vrot.slane %v569, 7
      %v2156 = vor.u32 %v2155, %v571
      %v2157 = vrot.slane %v581, 7
      %v2158 = vor.u32 %v2157, %v583
      %v2159 = vrot.slane %v593, 7
      %v2160 = vor.u32 %v2159, %v595
      %v2161 = vrot.slane %v605, 7
      %v2162 = vor.u32 %v2161, %v607
      %v2163 = vrot.slane %v617, 7
      %v2164 = vor.u32 %v2163, %v619
      %v2165 = vrot.slane %v629, 7
      %v2166 = vor.u32 %v2165, %v631
      %v2167 = vrot.slane %v1052, 7
      %v2168 = vor.u32 %v2167, %v1054
      %v2169 = vrot.slane %v1247, 7
      %v2170 = vor.u32 %v2169, %v1249
      %v2171 = vrot.slane %v2001, 7
      %v2172 = vor.u32 %v2171, %v2003
      %v2174 = vshrl.u32 %v2142, 16
      %v2176 = vrot.slane %v2174, 7
      %v2177 = vshll.u32 %v2142, 16
      %v2179 = vor.u32 %v2176, %v2177
      %2180 = vrot.lane.b32.xlu0 %v2144, 16
      %v2181 = vpop.permute.xlu0 %2180
      %2182 = vrot.lane.b32.xlu0 %v2143, 16
      %v2183 = vpop.permute.xlu0 %2182
      %2184 = vrot.lane.b32.xlu0 %v2146, 16
      %v2185 = vpop.permute.xlu0 %2184
      %2186 = vrot.lane.b32.xlu0 %v2145, 16
      %v2187 = vpop.permute.xlu0 %2186
      %2188 = vrot.lane.b32.xlu0 %v2148, 16
      %v2189 = vpop.permute.xlu0 %2188
      %2190 = vrot.lane.b32.xlu0 %v2147, 16
      %v2191 = vpop.permute.xlu0 %2190
      %2192 = vrot.lane.b32.xlu0 %v2150, 16
      %v2193 = vpop.permute.xlu0 %2192
      %2194 = vrot.lane.b32.xlu0 %v2149, 16
      %v2195 = vpop.permute.xlu0 %2194
      %2196 = vrot.lane.b32.xlu0 %v2152, 16
      %v2197 = vpop.permute.xlu0 %2196
      %2198 = vrot.lane.b32.xlu0 %v2151, 16
      %v2199 = vpop.permute.xlu0 %2198
      %2200 = vrot.lane.b32.xlu0 %v2154, 16
      %v2201 = vpop.permute.xlu0 %2200
      %2202 = vrot.lane.b32.xlu0 %v2153, 16
      %v2203 = vpop.permute.xlu0 %2202
      %2204 = vrot.lane.b32.xlu0 %v2156, 16
      %v2205 = vpop.permute.xlu0 %2204
      %2206 = vrot.lane.b32.xlu0 %v2155, 16
      %v2207 = vpop.permute.xlu0 %2206
      %2208 = vrot.lane.b32.xlu0 %v2158, 16
      %v2209 = vpop.permute.xlu0 %2208
      %2210 = vrot.lane.b32.xlu0 %v2157, 16
      %v2211 = vpop.permute.xlu0 %2210
      %2212 = vrot.lane.b32.xlu0 %v2160, 16
      %v2213 = vpop.permute.xlu0 %2212
      %2214 = vrot.lane.b32.xlu0 %v2159, 16
      %v2215 = vpop.permute.xlu0 %2214
      %2216 = vrot.lane.b32.xlu0 %v2162, 16
      %v2217 = vpop.permute.xlu0 %2216
      %2218 = vrot.lane.b32.xlu0 %v2161, 16
      %v2219 = vpop.permute.xlu0 %2218
      %2220 = vrot.lane.b32.xlu0 %v2164, 16
      %v2221 = vpop.permute.xlu0 %2220
      %2222 = vrot.lane.b32.xlu0 %v2163, 16
      %v2223 = vpop.permute.xlu0 %2222
      %2224 = vrot.lane.b32.xlu0 %v2166, 16
      %v2225 = vpop.permute.xlu0 %2224
      %2226 = vrot.lane.b32.xlu0 %v2165, 16
      %v2227 = vpop.permute.xlu0 %2226
      %2228 = vrot.lane.b32.xlu0 %v2168, 16
      %v2229 = vpop.permute.xlu0 %2228
      %2230 = vrot.lane.b32.xlu0 %v2167, 16
      %v2231 = vpop.permute.xlu0 %2230
      %2232 = vrot.lane.b32.xlu0 %v2170, 16
      %v2233 = vpop.permute.xlu0 %2232
      %2234 = vrot.lane.b32.xlu0 %v2169, 16
      %v2235 = vpop.permute.xlu0 %2234
      %2236 = vrot.lane.b32.xlu0 %v2172, 16
      %v2237 = vpop.permute.xlu0 %2236
      %2238 = vrot.lane.b32.xlu0 %v2171, 16
      %v2239 = vpop.permute.xlu0 %2238
      %2240 = vrot.lane.b32.xlu0 %v2179, 16
      %v2241 = vpop.permute.xlu0 %2240
      %2242 = vrot.lane.b32.xlu0 %v2176, 16
      %v2243 = vpop.permute.xlu0 %2242
      %v2245 = vunpack.c.l.b16 %v318
      %v2246 = vpack.c.b16 %v2245, %v2245
      %2247 = vrot.lane.b32.xlu0 %v435, 52
      %v2248 = vpop.permute.xlu0 %2247
      %2249 = vrot.lane.b32.xlu0 %v436, 52
      %v2250 = vpop.permute.xlu0 %2249
      %2251 = vrot.lane.b32.xlu0 %v437, 52
      %v2252 = vpop.permute.xlu0 %2251
      %2253 = vrot.lane.b32.xlu0 %v438, 52
      %v2254 = vpop.permute.xlu0 %2253
      %2255 = vrot.lane.b32.xlu0 %v439, 52
      %v2256 = vpop.permute.xlu0 %2255
      %2257 = vrot.lane.b32.xlu0 %v440, 52
      %v2258 = vpop.permute.xlu0 %2257
      %2259 = vrot.lane.b32.xlu0 %v441, 52
      %v2260 = vpop.permute.xlu0 %2259
      %2261 = vrot.lane.b32.xlu0 %v442, 52
      %v2262 = vpop.permute.xlu0 %2261
      %2263 = vrot.lane.b32.xlu0 %v443, 52
      %v2264 = vpop.permute.xlu0 %2263
      %2265 = vrot.lane.b32.xlu0 %v444, 52
      %v2266 = vpop.permute.xlu0 %2265
      %2267 = vrot.lane.b32.xlu0 %v445, 52
      %v2268 = vpop.permute.xlu0 %2267
      %2269 = vrot.lane.b32.xlu0 %v446, 52
      %v2270 = vpop.permute.xlu0 %2269
      %2271 = vrot.lane.b32.xlu0 %v1050, 52
      %v2272 = vpop.permute.xlu0 %2271
      %2273 = vrot.lane.b32.xlu0 %v1210, 52
      %v2274 = vpop.permute.xlu0 %2273
      %2275 = vrot.lane.b32.xlu0 %v1245, 52
      %v2276 = vpop.permute.xlu0 %2275
      %2277 = vrot.lane.b32.xlu0 %v1405, 52
      %v2278 = vpop.permute.xlu0 %2277
      %2279 = vrot.lane.b32.xlu0 %v1999, 52
      %v2280 = vpop.permute.xlu0 %2279
      %2281 = vrot.lane.b32.xlu0 %v2142, 52
      %v2282 = vpop.permute.xlu0 %2281
      %2283 = vrot.lane.b32.xlu0 %v2246, 52
      %v2284 = vpop.permute.xlu0 %2283
      %v2285 = vrot.slane %v2177, 1
      %v2286 = vor.u32 %v2174, %v2285
      %v2288 = vshll.u32 %v2246, 16
      %v2290 = vrot.slane %v2288, 1
      %v2291 = vsel %vm447, %v2286, %v2290
      %v2292 = vshrl.u32 %v2246, 16
      %2294 = vrot.lane.b32.xlu0 %v793, 88
      %v2295 = vpop.permute.xlu0 %2294
      %2296 = vrot.lane.b32.xlu0 %v802, 88
      %v2297 = vpop.permute.xlu0 %2296
      %2298 = vrot.lane.b32.xlu0 %v811, 88
      %v2299 = vpop.permute.xlu0 %2298
      %2300 = vrot.lane.b32.xlu0 %v820, 88
      %v2301 = vpop.permute.xlu0 %2300
      %2302 = vrot.lane.b32.xlu0 %v829, 88
      %v2303 = vpop.permute.xlu0 %2302
      %2304 = vrot.lane.b32.xlu0 %v838, 88
      %v2305 = vpop.permute.xlu0 %2304
      %2306 = vrot.lane.b32.xlu0 %v847, 88
      %v2307 = vpop.permute.xlu0 %2306
      %2308 = vrot.lane.b32.xlu0 %v856, 88
      %v2309 = vpop.permute.xlu0 %2308
      %2310 = vrot.lane.b32.xlu0 %v865, 88
      %v2311 = vpop.permute.xlu0 %2310
      %2312 = vrot.lane.b32.xlu0 %v874, 88
      %v2313 = vpop.permute.xlu0 %2312
      %2314 = vrot.lane.b32.xlu0 %v883, 88
      %v2315 = vpop.permute.xlu0 %2314
      %2316 = vrot.lane.b32.xlu0 %v892, 88
      %v2317 = vpop.permute.xlu0 %2316
      %2318 = vrot.lane.b32.xlu0 %v1133, 88
      %v2319 = vpop.permute.xlu0 %2318
      %2320 = vrot.lane.b32.xlu0 %v1257, 88
      %v2321 = vpop.permute.xlu0 %2320
      %2322 = vrot.lane.b32.xlu0 %v1328, 88
      %v2323 = vpop.permute.xlu0 %2322
      %2324 = vrot.lane.b32.xlu0 %v2011, 88
      %v2325 = vpop.permute.xlu0 %2324
      %2326 = vrot.lane.b32.xlu0 %v2012, 88
      %v2327 = vpop.permute.xlu0 %2326
      %2328 = vrot.lane.b32.xlu0 %v2291, 88
      %v2329 = vpop.permute.xlu0 %2328
      %2330 = vrot.lane.b32.xlu0 %v2292, 88
      %v2331 = vpop.permute.xlu0 %2330
      %v2332 = vrot.slane %v2142, 1
      %v2333 = vrot.slane %v2246, 1
      %v2334 = vsel %vm672, %v2332, %v2333
      %2335 = vrot.lane.b32.xlu0 %v686, 124
      %v2336 = vpop.permute.xlu0 %2335
      %2337 = vrot.lane.b32.xlu0 %v689, 124
      %v2338 = vpop.permute.xlu0 %2337
      %2339 = vrot.lane.b32.xlu0 %v692, 124
      %v2340 = vpop.permute.xlu0 %2339
      %2341 = vrot.lane.b32.xlu0 %v695, 124
      %v2342 = vpop.permute.xlu0 %2341
      %2343 = vrot.lane.b32.xlu0 %v698, 124
      %v2344 = vpop.permute.xlu0 %2343
      %2345 = vrot.lane.b32.xlu0 %v701, 124
      %v2346 = vpop.permute.xlu0 %2345
      %2347 = vrot.lane.b32.xlu0 %v704, 124
      %v2348 = vpop.permute.xlu0 %2347
      %2349 = vrot.lane.b32.xlu0 %v707, 124
      %v2350 = vpop.permute.xlu0 %2349
      %2351 = vrot.lane.b32.xlu0 %v710, 124
      %v2352 = vpop.permute.xlu0 %2351
      %2353 = vrot.lane.b32.xlu0 %v713, 124
      %v2354 = vpop.permute.xlu0 %2353
      %2355 = vrot.lane.b32.xlu0 %v716, 124
      %v2356 = vpop.permute.xlu0 %2355
      %2357 = vrot.lane.b32.xlu0 %v719, 124
      %v2358 = vpop.permute.xlu0 %2357
      %2359 = vrot.lane.b32.xlu0 %v1096, 124
      %v2360 = vpop.permute.xlu0 %2359
      %2361 = vrot.lane.b32.xlu0 %v1292, 124
      %v2362 = vpop.permute.xlu0 %2361
      %2363 = vrot.lane.b32.xlu0 %v1291, 124
      %v2364 = vpop.permute.xlu0 %2363
      %2365 = vrot.lane.b32.xlu0 %v2054, 124
      %v2366 = vpop.permute.xlu0 %2365
      %2367 = vrot.lane.b32.xlu0 %v2053, 124
      %v2368 = vpop.permute.xlu0 %2367
      %2369 = vrot.lane.b32.xlu0 %v2334, 124
      %v2370 = vpop.permute.xlu0 %2369
      %2371 = vrot.lane.b32.xlu0 %v2333, 124
      %v2372 = vpop.permute.xlu0 %2371
      %v2373 = vrot.slane %v2174, 1
      %v2374 = vrot.slane %v2177, 2
      %v2375 = vor.u32 %v2373, %v2374
      %v2376 = vrot.slane %v2292, 1
      %v2377 = vrot.slane %v2288, 2
      %v2378 = vor.u32 %v2376, %v2377
      %v2379 = vsel %vm753, %v2375, %v2378
      %2380 = vrot.lane.b32.xlu0 %v795, 32
      %v2381 = vpop.permute.xlu0 %2380
      %2382 = vrot.lane.b32.xlu0 %v804, 32
      %v2383 = vpop.permute.xlu0 %2382
      %2384 = vrot.lane.b32.xlu0 %v813, 32
      %v2385 = vpop.permute.xlu0 %2384
      %2386 = vrot.lane.b32.xlu0 %v822, 32
      %v2387 = vpop.permute.xlu0 %2386
      %2388 = vrot.lane.b32.xlu0 %v831, 32
      %v2389 = vpop.permute.xlu0 %2388
      %2390 = vrot.lane.b32.xlu0 %v840, 32
      %v2391 = vpop.permute.xlu0 %2390
      %2392 = vrot.lane.b32.xlu0 %v849, 32
      %v2393 = vpop.permute.xlu0 %2392
      %2394 = vrot.lane.b32.xlu0 %v858, 32
      %v2395 = vpop.permute.xlu0 %2394
      %2396 = vrot.lane.b32.xlu0 %v867, 32
      %v2397 = vpop.permute.xlu0 %2396
      %2398 = vrot.lane.b32.xlu0 %v876, 32
      %v2399 = vpop.permute.xlu0 %2398
      %2400 = vrot.lane.b32.xlu0 %v885, 32
      %v2401 = vpop.permute.xlu0 %2400
      %2402 = vrot.lane.b32.xlu0 %v894, 32
      %v2403 = vpop.permute.xlu0 %2402
      %2404 = vrot.lane.b32.xlu0 %v1135, 32
      %v2405 = vpop.permute.xlu0 %2404
      %2406 = vrot.lane.b32.xlu0 %v1333, 32
      %v2407 = vpop.permute.xlu0 %2406
      %2408 = vrot.lane.b32.xlu0 %v1330, 32
      %v2409 = vpop.permute.xlu0 %2408
      %2410 = vrot.lane.b32.xlu0 %v2099, 32
      %v2411 = vpop.permute.xlu0 %2410
      %2412 = vrot.lane.b32.xlu0 %v2096, 32
      %v2413 = vpop.permute.xlu0 %2412
      %2414 = vrot.lane.b32.xlu0 %v2379, 32
      %v2415 = vpop.permute.xlu0 %2414
      %2416 = vrot.lane.b32.xlu0 %v2376, 32
      %v2417 = vpop.permute.xlu0 %2416
      %v2419 = vsel %vm1438, %v434, %v2015
      %v2421 = vsel %vm1438, %v435, %v2017
      %v2423 = vsel %vm1438, %v436, %v2019
      %v2425 = vsel %vm1438, %v437, %v2021
      %v2427 = vsel %vm1438, %v438, %v2023
      %v2429 = vsel %vm1438, %v439, %v2025
      %v2431 = vsel %vm1438, %v440, %v2027
      %v2433 = vsel %vm1438, %v441, %v2029
      %v2435 = vsel %vm1438, %v442, %v2031
      %v2437 = vsel %vm1438, %v443, %v2033
      %v2439 = vsel %vm1438, %v444, %v2035
      %v2441 = vsel %vm1438, %v445, %v2037
      %v2443 = vsel %vm1438, %v446, %v2039
      %v2445 = vsel %vm1438, %v1015, %v2041
      %v2447 = vsel %vm1438, %v1050, %v2043
      %v2449 = vsel %vm1438, %v1210, %v2045
      %v2451 = vsel %vm1438, %v1245, %v2047
      %v2453 = vsel %vm1438, %v1405, %v2049
      %v2455 = vsel %vm1438, %v1999, %v2051
      %v2457 = vsel %vm1471, %v2419, %v2056
      %v2459 = vsel %vm1471, %v2421, %v2058
      %v2461 = vsel %vm1471, %v2423, %v2060
      %v2463 = vsel %vm1471, %v2425, %v2062
      %v2465 = vsel %vm1471, %v2427, %v2064
      %v2467 = vsel %vm1471, %v2429, %v2066
      %v2469 = vsel %vm1471, %v2431, %v2068
      %v2471 = vsel %vm1471, %v2433, %v2070
      %v2473 = vsel %vm1471, %v2435, %v2072
      %v2475 = vsel %vm1471, %v2437, %v2074
      %v2477 = vsel %vm1471, %v2439, %v2076
      %v2479 = vsel %vm1471, %v2441, %v2078
      %v2481 = vsel %vm1471, %v2443, %v2080
      %v2483 = vsel %vm1471, %v2445, %v2082
      %v2485 = vsel %vm1471, %v2447, %v2084
      %v2487 = vsel %vm1471, %v2449, %v2086
      %v2489 = vsel %vm1471, %v2451, %v2088
      %v2491 = vsel %vm1471, %v2453, %v2090
      %v2493 = vsel %vm1471, %v2455, %v2092
      %v2495 = vsel %vm1504, %v2457, %v2101
      %v2497 = vsel %vm1504, %v2459, %v2103
      %v2499 = vsel %vm1504, %v2461, %v2105
      %v2501 = vsel %vm1504, %v2463, %v2107
      %v2503 = vsel %vm1504, %v2465, %v2109
      %v2505 = vsel %vm1504, %v2467, %v2111
      %v2507 = vsel %vm1504, %v2469, %v2113
      %v2509 = vsel %vm1504, %v2471, %v2115
      %v2511 = vsel %vm1504, %v2473, %v2117
      %v2513 = vsel %vm1504, %v2475, %v2119
      %v2515 = vsel %vm1504, %v2477, %v2121
      %v2517 = vsel %vm1504, %v2479, %v2123
      %v2519 = vsel %vm1504, %v2481, %v2125
      %v2521 = vsel %vm1504, %v2483, %v2127
      %v2523 = vsel %vm1504, %v2485, %v2129
      %v2525 = vsel %vm1504, %v2487, %v2131
      %v2527 = vsel %vm1504, %v2489, %v2133
      %v2529 = vsel %vm1504, %v2491, %v2135
      %v2531 = vsel %vm1504, %v2493, %v2137
      %v2533 = vsel %vm1553, %v905, %v2181
      %v2535 = vsel %vm1553, %v2101, %v2183
      %v2537 = vsel %vm1553, %v907, %v2185
      %v2539 = vsel %vm1553, %v2103, %v2187
      %v2541 = vsel %vm1553, %v909, %v2189
      %v2543 = vsel %vm1553, %v2105, %v2191
      %v2545 = vsel %vm1553, %v911, %v2193
      %v2547 = vsel %vm1553, %v2107, %v2195
      %v2549 = vsel %vm1553, %v913, %v2197
      %v2551 = vsel %vm1553, %v2109, %v2199
      %v2553 = vsel %vm1553, %v915, %v2201
      %v2555 = vsel %vm1553, %v2111, %v2203
      %v2557 = vsel %vm1553, %v917, %v2205
      %v2559 = vsel %vm1553, %v2113, %v2207
      %v2561 = vsel %vm1553, %v919, %v2209
      %v2563 = vsel %vm1553, %v2115, %v2211
      %v2565 = vsel %vm1553, %v921, %v2213
      %v2567 = vsel %vm1553, %v2117, %v2215
      %v2569 = vsel %vm1553, %v923, %v2217
      %v2571 = vsel %vm1553, %v2119, %v2219
      %v2573 = vsel %vm1553, %v925, %v2221
      %v2575 = vsel %vm1553, %v2121, %v2223
      %v2577 = vsel %vm1553, %v927, %v2225
      %v2579 = vsel %vm1553, %v2123, %v2227
      %v2581 = vsel %vm1553, %v929, %v2229
      %v2583 = vsel %vm1553, %v2125, %v2231
      %v2585 = vsel %vm1553, %v2127, %v2233
      %v2587 = vsel %vm1553, %v2129, %v2235
      %v2589 = vsel %vm1553, %v2131, %v2237
      %v2591 = vsel %vm1553, %v2133, %v2239
      %v2593 = vsel %vm1553, %v2135, %v2241
      %v2595 = vsel %vm1553, %v2137, %v2243
      %v2596 = vsel %vm1586, %v2533, %v1023
      %v2598 = vsel %vm1586, %v2535, %v2248
      %v2599 = vsel %vm1586, %v2537, %v1025
      %v2601 = vsel %vm1586, %v2539, %v2250
      %v2602 = vsel %vm1586, %v2541, %v1027
      %v2604 = vsel %vm1586, %v2543, %v2252
      %v2605 = vsel %vm1586, %v2545, %v1029
      %v2607 = vsel %vm1586, %v2547, %v2254
      %v2608 = vsel %vm1586, %v2549, %v1031
      %v2610 = vsel %vm1586, %v2551, %v2256
      %v2611 = vsel %vm1586, %v2553, %v1033
      %v2613 = vsel %vm1586, %v2555, %v2258
      %v2614 = vsel %vm1586, %v2557, %v1035
      %v2616 = vsel %vm1586, %v2559, %v2260
      %v2617 = vsel %vm1586, %v2561, %v1037
      %v2619 = vsel %vm1586, %v2563, %v2262
      %v2620 = vsel %vm1586, %v2565, %v1039
      %v2622 = vsel %vm1586, %v2567, %v2264
      %v2623 = vsel %vm1586, %v2569, %v1041
      %v2625 = vsel %vm1586, %v2571, %v2266
      %v2626 = vsel %vm1586, %v2573, %v1043
      %v2628 = vsel %vm1586, %v2575, %v2268
      %v2629 = vsel %vm1586, %v2577, %v1045
      %v2631 = vsel %vm1586, %v2579, %v2270
      %v2632 = vsel %vm1586, %v2581, %v1047
      %v2634 = vsel %vm1586, %v2583, %v2272
      %v2636 = vsel %vm1586, %v2585, %v2274
      %v2638 = vsel %vm1586, %v2587, %v2276
      %v2640 = vsel %vm1586, %v2589, %v2278
      %v2642 = vsel %vm1586, %v2591, %v2280
      %v2644 = vsel %vm1586, %v2593, %v2282
      %v2646 = vsel %vm1586, %v2595, %v2284
      %v2647 = vsel %vm1619, %v2596, %v1070
      %v2649 = vsel %vm1619, %v2598, %v2295
      %v2650 = vsel %vm1619, %v2599, %v1072
      %v2652 = vsel %vm1619, %v2601, %v2297
      %v2653 = vsel %vm1619, %v2602, %v1074
      %v2655 = vsel %vm1619, %v2604, %v2299
      %v2656 = vsel %vm1619, %v2605, %v1076
      %v2658 = vsel %vm1619, %v2607, %v2301
      %v2659 = vsel %vm1619, %v2608, %v1078
      %v2661 = vsel %vm1619, %v2610, %v2303
      %v2662 = vsel %vm1619, %v2611, %v1080
      %v2664 = vsel %vm1619, %v2613, %v2305
      %v2665 = vsel %vm1619, %v2614, %v1082
      %v2667 = vsel %vm1619, %v2616, %v2307
      %v2668 = vsel %vm1619, %v2617, %v1084
      %v2670 = vsel %vm1619, %v2619, %v2309
      %v2671 = vsel %vm1619, %v2620, %v1086
      %v2673 = vsel %vm1619, %v2622, %v2311
      %v2674 = vsel %vm1619, %v2623, %v1088
      %v2676 = vsel %vm1619, %v2625, %v2313
      %v2677 = vsel %vm1619, %v2626, %v1090
      %v2679 = vsel %vm1619, %v2628, %v2315
      %v2680 = vsel %vm1619, %v2629, %v1092
      %v2682 = vsel %vm1619, %v2631, %v2317
      %v2683 = vsel %vm1619, %v2632, %v1094
      %v2685 = vsel %vm1619, %v2634, %v2319
      %v2687 = vsel %vm1619, %v2636, %v2321
      %v2689 = vsel %vm1619, %v2638, %v2323
      %v2691 = vsel %vm1619, %v2640, %v2325
      %v2693 = vsel %vm1619, %v2642, %v2327
      %v2695 = vsel %vm1619, %v2644, %v2329
      %v2697 = vsel %vm1619, %v2646, %v2331
      %v2698 = vsel %vm1652, %v2647, %v1105
      %v2700 = vsel %vm1652, %v2649, %v2336
      %v2701 = vsel %vm1652, %v2650, %v1107
      %v2703 = vsel %vm1652, %v2652, %v2338
      %v2704 = vsel %vm1652, %v2653, %v1109
      %v2706 = vsel %vm1652, %v2655, %v2340
      %v2707 = vsel %vm1652, %v2656, %v1111
      %v2709 = vsel %vm1652, %v2658, %v2342
      %v2710 = vsel %vm1652, %v2659, %v1113
      %v2712 = vsel %vm1652, %v2661, %v2344
      %v2713 = vsel %vm1652, %v2662, %v1115
      %v2715 = vsel %vm1652, %v2664, %v2346
      %v2716 = vsel %vm1652, %v2665, %v1117
      %v2718 = vsel %vm1652, %v2667, %v2348
      %v2719 = vsel %vm1652, %v2668, %v1119
      %v2721 = vsel %vm1652, %v2670, %v2350
      %v2722 = vsel %vm1652, %v2671, %v1121
      %v2724 = vsel %vm1652, %v2673, %v2352
      %v2725 = vsel %vm1652, %v2674, %v1123
      %v2727 = vsel %vm1652, %v2676, %v2354
      %v2728 = vsel %vm1652, %v2677, %v1125
      %v2730 = vsel %vm1652, %v2679, %v2356
      %v2731 = vsel %vm1652, %v2680, %v1127
      %v2733 = vsel %vm1652, %v2682, %v2358
      %v2734 = vsel %vm1652, %v2683, %v1129
      %v2736 = vsel %vm1652, %v2685, %v2360
      %v2738 = vsel %vm1652, %v2687, %v2362
      %v2740 = vsel %vm1652, %v2689, %v2364
      %v2742 = vsel %vm1652, %v2691, %v2366
      %v2744 = vsel %vm1652, %v2693, %v2368
      %v2746 = vsel %vm1652, %v2695, %v2370
      %v2748 = vsel %vm1652, %v2697, %v2372
      %v2750 = vsel %vm1701, %v2336, %v2381
      %v2752 = vsel %vm1701, %v2338, %v2383
      %v2754 = vsel %vm1701, %v2340, %v2385
      %v2756 = vsel %vm1701, %v2342, %v2387
      %v2758 = vsel %vm1701, %v2344, %v2389
      %v2760 = vsel %vm1701, %v2346, %v2391
      %v2762 = vsel %vm1701, %v2348, %v2393
      %v2764 = vsel %vm1701, %v2350, %v2395
      %v2766 = vsel %vm1701, %v2352, %v2397
      %v2768 = vsel %vm1701, %v2354, %v2399
      %v2770 = vsel %vm1701, %v2356, %v2401
      %v2772 = vsel %vm1701, %v2358, %v2403
      %v2774 = vsel %vm1701, %v2360, %v2405
      %v2776 = vsel %vm1701, %v2362, %v2407
      %v2778 = vsel %vm1701, %v2364, %v2409
      %v2780 = vsel %vm1701, %v2366, %v2411
      %v2782 = vsel %vm1701, %v2368, %v2413
      %v2784 = vsel %vm1701, %v2370, %v2415
      %v2786 = vsel %vm1701, %v2372, %v2417
      %v2787 = vshrl.u32 %v1515, 16
      %v2789 = vshll.u32 %v1515, 16
      %v2791 = vrot.slane %v2789, 1
      %v2792 = vor.u32 %v2787, %v2791
      %v2793 = vshll.u32 %v2495, 16
      %v2795 = vrot.slane %v2793, 1
      %v2796 = vsel %vm447, %v2792, %v2795
      %v2797 = vshrl.u32 %v2698, 16
      %v2799 = vshll.u32 %v2698, 16
      %v2801 = vrot.slane %v2799, 1
      %v2802 = vor.u32 %v2797, %v2801
      %v2803 = vshll.u32 %v2700, 16
      %v2805 = vrot.slane %v2803, 1
      %v2806 = vsel %vm447, %v2802, %v2805
      %v2807 = vshrl.u32 %v1709, 16
      %v2809 = vshll.u32 %v1709, 16
      %v2811 = vrot.slane %v2809, 1
      %v2812 = vor.u32 %v2807, %v2811
      %v2813 = vshll.u32 %v2750, 16
      %v2815 = vrot.slane %v2813, 1
      %v2816 = vsel %vm447, %v2812, %v2815
      %v2817 = vshrl.u32 %v1518, 16
      %v2819 = vshll.u32 %v1518, 16
      %v2821 = vrot.slane %v2819, 1
      %v2822 = vor.u32 %v2817, %v2821
      %v2823 = vshll.u32 %v2497, 16
      %v2825 = vrot.slane %v2823, 1
      %v2826 = vsel %vm447, %v2822, %v2825
      %v2827 = vshrl.u32 %v2701, 16
      %v2829 = vshll.u32 %v2701, 16
      %v2831 = vrot.slane %v2829, 1
      %v2832 = vor.u32 %v2827, %v2831
      %v2833 = vshll.u32 %v2703, 16
      %v2835 = vrot.slane %v2833, 1
      %v2836 = vsel %vm447, %v2832, %v2835
      %v2837 = vshrl.u32 %v1711, 16
      %v2839 = vshll.u32 %v1711, 16
      %v2841 = vrot.slane %v2839, 1
      %v2842 = vor.u32 %v2837, %v2841
      %v2843 = vshll.u32 %v2752, 16
      %v2845 = vrot.slane %v2843, 1
      %v2846 = vsel %vm447, %v2842, %v2845
      %v2847 = vshrl.u32 %v1521, 16
      %v2849 = vshll.u32 %v1521, 16
      %v2851 = vrot.slane %v2849, 1
      %v2852 = vor.u32 %v2847, %v2851
      %v2853 = vshll.u32 %v2499, 16
      %v2855 = vrot.slane %v2853, 1
      %v2856 = vsel %vm447, %v2852, %v2855
      %v2857 = vshrl.u32 %v2704, 16
      %v2859 = vshll.u32 %v2704, 16
      %v2861 = vrot.slane %v2859, 1
      %v2862 = vor.u32 %v2857, %v2861
      %v2863 = vshll.u32 %v2706, 16
      %v2865 = vrot.slane %v2863, 1
      %v2866 = vsel %vm447, %v2862, %v2865
      %v2867 = vshrl.u32 %v1713, 16
      %v2869 = vshll.u32 %v1713, 16
      %v2871 = vrot.slane %v2869, 1
      %v2872 = vor.u32 %v2867, %v2871
      %v2873 = vshll.u32 %v2754, 16
      %v2875 = vrot.slane %v2873, 1
      %v2876 = vsel %vm447, %v2872, %v2875
      %v2877 = vshrl.u32 %v1524, 16
      %v2879 = vshll.u32 %v1524, 16
      %v2881 = vrot.slane %v2879, 1
      %v2882 = vor.u32 %v2877, %v2881
      %v2883 = vshll.u32 %v2501, 16
      %v2885 = vrot.slane %v2883, 1
      %v2886 = vsel %vm447, %v2882, %v2885
      %v2887 = vshrl.u32 %v2707, 16
      %v2889 = vshll.u32 %v2707, 16
      %v2891 = vrot.slane %v2889, 1
      %v2892 = vor.u32 %v2887, %v2891
      %v2893 = vshll.u32 %v2709, 16
      %v2895 = vrot.slane %v2893, 1
      %v2896 = vsel %vm447, %v2892, %v2895
      %v2897 = vshrl.u32 %v1715, 16
      %v2899 = vshll.u32 %v1715, 16
      %v2901 = vrot.slane %v2899, 1
      %v2902 = vor.u32 %v2897, %v2901
      %v2903 = vshll.u32 %v2756, 16
      %v2905 = vrot.slane %v2903, 1
      %v2906 = vsel %vm447, %v2902, %v2905
      %v2907 = vshrl.u32 %v1527, 16
      %v2909 = vshll.u32 %v1527, 16
      %v2911 = vrot.slane %v2909, 1
      %v2912 = vor.u32 %v2907, %v2911
      %v2913 = vshll.u32 %v2503, 16
      %v2915 = vrot.slane %v2913, 1
      %v2916 = vsel %vm447, %v2912, %v2915
      %v2917 = vshrl.u32 %v2710, 16
      %v2919 = vshll.u32 %v2710, 16
      %v2921 = vrot.slane %v2919, 1
      %v2922 = vor.u32 %v2917, %v2921
      %v2923 = vshll.u32 %v2712, 16
      %v2925 = vrot.slane %v2923, 1
      %v2926 = vsel %vm447, %v2922, %v2925
      %v2927 = vshrl.u32 %v1717, 16
      %v2929 = vshll.u32 %v1717, 16
      %v2931 = vrot.slane %v2929, 1
      %v2932 = vor.u32 %v2927, %v2931
      %v2933 = vshll.u32 %v2758, 16
      %v2935 = vrot.slane %v2933, 1
      %v2936 = vsel %vm447, %v2932, %v2935
      %v2937 = vshrl.u32 %v1530, 16
      %v2939 = vshll.u32 %v1530, 16
      %v2941 = vrot.slane %v2939, 1
      %v2942 = vor.u32 %v2937, %v2941
      %v2943 = vshll.u32 %v2505, 16
      %v2945 = vrot.slane %v2943, 1
      %v2946 = vsel %vm447, %v2942, %v2945
      %v2947 = vshrl.u32 %v2713, 16
      %v2949 = vshll.u32 %v2713, 16
      %v2951 = vrot.slane %v2949, 1
      %v2952 = vor.u32 %v2947, %v2951
      %v2953 = vshll.u32 %v2715, 16
      %v2955 = vrot.slane %v2953, 1
      %v2956 = vsel %vm447, %v2952, %v2955
      %v2957 = vshrl.u32 %v1719, 16
      %v2959 = vshll.u32 %v1719, 16
      %v2961 = vrot.slane %v2959, 1
      %v2962 = vor.u32 %v2957, %v2961
      %v2963 = vshll.u32 %v2760, 16
      %v2965 = vrot.slane %v2963, 1
      %v2966 = vsel %vm447, %v2962, %v2965
      %v2967 = vshrl.u32 %v1533, 16
      %v2969 = vshll.u32 %v1533, 16
      %v2971 = vrot.slane %v2969, 1
      %v2972 = vor.u32 %v2967, %v2971
      %v2973 = vshll.u32 %v2507, 16
      %v2975 = vrot.slane %v2973, 1
      %v2976 = vsel %vm447, %v2972, %v2975
      %v2977 = vshrl.u32 %v2716, 16
      %v2979 = vshll.u32 %v2716, 16
      %v2981 = vrot.slane %v2979, 1
      %v2982 = vor.u32 %v2977, %v2981
      %v2983 = vshll.u32 %v2718, 16
      %v2985 = vrot.slane %v2983, 1
      %v2986 = vsel %vm447, %v2982, %v2985
      %v2987 = vshrl.u32 %v1721, 16
      %v2989 = vshll.u32 %v1721, 16
      %v2991 = vrot.slane %v2989, 1
      %v2992 = vor.u32 %v2987, %v2991
      %v2993 = vshll.u32 %v2762, 16
      %v2995 = vrot.slane %v2993, 1
      %v2996 = vsel %vm447, %v2992, %v2995
      %v2997 = vshrl.u32 %v1536, 16
      %v2999 = vshll.u32 %v1536, 16
      %v3001 = vrot.slane %v2999, 1
      %v3002 = vor.u32 %v2997, %v3001
      %v3003 = vshll.u32 %v2509, 16
      %v3005 = vrot.slane %v3003, 1
      %v3006 = vsel %vm447, %v3002, %v3005
      %v3007 = vshrl.u32 %v2719, 16
      %v3009 = vshll.u32 %v2719, 16
      %v3011 = vrot.slane %v3009, 1
      %v3012 = vor.u32 %v3007, %v3011
      %v3013 = vshll.u32 %v2721, 16
      %v3015 = vrot.slane %v3013, 1
      %v3016 = vsel %vm447, %v3012, %v3015
      %v3017 = vshrl.u32 %v1723, 16
      %v3019 = vshll.u32 %v1723, 16
      %v3021 = vrot.slane %v3019, 1
      %v3022 = vor.u32 %v3017, %v3021
      %v3023 = vshll.u32 %v2764, 16
      %v3025 = vrot.slane %v3023, 1
      %v3026 = vsel %vm447, %v3022, %v3025
      %v3027 = vshrl.u32 %v1539, 16
      %v3029 = vshll.u32 %v1539, 16
      %v3031 = vrot.slane %v3029, 1
      %v3032 = vor.u32 %v3027, %v3031
      %v3033 = vshll.u32 %v2511, 16
      %v3035 = vrot.slane %v3033, 1
      %v3036 = vsel %vm447, %v3032, %v3035
      %v3037 = vshrl.u32 %v2722, 16
      %v3039 = vshll.u32 %v2722, 16
      %v3041 = vrot.slane %v3039, 1
      %v3042 = vor.u32 %v3037, %v3041
      %v3043 = vshll.u32 %v2724, 16
      %v3045 = vrot.slane %v3043, 1
      %v3046 = vsel %vm447, %v3042, %v3045
      %v3047 = vshrl.u32 %v1725, 16
      %v3049 = vshll.u32 %v1725, 16
      %v3051 = vrot.slane %v3049, 1
      %v3052 = vor.u32 %v3047, %v3051
      %v3053 = vshll.u32 %v2766, 16
      %v3055 = vrot.slane %v3053, 1
      %v3056 = vsel %vm447, %v3052, %v3055
      %v3057 = vshrl.u32 %v1542, 16
      %v3059 = vshll.u32 %v1542, 16
      %v3061 = vrot.slane %v3059, 1
      %v3062 = vor.u32 %v3057, %v3061
      %v3063 = vshll.u32 %v2513, 16
      %v3065 = vrot.slane %v3063, 1
      %v3066 = vsel %vm447, %v3062, %v3065
      %v3067 = vshrl.u32 %v2725, 16
      %v3069 = vshll.u32 %v2725, 16
      %v3071 = vrot.slane %v3069, 1
      %v3072 = vor.u32 %v3067, %v3071
      %v3073 = vshll.u32 %v2727, 16
      %v3075 = vrot.slane %v3073, 1
      %v3076 = vsel %vm447, %v3072, %v3075
      %v3077 = vshrl.u32 %v1727, 16
      %v3079 = vshll.u32 %v1727, 16
      %v3081 = vrot.slane %v3079, 1
      %v3082 = vor.u32 %v3077, %v3081
      %v3083 = vshll.u32 %v2768, 16
      %v3085 = vrot.slane %v3083, 1
      %v3086 = vsel %vm447, %v3082, %v3085
      %v3087 = vshrl.u32 %v1545, 16
      %v3089 = vshll.u32 %v1545, 16
      %v3091 = vrot.slane %v3089, 1
      %v3092 = vor.u32 %v3087, %v3091
      %v3093 = vshll.u32 %v2515, 16
      %v3095 = vrot.slane %v3093, 1
      %v3096 = vsel %vm447, %v3092, %v3095
      %v3097 = vshrl.u32 %v2728, 16
      %v3099 = vshll.u32 %v2728, 16
      %v3101 = vrot.slane %v3099, 1
      %v3102 = vor.u32 %v3097, %v3101
      %v3103 = vshll.u32 %v2730, 16
      %v3105 = vrot.slane %v3103, 1
      %v3106 = vsel %vm447, %v3102, %v3105
      %v3107 = vshrl.u32 %v1729, 16
      %v3109 = vshll.u32 %v1729, 16
      %v3111 = vrot.slane %v3109, 1
      %v3112 = vor.u32 %v3107, %v3111
      %v3113 = vshll.u32 %v2770, 16
      %v3115 = vrot.slane %v3113, 1
      %v3116 = vsel %vm447, %v3112, %v3115
      %v3117 = vshrl.u32 %v1548, 16
      %v3119 = vshll.u32 %v1548, 16
      %v3121 = vrot.slane %v3119, 1
      %v3122 = vor.u32 %v3117, %v3121
      %v3123 = vshll.u32 %v2517, 16
      %v3125 = vrot.slane %v3123, 1
      %v3126 = vsel %vm447, %v3122, %v3125
      %v3127 = vshrl.u32 %v2731, 16
      %v3129 = vshll.u32 %v2731, 16
      %v3131 = vrot.slane %v3129, 1
      %v3132 = vor.u32 %v3127, %v3131
      %v3133 = vshll.u32 %v2733, 16
      %v3135 = vrot.slane %v3133, 1
      %v3136 = vsel %vm447, %v3132, %v3135
      %v3137 = vshrl.u32 %v1731, 16
      %v3139 = vshll.u32 %v1731, 16
      %v3141 = vrot.slane %v3139, 1
      %v3142 = vor.u32 %v3137, %v3141
      %v3143 = vshll.u32 %v2772, 16
      %v3145 = vrot.slane %v3143, 1
      %v3146 = vsel %vm447, %v3142, %v3145
      %v3147 = vshrl.u32 %v1551, 16
      %v3149 = vshll.u32 %v1551, 16
      %v3151 = vrot.slane %v3149, 1
      %v3152 = vor.u32 %v3147, %v3151
      %v3153 = vshll.u32 %v2519, 16
      %v3155 = vrot.slane %v3153, 1
      %v3156 = vsel %vm447, %v3152, %v3155
      %v3157 = vshrl.u32 %v2734, 16
      %v3159 = vshll.u32 %v2734, 16
      %v3161 = vrot.slane %v3159, 1
      %v3162 = vor.u32 %v3157, %v3161
      %v3163 = vshll.u32 %v2736, 16
      %v3165 = vrot.slane %v3163, 1
      %v3166 = vsel %vm447, %v3162, %v3165
      %v3167 = vshrl.u32 %v1733, 16
      %v3169 = vshll.u32 %v1733, 16
      %v3171 = vrot.slane %v3169, 1
      %v3172 = vor.u32 %v3167, %v3171
      %v3173 = vshll.u32 %v2774, 16
      %v3175 = vrot.slane %v3173, 1
      %v3176 = vsel %vm447, %v3172, %v3175
      %v3177 = vshrl.u32 %v2521, 16
      %v3179 = vshll.u32 %v2521, 16
      %v3181 = vrot.slane %v3179, 1
      %v3182 = vor.u32 %v3177, %v3181
      %v3183 = vshll.u32 %v2523, 16
      %v3185 = vrot.slane %v3183, 1
      %v3186 = vsel %vm447, %v3182, %v3185
      %v3187 = vshrl.u32 %v2738, 16
      %v3189 = vshll.u32 %v2738, 16
      %v3191 = vrot.slane %v3189, 1
      %v3192 = vor.u32 %v3187, %v3191
      %v3193 = vshll.u32 %v2740, 16
      %v3195 = vrot.slane %v3193, 1
      %v3196 = vsel %vm447, %v3192, %v3195
      %v3197 = vshrl.u32 %v2776, 16
      %v3199 = vshll.u32 %v2776, 16
      %v3201 = vrot.slane %v3199, 1
      %v3202 = vor.u32 %v3197, %v3201
      %v3203 = vshll.u32 %v2778, 16
      %v3205 = vrot.slane %v3203, 1
      %v3206 = vsel %vm447, %v3202, %v3205
      %v3207 = vshrl.u32 %v2525, 16
      %v3209 = vshll.u32 %v2525, 16
      %v3211 = vrot.slane %v3209, 1
      %v3212 = vor.u32 %v3207, %v3211
      %v3213 = vshll.u32 %v2527, 16
      %v3215 = vrot.slane %v3213, 1
      %v3216 = vsel %vm447, %v3212, %v3215
      %v3217 = vshrl.u32 %v2742, 16
      %v3219 = vshll.u32 %v2742, 16
      %v3221 = vrot.slane %v3219, 1
      %v3222 = vor.u32 %v3217, %v3221
      %v3223 = vshll.u32 %v2744, 16
      %v3225 = vrot.slane %v3223, 1
      %v3226 = vsel %vm447, %v3222, %v3225
      %v3227 = vshrl.u32 %v2780, 16
      %v3229 = vshll.u32 %v2780, 16
      %v3231 = vrot.slane %v3229, 1
      %v3232 = vor.u32 %v3227, %v3231
      %v3233 = vshll.u32 %v2782, 16
      %v3235 = vrot.slane %v3233, 1
      %v3236 = vsel %vm447, %v3232, %v3235
      %v3237 = vshrl.u32 %v2529, 16
      %v3239 = vshll.u32 %v2529, 16
      %v3241 = vrot.slane %v3239, 1
      %v3242 = vor.u32 %v3237, %v3241
      %v3243 = vshll.u32 %v2531, 16
      %v3245 = vrot.slane %v3243, 1
      %v3246 = vsel %vm447, %v3242, %v3245
      %v3247 = vshrl.u32 %v2746, 16
      %v3249 = vshll.u32 %v2746, 16
      %v3251 = vrot.slane %v3249, 1
      %v3252 = vor.u32 %v3247, %v3251
      %v3253 = vshll.u32 %v2748, 16
      %v3255 = vrot.slane %v3253, 1
      %v3256 = vsel %vm447, %v3252, %v3255
      %v3257 = vshrl.u32 %v2784, 16
      %v3259 = vshll.u32 %v2784, 16
      %v3261 = vrot.slane %v3259, 1
      %v3262 = vor.u32 %v3257, %v3261
      %v3263 = vshll.u32 %v2786, 16
      %v3265 = vrot.slane %v3263, 1
      %v3266 = vsel %vm447, %v3262, %v3265
      %3267 = vrot.lane.b32.xlu0 %v2796, 64
      %v3268 = vpop.permute.xlu0 %3267
      %3269 = vrot.lane.b32.xlu0 %v2806, 64
      %v3270 = vpop.permute.xlu0 %3269
      %3271 = vrot.lane.b32.xlu0 %v2816, 64
      %v3272 = vpop.permute.xlu0 %3271
      %3273 = vrot.lane.b32.xlu0 %v2826, 64
      %v3274 = vpop.permute.xlu0 %3273
      %3275 = vrot.lane.b32.xlu0 %v2836, 64
      %v3276 = vpop.permute.xlu0 %3275
      %3277 = vrot.lane.b32.xlu0 %v2846, 64
      %v3278 = vpop.permute.xlu0 %3277
      %3279 = vrot.lane.b32.xlu0 %v2856, 64
      %v3280 = vpop.permute.xlu0 %3279
      %3281 = vrot.lane.b32.xlu0 %v2866, 64
      %v3282 = vpop.permute.xlu0 %3281
      %3283 = vrot.lane.b32.xlu0 %v2876, 64
      %v3284 = vpop.permute.xlu0 %3283
      %3285 = vrot.lane.b32.xlu0 %v2886, 64
      %v3286 = vpop.permute.xlu0 %3285
      %3287 = vrot.lane.b32.xlu0 %v2896, 64
      %v3288 = vpop.permute.xlu0 %3287
      %3289 = vrot.lane.b32.xlu0 %v2906, 64
      %v3290 = vpop.permute.xlu0 %3289
      %3291 = vrot.lane.b32.xlu0 %v2916, 64
      %v3292 = vpop.permute.xlu0 %3291
      %3293 = vrot.lane.b32.xlu0 %v2926, 64
      %v3294 = vpop.permute.xlu0 %3293
      %3295 = vrot.lane.b32.xlu0 %v2936, 64
      %v3296 = vpop.permute.xlu0 %3295
      %3297 = vrot.lane.b32.xlu0 %v2946, 64
      %v3298 = vpop.permute.xlu0 %3297
      %3299 = vrot.lane.b32.xlu0 %v2956, 64
      %v3300 = vpop.permute.xlu0 %3299
      %3301 = vrot.lane.b32.xlu0 %v2966, 64
      %v3302 = vpop.permute.xlu0 %3301
      %3303 = vrot.lane.b32.xlu0 %v2976, 64
      %v3304 = vpop.permute.xlu0 %3303
      %3305 = vrot.lane.b32.xlu0 %v2986, 64
      %v3306 = vpop.permute.xlu0 %3305
      %3307 = vrot.lane.b32.xlu0 %v2996, 64
      %v3308 = vpop.permute.xlu0 %3307
      %3309 = vrot.lane.b32.xlu0 %v3006, 64
      %v3310 = vpop.permute.xlu0 %3309
      %3311 = vrot.lane.b32.xlu0 %v3016, 64
      %v3312 = vpop.permute.xlu0 %3311
      %3313 = vrot.lane.b32.xlu0 %v3026, 64
      %v3314 = vpop.permute.xlu0 %3313
      %3315 = vrot.lane.b32.xlu0 %v3036, 64
      %v3316 = vpop.permute.xlu0 %3315
      %3317 = vrot.lane.b32.xlu0 %v3046, 64
      %v3318 = vpop.permute.xlu0 %3317
      %3319 = vrot.lane.b32.xlu0 %v3056, 64
      %v3320 = vpop.permute.xlu0 %3319
      %3321 = vrot.lane.b32.xlu0 %v3066, 64
      %v3322 = vpop.permute.xlu0 %3321
      %3323 = vrot.lane.b32.xlu0 %v3076, 64
      %v3324 = vpop.permute.xlu0 %3323
      %3325 = vrot.lane.b32.xlu0 %v3086, 64
      %v3326 = vpop.permute.xlu0 %3325
      %3327 = vrot.lane.b32.xlu0 %v3096, 64
      %v3328 = vpop.permute.xlu0 %3327
      %3329 = vrot.lane.b32.xlu0 %v3106, 64
      %v3330 = vpop.permute.xlu0 %3329
      %3331 = vrot.lane.b32.xlu0 %v3116, 64
      %v3332 = vpop.permute.xlu0 %3331
      %3333 = vrot.lane.b32.xlu0 %v3126, 64
      %v3334 = vpop.permute.xlu0 %3333
      %3335 = vrot.lane.b32.xlu0 %v3136, 64
      %v3336 = vpop.permute.xlu0 %3335
      %3337 = vrot.lane.b32.xlu0 %v3146, 64
      %v3338 = vpop.permute.xlu0 %3337
      %3339 = vrot.lane.b32.xlu0 %v3156, 64
      %v3340 = vpop.permute.xlu0 %3339
      %3341 = vrot.lane.b32.xlu0 %v3166, 64
      %v3342 = vpop.permute.xlu0 %3341
      %3343 = vrot.lane.b32.xlu0 %v3176, 64
      %v3344 = vpop.permute.xlu0 %3343
      %3345 = vrot.lane.b32.xlu0 %v3186, 64
      %v3346 = vpop.permute.xlu0 %3345
      %3347 = vrot.lane.b32.xlu0 %v3196, 64
      %v3348 = vpop.permute.xlu0 %3347
      %3349 = vrot.lane.b32.xlu0 %v3206, 64
      %v3350 = vpop.permute.xlu0 %3349
      %3351 = vrot.lane.b32.xlu0 %v3216, 64
      %v3352 = vpop.permute.xlu0 %3351
      %3353 = vrot.lane.b32.xlu0 %v3226, 64
      %v3354 = vpop.permute.xlu0 %3353
      %3355 = vrot.lane.b32.xlu0 %v3236, 64
      %v3356 = vpop.permute.xlu0 %3355
      %3357 = vrot.lane.b32.xlu0 %v3246, 64
      %v3358 = vpop.permute.xlu0 %3357
      %3359 = vrot.lane.b32.xlu0 %v3256, 64
      %v3360 = vpop.permute.xlu0 %3359
      %3361 = vrot.lane.b32.xlu0 %v3266, 64
      %v3362 = vpop.permute.xlu0 %3361
      %vm3363 = vcmask 523264
      %v3364 = vsel %vm3363, %v3268, %v3270
      %v3365 = vsel %vm3363, %v3270, %v3272
      %v3366 = vsel %vm3363, %v3274, %v3276
      %v3367 = vsel %vm3363, %v3276, %v3278
      %v3368 = vsel %vm3363, %v3280, %v3282
      %v3369 = vsel %vm3363, %v3282, %v3284
      %v3370 = vsel %vm3363, %v3286, %v3288
      %v3371 = vsel %vm3363, %v3288, %v3290
      %v3372 = vsel %vm3363, %v3292, %v3294
      %v3373 = vsel %vm3363, %v3294, %v3296
      %v3374 = vsel %vm3363, %v3298, %v3300
      %v3375 = vsel %vm3363, %v3300, %v3302
      %v3376 = vsel %vm3363, %v3304, %v3306
      %v3377 = vsel %vm3363, %v3306, %v3308
      %v3378 = vsel %vm3363, %v3310, %v3312
      %v3379 = vsel %vm3363, %v3312, %v3314
      %v3380 = vsel %vm3363, %v3316, %v3318
      %v3381 = vsel %vm3363, %v3318, %v3320
      %v3382 = vsel %vm3363, %v3322, %v3324
      %v3383 = vsel %vm3363, %v3324, %v3326
      %v3384 = vsel %vm3363, %v3328, %v3330
      %v3385 = vsel %vm3363, %v3330, %v3332
      %v3386 = vsel %vm3363, %v3334, %v3336
      %v3387 = vsel %vm3363, %v3336, %v3338
      %v3388 = vsel %vm3363, %v3340, %v3342
      %v3389 = vsel %vm3363, %v3342, %v3344
      %v3390 = vsel %vm3363, %v3346, %v3348
      %v3391 = vsel %vm3363, %v3348, %v3350
      %v3392 = vsel %vm3363, %v3352, %v3354
      %v3393 = vsel %vm3363, %v3354, %v3356
      %v3394 = vsel %vm3363, %v3358, %v3360
      %v3395 = vsel %vm3363, %v3360, %v3362
      %vm3428 = vcmask 523264
      %v3430 = vsel %vm3428, %v1966, %v3268
      %v3433 = vsel %vm3428, %v1968, %v3274
      %v3436 = vsel %vm3428, %v1970, %v3280
      %v3439 = vsel %vm3428, %v1972, %v3286
      %v3442 = vsel %vm3428, %v1974, %v3292
      %v3445 = vsel %vm3428, %v1976, %v3298
      %v3448 = vsel %vm3428, %v1978, %v3304
      %v3451 = vsel %vm3428, %v1980, %v3310
      %v3454 = vsel %vm3428, %v1982, %v3316
      %v3457 = vsel %vm3428, %v1984, %v3322
      %v3460 = vsel %vm3428, %v1986, %v3328
      %v3463 = vsel %vm3428, %v1988, %v3334
      %v3466 = vsel %vm3428, %v1990, %v3340
      %v3469 = vsel %vm3428, %v1992, %v3346
      %v3472 = vsel %vm3428, %v1994, %v3352
      %v3475 = vsel %vm3428, %v1996, %v3358
      %v3477 = vld [vmem:[%s2] sm:$0xf]
      %v3478 = vld [vmem:[%s2 + $0x4] sm:$0xf]
      %v3479 = vld [vmem:[%s2 + $0x8] sm:$0xf]
      %v3480 = vld [vmem:[%s2 + $0xc] sm:$0xf]
      %v3481 = vld [vmem:[%s2 + $0x10] sm:$0xf]
      %v3482 = vld [vmem:[%s2 + $0x14] sm:$0xf]
      %v3483 = vld [vmem:[%s2 + $0x18] sm:$0xf]
      %v3484 = vld [vmem:[%s2 + $0x1c] sm:$0xf]
      %v3485 = vld [vmem:[%s2 + $0x20] sm:$0xf]
      %v3486 = vld [vmem:[%s2 + $0x24] sm:$0xf]
      %v3487 = vld [vmem:[%s2 + $0x28] sm:$0xf]
      %v3488 = vld [vmem:[%s2 + $0x2c] sm:$0xf]
      %v3489 = vld [vmem:[%s2 + $0x30] sm:$0xf]
      %v3490 = vld [vmem:[%s2 + $0x34] sm:$0xf]
      %v3491 = vld [vmem:[%s2 + $0x38] sm:$0xf]
      %v3492 = vld [vmem:[%s2 + $0x3c] sm:$0xf]
      %v3493 = vld [vmem:[%s2 + $0x40] sm:$0xf]
      %v3494 = vld [vmem:[%s2 + $0x44] sm:$0xf]
      %v3495 = vld [vmem:[%s2 + $0x48] sm:$0xf]
      %v3496 = vld [vmem:[%s2 + $0x4c] sm:$0xf]
      %v3497 = vld [vmem:[%s2 + $0x50] sm:$0xf]
      %v3498 = vld [vmem:[%s2 + $0x54] sm:$0xf]
      %v3499 = vld [vmem:[%s2 + $0x58] sm:$0xf]
      %v3500 = vld [vmem:[%s2 + $0x5c] sm:$0xf]
      %v3501 = vld [vmem:[%s2 + $0x60] sm:$0xf]
      %v3502 = vld [vmem:[%s2 + $0x64] sm:$0xf]
      %v3503 = vld [vmem:[%s2 + $0x68] sm:$0xf]
      %v3504 = vld [vmem:[%s2 + $0x6c] sm:$0xf]
      %v3505 = vld [vmem:[%s2 + $0x70] sm:$0xf]
      %v3506 = vld [vmem:[%s2 + $0x74] sm:$0xf]
      %v3507 = vld [vmem:[%s2 + $0x78] sm:$0xf]
      %v3508 = vld [vmem:[%s2 + $0x7c] sm:$0xf]
      %v3509 = vld [vmem:[%s2 + $0x80] sm:$0xf]
      %v3510 = vld [vmem:[%s2 + $0x84] sm:$0xf]
      %v3511 = vld [vmem:[%s2 + $0x88] sm:$0xf]
      %v3512 = vld [vmem:[%s2 + $0x8c] sm:$0xf]
      %v3513 = vld [vmem:[%s2 + $0x90] sm:$0xf]
      %v3514 = vld [vmem:[%s2 + $0x94] sm:$0xf]
      %v3515 = vld [vmem:[%s2 + $0x98] sm:$0xf]
      %v3516 = vld [vmem:[%s2 + $0x9c] sm:$0xf]
      %v3517 = vld [vmem:[%s2 + $0xa0] sm:$0xf]
      %v3518 = vld [vmem:[%s2 + $0xa4] sm:$0xf]
      %v3519 = vld [vmem:[%s2 + $0xa8] sm:$0xf]
      %v3520 = vld [vmem:[%s2 + $0xac] sm:$0xf]
      %v3521 = vld [vmem:[%s2 + $0xb0] sm:$0xf]
      %v3522 = vld [vmem:[%s2 + $0xb4] sm:$0xf]
      %v3523 = vld [vmem:[%s2 + $0xb8] sm:$0xf]
      %v3524 = vld [vmem:[%s2 + $0xbc] sm:$0xf]
      %v3525 = vld [vmem:[%s2 + $0xc0] sm:$0xf]
      %v3526 = vld [vmem:[%s2 + $0xc4] sm:$0xf]
      %v3527 = vld [vmem:[%s2 + $0xc8] sm:$0xf]
      %v3528 = vld [vmem:[%s2 + $0xcc] sm:$0xf]
      %v3529 = vld [vmem:[%s2 + $0xd0] sm:$0xf]
      %v3530 = vld [vmem:[%s2 + $0xd4] sm:$0xf]
      %v3531 = vld [vmem:[%s2 + $0xd8] sm:$0xf]
      %v3532 = vld [vmem:[%s2 + $0xdc] sm:$0xf]
      %v3533 = vld [vmem:[%s2 + $0xe0] sm:$0xf]
      %v3534 = vld [vmem:[%s2 + $0xe4] sm:$0xf]
      %v3535 = vld [vmem:[%s2 + $0xe8] sm:$0xf]
      %v3536 = vld [vmem:[%s2 + $0xec] sm:$0xf]
      %v3537 = vld [vmem:[%s2 + $0xf0] sm:$0xf]
      %v3538 = vld [vmem:[%s2 + $0xf4] sm:$0xf]
      %v3539 = vld [vmem:[%s2 + $0xf8] sm:$0xf]
      %v3540 = vld [vmem:[%s2 + $0xfc] sm:$0xf]
      %v3541 = vld [vmem:[%s2 + $0x100] sm:$0xf]
      %v3542 = vld [vmem:[%s2 + $0x104] sm:$0xf]
      %v3543 = vld [vmem:[%s2 + $0x108] sm:$0xf]
      %v3544 = vld [vmem:[%s2 + $0x10c] sm:$0xf]
      %v3545 = vld [vmem:[%s2 + $0x110] sm:$0xf]
      %v3546 = vld [vmem:[%s2 + $0x114] sm:$0xf]
      %v3547 = vld [vmem:[%s2 + $0x118] sm:$0xf]
      %v3548 = vld [vmem:[%s2 + $0x11c] sm:$0xf]
      %v3549 = vld [vmem:[%s2 + $0x120] sm:$0xf]
      %v3550 = vld [vmem:[%s2 + $0x124] sm:$0xf]
      %v3551 = vld [vmem:[%s2 + $0x128] sm:$0xf]
      %v3552 = vld [vmem:[%s2 + $0x12c] sm:$0xf]
      %v3553 = vld [vmem:[%s2 + $0x130] sm:$0xf]
      %v3554 = vld [vmem:[%s2 + $0x134] sm:$0xf]
      %v3555 = vld [vmem:[%s2 + $0x138] sm:$0xf]
      %v3556 = vld [vmem:[%s2 + $0x13c] sm:$0xf]
      %v3557 = vld [vmem:[%s2 + $0x140] sm:$0xf]
      %v3558 = vld [vmem:[%s2 + $0x144] sm:$0xf]
      %v3559 = vld [vmem:[%s2 + $0x148] sm:$0xf]
      %v3560 = vld [vmem:[%s2 + $0x14c] sm:$0xf]
      %v3561 = vld [vmem:[%s2 + $0x150] sm:$0xf]
      %v3562 = vld [vmem:[%s2 + $0x154] sm:$0xf]
      %v3563 = vld [vmem:[%s2 + $0x158] sm:$0xf]
      %v3564 = vld [vmem:[%s2 + $0x15c] sm:$0xf]
      %v3565 = vld [vmem:[%s2 + $0x160] sm:$0xf]
      %v3566 = vld [vmem:[%s2 + $0x164] sm:$0xf]
      %v3567 = vld [vmem:[%s2 + $0x168] sm:$0xf]
      %v3568 = vld [vmem:[%s2 + $0x16c] sm:$0xf]
      %v3569 = vld [vmem:[%s2 + $0x170] sm:$0xf]
      %v3570 = vld [vmem:[%s2 + $0x174] sm:$0xf]
      %v3571 = vld [vmem:[%s2 + $0x178] sm:$0xf]
      %v3572 = vld [vmem:[%s2 + $0x17c] sm:$0xf]
      %v3573 = vld [vmem:[%s2 + $0x180] sm:$0xf]
      %v3574 = vld [vmem:[%s2 + $0x184] sm:$0xf]
      %v3575 = vld [vmem:[%s2 + $0x188] sm:$0xf]
      %v3576 = vld [vmem:[%s2 + $0x18c] sm:$0xf]
      %v3577 = vld [vmem:[%s2 + $0x190] sm:$0xf]
      %v3578 = vld [vmem:[%s2 + $0x194] sm:$0xf]
      %v3579 = vld [vmem:[%s2 + $0x198] sm:$0xf]
      %v3580 = vld [vmem:[%s2 + $0x19c] sm:$0xf]
      %v3581 = vld [vmem:[%s2 + $0x1a0] sm:$0xf]
      %v3582 = vld [vmem:[%s2 + $0x1a4] sm:$0xf]
      %v3583 = vld [vmem:[%s2 + $0x1a8] sm:$0xf]
      %v3584 = vld [vmem:[%s2 + $0x1ac] sm:$0xf]
      %v3585 = vld [vmem:[%s2 + $0x1b0] sm:$0xf]
      %v3586 = vld [vmem:[%s2 + $0x1b4] sm:$0xf]
      %v3587 = vld [vmem:[%s2 + $0x1b8] sm:$0xf]
      %v3588 = vld [vmem:[%s2 + $0x1bc] sm:$0xf]
      %v3589 = vld [vmem:[%s2 + $0x1c0] sm:$0x3]
      %v3590 = vld [vmem:[%s3] sm:$0x1]
      %v3592 = vlaneseq
      %v3593 = vshrl.u32 %v3592, 7
      %v3594 = vsub.s32 0, %v3593
      %v3595 = vrot.slane %v3590, %v3594
      %v3710 = vunpack.c.l.b16 %v3477
      %v3711 = vunpack.c.l.b16 %v3478
      %v3712 = vunpack.c.l.b16 %v3479
      %v3713 = vunpack.c.l.b16 %v3480
      %v3714 = vunpack.c.l.b16 %v3481
      %v3715 = vunpack.c.l.b16 %v3482
      %v3716 = vunpack.c.l.b16 %v3483
      %v3717 = vunpack.c.l.b16 %v3484
      %v3718 = vunpack.c.l.b16 %v3485
      %v3719 = vunpack.c.l.b16 %v3486
      %v3720 = vunpack.c.l.b16 %v3487
      %v3721 = vunpack.c.l.b16 %v3488
      %v3722 = vunpack.c.l.b16 %v3489
      %v3723 = vunpack.c.l.b16 %v3490
      %v3724 = vunpack.c.l.b16 %v3491
      %v3725 = vunpack.c.l.b16 %v3492
      %v3726 = vunpack.c.l.b16 %v3493
      %v3727 = vunpack.c.l.b16 %v3494
      %v3728 = vunpack.c.l.b16 %v3495
      %v3729 = vunpack.c.l.b16 %v3496
      %v3730 = vunpack.c.l.b16 %v3497
      %v3731 = vunpack.c.l.b16 %v3498
      %v3732 = vunpack.c.l.b16 %v3499
      %v3733 = vunpack.c.l.b16 %v3500
      %v3734 = vunpack.c.l.b16 %v3501
      %v3735 = vunpack.c.l.b16 %v3502
      %v3736 = vunpack.c.l.b16 %v3503
      %v3737 = vunpack.c.l.b16 %v3504
      %v3738 = vunpack.c.l.b16 %v3505
      %v3739 = vunpack.c.l.b16 %v3506
      %v3740 = vunpack.c.l.b16 %v3507
      %v3741 = vunpack.c.l.b16 %v3508
      %v3742 = vunpack.c.l.b16 %v3509
      %v3743 = vunpack.c.l.b16 %v3510
      %v3744 = vunpack.c.l.b16 %v3511
      %v3745 = vunpack.c.l.b16 %v3512
      %v3746 = vunpack.c.l.b16 %v3513
      %v3747 = vunpack.c.l.b16 %v3514
      %v3748 = vunpack.c.l.b16 %v3515
      %v3749 = vunpack.c.l.b16 %v3516
      %v3750 = vunpack.c.l.b16 %v3517
      %v3751 = vunpack.c.l.b16 %v3518
      %v3752 = vunpack.c.l.b16 %v3519
      %v3753 = vunpack.c.l.b16 %v3520
      %v3754 = vunpack.c.l.b16 %v3521
      %v3755 = vunpack.c.l.b16 %v3522
      %v3756 = vunpack.c.l.b16 %v3523
      %v3757 = vunpack.c.l.b16 %v3524
      %v3758 = vunpack.c.l.b16 %v3525
      %v3759 = vunpack.c.l.b16 %v3526
      %v3760 = vunpack.c.l.b16 %v3527
      %v3761 = vunpack.c.l.b16 %v3528
      %v3762 = vunpack.c.l.b16 %v3529
      %v3763 = vunpack.c.l.b16 %v3530
      %v3764 = vunpack.c.l.b16 %v3531
      %v3765 = vunpack.c.l.b16 %v3532
      %v3766 = vunpack.c.l.b16 %v3533
      %v3767 = vunpack.c.l.b16 %v3534
      %v3768 = vunpack.c.l.b16 %v3535
      %v3769 = vunpack.c.l.b16 %v3536
      %v3770 = vunpack.c.l.b16 %v3537
      %v3771 = vunpack.c.l.b16 %v3538
      %v3772 = vunpack.c.l.b16 %v3539
      %v3773 = vunpack.c.l.b16 %v3540
      %v3774 = vunpack.c.l.b16 %v3541
      %v3775 = vunpack.c.l.b16 %v3542
      %v3776 = vunpack.c.l.b16 %v3543
      %v3777 = vunpack.c.l.b16 %v3544
      %v3778 = vunpack.c.l.b16 %v3545
      %v3779 = vunpack.c.l.b16 %v3546
      %v3780 = vunpack.c.l.b16 %v3547
      %v3781 = vunpack.c.l.b16 %v3548
      %v3782 = vunpack.c.l.b16 %v3549
      %v3783 = vunpack.c.l.b16 %v3550
      %v3784 = vunpack.c.l.b16 %v3551
      %v3785 = vunpack.c.l.b16 %v3552
      %v3786 = vunpack.c.l.b16 %v3553
      %v3787 = vunpack.c.l.b16 %v3554
      %v3788 = vunpack.c.l.b16 %v3555
      %v3789 = vunpack.c.l.b16 %v3556
      %v3790 = vunpack.c.l.b16 %v3557
      %v3791 = vunpack.c.l.b16 %v3558
      %v3792 = vunpack.c.l.b16 %v3559
      %v3793 = vunpack.c.l.b16 %v3560
      %v3794 = vunpack.c.l.b16 %v3561
      %v3795 = vunpack.c.l.b16 %v3562
      %v3796 = vunpack.c.l.b16 %v3563
      %v3797 = vunpack.c.l.b16 %v3564
      %v3798 = vunpack.c.l.b16 %v3565
      %v3799 = vunpack.c.l.b16 %v3566
      %v3800 = vunpack.c.l.b16 %v3567
      %v3801 = vunpack.c.l.b16 %v3568
      %v3802 = vunpack.c.l.b16 %v3569
      %v3803 = vunpack.c.l.b16 %v3570
      %v3804 = vunpack.c.l.b16 %v3571
      %v3805 = vunpack.c.l.b16 %v3572
      %v3806 = vunpack.c.l.b16 %v3573
      %v3807 = vunpack.c.l.b16 %v3574
      %v3808 = vunpack.c.l.b16 %v3575
      %v3809 = vunpack.c.l.b16 %v3576
      %v3810 = vunpack.c.l.b16 %v3577
      %v3811 = vunpack.c.l.b16 %v3578
      %v3812 = vunpack.c.l.b16 %v3579
      %v3813 = vunpack.c.l.b16 %v3580
      %v3814 = vunpack.c.l.b16 %v3581
      %v3815 = vunpack.c.l.b16 %v3582
      %v3816 = vunpack.c.l.b16 %v3583
      %v3817 = vunpack.c.l.b16 %v3584
      %v3818 = vunpack.c.l.b16 %v3585
      %v3819 = vunpack.c.l.b16 %v3586
      %v3820 = vunpack.c.l.b16 %v3587
      %v3821 = vunpack.c.l.b16 %v3588
      %v3822 = vunpack.c.l.b16 %v3589
      %v3823 = vpack.c.b16 %v3711, %v3710
      %v3824 = vpack.c.b16 %v3713, %v3712
      %v3825 = vpack.c.b16 %v3715, %v3714
      %v3826 = vpack.c.b16 %v3717, %v3716
      %v3827 = vpack.c.b16 %v3719, %v3718
      %v3828 = vpack.c.b16 %v3721, %v3720
      %v3829 = vpack.c.b16 %v3723, %v3722
      %v3830 = vpack.c.b16 %v3725, %v3724
      %v3831 = vpack.c.b16 %v3727, %v3726
      %v3832 = vpack.c.b16 %v3729, %v3728
      %v3833 = vpack.c.b16 %v3731, %v3730
      %v3834 = vpack.c.b16 %v3733, %v3732
      %v3835 = vpack.c.b16 %v3735, %v3734
      %v3836 = vpack.c.b16 %v3737, %v3736
      %v3837 = vpack.c.b16 %v3739, %v3738
      %v3838 = vpack.c.b16 %v3741, %v3740
      %v3839 = vpack.c.b16 %v3743, %v3742
      %v3840 = vpack.c.b16 %v3745, %v3744
      %v3841 = vpack.c.b16 %v3747, %v3746
      %v3842 = vpack.c.b16 %v3749, %v3748
      %v3843 = vpack.c.b16 %v3751, %v3750
      %v3844 = vpack.c.b16 %v3753, %v3752
      %v3845 = vpack.c.b16 %v3755, %v3754
      %v3846 = vpack.c.b16 %v3757, %v3756
      %v3847 = vpack.c.b16 %v3759, %v3758
      %v3848 = vpack.c.b16 %v3761, %v3760
      %v3849 = vpack.c.b16 %v3763, %v3762
      %v3850 = vpack.c.b16 %v3765, %v3764
      %v3851 = vpack.c.b16 %v3767, %v3766
      %v3852 = vpack.c.b16 %v3769, %v3768
      %v3853 = vpack.c.b16 %v3771, %v3770
      %v3854 = vpack.c.b16 %v3773, %v3772
      %v3855 = vpack.c.b16 %v3775, %v3774
      %v3856 = vpack.c.b16 %v3777, %v3776
      %v3857 = vpack.c.b16 %v3779, %v3778
      %v3858 = vpack.c.b16 %v3781, %v3780
      %v3859 = vpack.c.b16 %v3783, %v3782
      %v3860 = vpack.c.b16 %v3785, %v3784
      %v3861 = vpack.c.b16 %v3787, %v3786
      %v3862 = vpack.c.b16 %v3789, %v3788
      %v3863 = vpack.c.b16 %v3791, %v3790
      %v3864 = vpack.c.b16 %v3793, %v3792
      %v3865 = vpack.c.b16 %v3795, %v3794
      %v3866 = vpack.c.b16 %v3797, %v3796
      %v3867 = vpack.c.b16 %v3799, %v3798
      %v3868 = vpack.c.b16 %v3801, %v3800
      %v3869 = vpack.c.b16 %v3803, %v3802
      %v3870 = vpack.c.b16 %v3805, %v3804
      %v3871 = vpack.c.b16 %v3807, %v3806
      %v3872 = vpack.c.b16 %v3809, %v3808
      %v3873 = vpack.c.b16 %v3811, %v3810
      %v3874 = vpack.c.b16 %v3813, %v3812
      %v3875 = vpack.c.b16 %v3815, %v3814
      %v3876 = vpack.c.b16 %v3817, %v3816
      %v3877 = vpack.c.b16 %v3819, %v3818
      %v3878 = vpack.c.b16 %v3821, %v3820
      %v3879 = vpack.c.b16 %v3822, %v3822
      %vm3936 = vcmask 31744
      %v3938 = vsel %vm3936, %v3272, 0
      %v3941 = vsel %vm3936, %v3278, 0
      %v3944 = vsel %vm3936, %v3284, 0
      %v3947 = vsel %vm3936, %v3290, 0
      %v3950 = vsel %vm3936, %v3296, 0
      %v3953 = vsel %vm3936, %v3302, 0
      %v3956 = vsel %vm3936, %v3308, 0
      %v3959 = vsel %vm3936, %v3314, 0
      %v3962 = vsel %vm3936, %v3320, 0
      %v3965 = vsel %vm3936, %v3326, 0
      %v3968 = vsel %vm3936, %v3332, 0
      %v3971 = vsel %vm3936, %v3338, 0
      %v3974 = vsel %vm3936, %v3344, 0
      %v3977 = vsel %vm3936, %v3350, 0
      %v3980 = vsel %vm3936, %v3356, 0
      %v3983 = vsel %vm3936, %v3362, 0
      %vm3985 = vcmask 1041408
      %v3987 = vsel %vm3985, %v3879, 0
      %3989 = vmatprep.subr.bf16.mxu0 0
      %3990 = vmatpush1.bf16.msra.mxu0 %v3823
      %3991 = vmatprep.subr.bf16.mxu0 0
      %3992 = vmatpush1.bf16.msra.mxu0 %v3824
      %3993 = vmatprep.subr.bf16.mxu0 0
      %3994 = vmatpush1.bf16.msra.mxu0 %v3825
      %3995 = vmatprep.subr.bf16.mxu0 0
      %3996 = vmatpush1.bf16.msra.mxu0 %v3826
      %3997 = vmatprep.subr.bf16.mxu0 0
      %3998 = vmatpush1.bf16.msra.mxu0 %v3827
      %3999 = vmatprep.subr.bf16.mxu0 0
      %4000 = vmatpush1.bf16.msra.mxu0 %v3828
      %4001 = vmatprep.subr.bf16.mxu0 0
      %4002 = vmatpush1.bf16.msra.mxu0 %v3829
      %4003 = vmatprep.subr.bf16.mxu0 0
      %4004 = vmatpush1.bf16.msra.mxu0 %v3830
      %4005 = vmatprep.subr.bf16.mxu0 0
      %4006 = vmatpush1.bf16.msra.mxu0 %v3831
      %4007 = vmatprep.subr.bf16.mxu0 0
      %4008 = vmatpush1.bf16.msra.mxu0 %v3832
      %4009 = vmatprep.subr.bf16.mxu0 0
      %4010 = vmatpush1.bf16.msra.mxu0 %v3833
      %4011 = vmatprep.subr.bf16.mxu0 0
      %4012 = vmatpush1.bf16.msra.mxu0 %v3834
      %4013 = vmatprep.subr.bf16.mxu0 0
      %4014 = vmatpush1.bf16.msra.mxu0 %v3835
      %4015 = vmatprep.subr.bf16.mxu0 0
      %4016 = vmatpush1.bf16.msra.mxu0 %v3836
      %4017 = vmatprep.subr.bf16.mxu0 0
      %4018 = vmatpush1.bf16.msra.mxu0 %v3837
      %4019 = vmatprep.subr.bf16.mxu0 0
      %4020 = vmatpush1.bf16.msra.mxu0 %v3838
      %4021 = vmatprep.mubr.bf16.mxu0 %v1654
      %4022 = vmatmul.mubr.bf16.gmra.mrb[0].mxu0 %v1506
      %v4023 = vpop.f32.mrb[0].mxu0
      %v4024 = vadd.f32 %v3595, %v4023
      %v4025 = vpop.f32.mrb[0].mxu0
      %v4026 = vpop.f32.mrb[0].mxu0
      %v4027 = vadd.f32 %v3595, %v4026
      %v4028 = vpop.f32.mrb[0].mxu0
      %4029 = vmatprep.mubr.bf16.mxu0 %v1657
      %4030 = vmatmul.mubr.bf16.gmra.mrb[0].mxu0 %v1509
      %v4031 = vpop.f32.mrb[0].mxu0
      %v4032 = vadd.f32 %v3595, %v4031
      %v4033 = vpop.f32.mrb[0].mxu0
      %v4034 = vpop.f32.mrb[0].mxu0
      %v4035 = vadd.f32 %v3595, %v4034
      %v4036 = vpop.f32.mrb[0].mxu0
      %4037 = vmatprep.mubr.bf16.mxu0 %v1660
      %4038 = vmatmul.mubr.bf16.gmra.mrb[0].mxu0 %v1512
      %v4039 = vpop.f32.mrb[0].mxu0
      %v4040 = vadd.f32 %v3595, %v4039
      %v4041 = vpop.f32.mrb[0].mxu0
      %v4042 = vpop.f32.mrb[0].mxu0
      %v4043 = vadd.f32 %v3595, %v4042
      %v4044 = vpop.f32.mrb[0].mxu0
      %4045 = vmatprep.mubr.bf16.mxu0 %v1663
      %4046 = vmatmul.mubr.bf16.gmra.mrb[0].mxu0 %v1515
      %v4047 = vpop.f32.mrb[0].mxu0
      %v4048 = vadd.f32 %v3595, %v4047
      %v4049 = vpop.f32.mrb[0].mxu0
      %v4050 = vpop.f32.mrb[0].mxu0
      %v4051 = vadd.f32 %v3595, %v4050
      %v4052 = vpop.f32.mrb[0].mxu0
      %4053 = vmatprep.mubr.bf16.mxu0 %v1666
      %4054 = vmatmul.mubr.bf16.gmra.mrb[0].mxu0 %v1518
      %v4055 = vpop.f32.mrb[0].mxu0
      %v4056 = vadd.f32 %v3595, %v4055
      %v4057 = vpop.f32.mrb[0].mxu0
      %v4058 = vpop.f32.mrb[0].mxu0
      %v4059 = vadd.f32 %v3595, %v4058
      %v4060 = vpop.f32.mrb[0].mxu0
      %4061 = vmatprep.mubr.bf16.mxu0 %v1669
      %4062 = vmatmul.mubr.bf16.gmra.mrb[0].mxu0 %v1521
      %v4063 = vpop.f32.mrb[0].mxu0
      %v4064 = vadd.f32 %v3595, %v4063
      %v4065 = vpop.f32.mrb[0].mxu0
      %v4066 = vpop.f32.mrb[0].mxu0
      %v4067 = vadd.f32 %v3595, %v4066
      %v4068 = vpop.f32.mrb[0].mxu0
      %4069 = vmatprep.mubr.bf16.mxu0 %v1672
      %4070 = vmatmul.mubr.bf16.gmra.mrb[0].mxu0 %v1524
      %v4071 = vpop.f32.mrb[0].mxu0
      %v4072 = vadd.f32 %v3595, %v4071
      %v4073 = vpop.f32.mrb[0].mxu0
      %v4074 = vpop.f32.mrb[0].mxu0
      %v4075 = vadd.f32 %v3595, %v4074
      %v4076 = vpop.f32.mrb[0].mxu0
      %4077 = vmatprep.mubr.bf16.mxu0 %v1675
      %4078 = vmatmul.mubr.bf16.gmra.mrb[0].mxu0 %v1527
      %v4079 = vpop.f32.mrb[0].mxu0
      %v4080 = vadd.f32 %v3595, %v4079
      %v4081 = vpop.f32.mrb[0].mxu0
      %v4082 = vpop.f32.mrb[0].mxu0
      %v4083 = vadd.f32 %v3595, %v4082
      %v4084 = vpop.f32.mrb[0].mxu0
      %4085 = vmatprep.mubr.bf16.mxu0 %v1678
      %4086 = vmatmul.mubr.bf16.gmra.mrb[0].mxu0 %v1530
      %v4087 = vpop.f32.mrb[0].mxu0
      %v4088 = vadd.f32 %v3595, %v4087
      %v4089 = vpop.f32.mrb[0].mxu0
      %v4090 = vpop.f32.mrb[0].mxu0
      %v4091 = vadd.f32 %v3595, %v4090
      %v4092 = vpop.f32.mrb[0].mxu0
      %4093 = vmatprep.mubr.bf16.mxu0 %v1681
      %4094 = vmatmul.mubr.bf16.gmra.mrb[0].mxu0 %v1533
      %v4095 = vpop.f32.mrb[0].mxu0
      %v4096 = vadd.f32 %v3595, %v4095
      %v4097 = vpop.f32.mrb[0].mxu0
      %v4098 = vpop.f32.mrb[0].mxu0
      %v4099 = vadd.f32 %v3595, %v4098
      %v4100 = vpop.f32.mrb[0].mxu0
      %4101 = vmatprep.mubr.bf16.mxu0 %v1684
      %4102 = vmatmul.mubr.bf16.gmra.mrb[0].mxu0 %v1536
      %v4103 = vpop.f32.mrb[0].mxu0
      %v4104 = vadd.f32 %v3595, %v4103
      %v4105 = vpop.f32.mrb[0].mxu0
      %v4106 = vpop.f32.mrb[0].mxu0
      %v4107 = vadd.f32 %v3595, %v4106
      %v4108 = vpop.f32.mrb[0].mxu0
      %4109 = vmatprep.mubr.bf16.mxu0 %v1687
      %4110 = vmatmul.mubr.bf16.gmra.mrb[0].mxu0 %v1539
      %v4111 = vpop.f32.mrb[0].mxu0
      %v4112 = vadd.f32 %v3595, %v4111
      %v4113 = vpop.f32.mrb[0].mxu0
      %v4114 = vpop.f32.mrb[0].mxu0
      %v4115 = vadd.f32 %v3595, %v4114
      %v4116 = vpop.f32.mrb[0].mxu0
      %4117 = vmatprep.mubr.bf16.mxu0 %v1690
      %4118 = vmatmul.mubr.bf16.gmra.mrb[0].mxu0 %v1542
      %v4119 = vpop.f32.mrb[0].mxu0
      %v4120 = vadd.f32 %v3595, %v4119
      %v4121 = vpop.f32.mrb[0].mxu0
      %v4122 = vpop.f32.mrb[0].mxu0
      %v4123 = vadd.f32 %v3595, %v4122
      %v4124 = vpop.f32.mrb[0].mxu0
      %4125 = vmatprep.mubr.bf16.mxu0 %v1693
      %4126 = vmatmul.mubr.bf16.gmra.mrb[0].mxu0 %v1545
      %v4127 = vpop.f32.mrb[0].mxu0
      %v4128 = vadd.f32 %v3595, %v4127
      %v4129 = vpop.f32.mrb[0].mxu0
      %v4130 = vpop.f32.mrb[0].mxu0
      %v4131 = vadd.f32 %v3595, %v4130
      %v4132 = vpop.f32.mrb[0].mxu0
      %4133 = vmatprep.mubr.bf16.mxu0 %v1696
      %4134 = vmatmul.mubr.bf16.gmra.mrb[0].mxu0 %v1548
      %v4135 = vpop.f32.mrb[0].mxu0
      %v4136 = vadd.f32 %v3595, %v4135
      %v4137 = vpop.f32.mrb[0].mxu0
      %v4138 = vpop.f32.mrb[0].mxu0
      %v4139 = vadd.f32 %v3595, %v4138
      %v4140 = vpop.f32.mrb[0].mxu0
      %4141 = vmatprep.mubr.bf16.mxu0 %v1699
      %4142 = vmatmul.mubr.bf16.gmra.mrb[0].mxu0 %v1551
      %v4143 = vpop.f32.mrb[0].mxu0
      %v4144 = vadd.f32 %v3595, %v4143
      %v4145 = vpop.f32.mrb[0].mxu0
      %v4146 = vpop.f32.mrb[0].mxu0
      %v4147 = vadd.f32 %v3595, %v4146
      %v4148 = vpop.f32.mrb[0].mxu0
      %4149 = vdwg.mxu0
      %4150 = vmatprep.subr.bf16.mxu0 0
      %4151 = vmatpush1.bf16.msra.mxu0 %v3839
      %4152 = vmatprep.subr.bf16.mxu0 0
      %4153 = vmatpush1.bf16.msra.mxu0 %v3840
      %4154 = vmatprep.subr.bf16.mxu0 0
      %4155 = vmatpush1.bf16.msra.mxu0 %v3841
      %4156 = vmatprep.subr.bf16.mxu0 0
      %4157 = vmatpush1.bf16.msra.mxu0 %v3842
      %4158 = vmatprep.subr.bf16.mxu0 0
      %4159 = vmatpush1.bf16.msra.mxu0 %v3843
      %4160 = vmatprep.subr.bf16.mxu0 0
      %4161 = vmatpush1.bf16.msra.mxu0 %v3844
      %4162 = vmatprep.subr.bf16.mxu0 0
      %4163 = vmatpush1.bf16.msra.mxu0 %v3845
      %4164 = vmatprep.subr.bf16.mxu0 0
      %4165 = vmatpush1.bf16.msra.mxu0 %v3846
      %4166 = vmatprep.subr.bf16.mxu0 0
      %4167 = vmatpush1.bf16.msra.mxu0 %v3847
      %4168 = vmatprep.subr.bf16.mxu0 0
      %4169 = vmatpush1.bf16.msra.mxu0 %v3848
      %4170 = vmatprep.subr.bf16.mxu0 0
      %4171 = vmatpush1.bf16.msra.mxu0 %v3849
      %4172 = vmatprep.subr.bf16.mxu0 0
      %4173 = vmatpush1.bf16.msra.mxu0 %v3850
      %4174 = vmatprep.subr.bf16.mxu0 0
      %4175 = vmatpush1.bf16.msra.mxu0 %v3851
      %4176 = vmatprep.subr.bf16.mxu0 0
      %4177 = vmatpush1.bf16.msra.mxu0 %v3852
      %4178 = vmatprep.subr.bf16.mxu0 0
      %4179 = vmatpush1.bf16.msra.mxu0 %v3853
      %4180 = vmatprep.subr.bf16.mxu0 0
      %4181 = vmatpush1.bf16.msra.mxu0 %v3854
      %4182 = vmatprep.mubr.bf16.mxu0 %v1917
      %4183 = vmatmul.mubr.bf16.gmra.mrb[0].mxu0 %v1769
      %v4184 = vpop.f32.mrb[0].mxu0
      %v4185 = vadd.f32 %v4024, %v4184
      %v4186 = vpop.f32.mrb[0].mxu0
      %v4187 = vpop.f32.mrb[0].mxu0
      %v4188 = vadd.f32 %v4027, %v4187
      %v4189 = vpop.f32.mrb[0].mxu0
      %4190 = vmatprep.mubr.bf16.mxu0 %v1920
      %4191 = vmatmul.mubr.bf16.gmra.mrb[0].mxu0 %v1772
      %v4192 = vpop.f32.mrb[0].mxu0
      %v4193 = vadd.f32 %v4032, %v4192
      %v4194 = vpop.f32.mrb[0].mxu0
      %v4195 = vpop.f32.mrb[0].mxu0
      %v4196 = vadd.f32 %v4035, %v4195
      %v4197 = vpop.f32.mrb[0].mxu0
      %4198 = vmatprep.mubr.bf16.mxu0 %v1923
      %4199 = vmatmul.mubr.bf16.gmra.mrb[0].mxu0 %v1775
      %v4200 = vpop.f32.mrb[0].mxu0
      %v4201 = vadd.f32 %v4040, %v4200
      %v4202 = vpop.f32.mrb[0].mxu0
      %v4203 = vpop.f32.mrb[0].mxu0
      %v4204 = vadd.f32 %v4043, %v4203
      %v4205 = vpop.f32.mrb[0].mxu0
      %4206 = vmatprep.mubr.bf16.mxu0 %v1926
      %4207 = vmatmul.mubr.bf16.gmra.mrb[0].mxu0 %v1778
      %v4208 = vpop.f32.mrb[0].mxu0
      %v4209 = vadd.f32 %v4048, %v4208
      %v4210 = vpop.f32.mrb[0].mxu0
      %v4211 = vpop.f32.mrb[0].mxu0
      %v4212 = vadd.f32 %v4051, %v4211
      %v4213 = vpop.f32.mrb[0].mxu0
      %4214 = vmatprep.mubr.bf16.mxu0 %v1929
      %4215 = vmatmul.mubr.bf16.gmra.mrb[0].mxu0 %v1781
      %v4216 = vpop.f32.mrb[0].mxu0
      %v4217 = vadd.f32 %v4056, %v4216
      %v4218 = vpop.f32.mrb[0].mxu0
      %v4219 = vpop.f32.mrb[0].mxu0
      %v4220 = vadd.f32 %v4059, %v4219
      %v4221 = vpop.f32.mrb[0].mxu0
      %4222 = vmatprep.mubr.bf16.mxu0 %v1932
      %4223 = vmatmul.mubr.bf16.gmra.mrb[0].mxu0 %v1784
      %v4224 = vpop.f32.mrb[0].mxu0
      %v4225 = vadd.f32 %v4064, %v4224
      %v4226 = vpop.f32.mrb[0].mxu0
      %v4227 = vpop.f32.mrb[0].mxu0
      %v4228 = vadd.f32 %v4067, %v4227
      %v4229 = vpop.f32.mrb[0].mxu0
      %4230 = vmatprep.mubr.bf16.mxu0 %v1935
      %4231 = vmatmul.mubr.bf16.gmra.mrb[0].mxu0 %v1787
      %v4232 = vpop.f32.mrb[0].mxu0
      %v4233 = vadd.f32 %v4072, %v4232
      %v4234 = vpop.f32.mrb[0].mxu0
      %v4235 = vpop.f32.mrb[0].mxu0
      %v4236 = vadd.f32 %v4075, %v4235
      %v4237 = vpop.f32.mrb[0].mxu0
      %4238 = vmatprep.mubr.bf16.mxu0 %v1938
      %4239 = vmatmul.mubr.bf16.gmra.mrb[0].mxu0 %v1790
      %v4240 = vpop.f32.mrb[0].mxu0
      %v4241 = vadd.f32 %v4080, %v4240
      %v4242 = vpop.f32.mrb[0].mxu0
      %v4243 = vpop.f32.mrb[0].mxu0
      %v4244 = vadd.f32 %v4083, %v4243
      %v4245 = vpop.f32.mrb[0].mxu0
      %4246 = vmatprep.mubr.bf16.mxu0 %v1941
      %4247 = vmatmul.mubr.bf16.gmra.mrb[0].mxu0 %v1793
      %v4248 = vpop.f32.mrb[0].mxu0
      %v4249 = vadd.f32 %v4088, %v4248
      %v4250 = vpop.f32.mrb[0].mxu0
      %v4251 = vpop.f32.mrb[0].mxu0
      %v4252 = vadd.f32 %v4091, %v4251
      %v4253 = vpop.f32.mrb[0].mxu0
      %4254 = vmatprep.mubr.bf16.mxu0 %v1944
      %4255 = vmatmul.mubr.bf16.gmra.mrb[0].mxu0 %v1796
      %v4256 = vpop.f32.mrb[0].mxu0
      %v4257 = vadd.f32 %v4096, %v4256
      %v4258 = vpop.f32.mrb[0].mxu0
      %v4259 = vpop.f32.mrb[0].mxu0
      %v4260 = vadd.f32 %v4099, %v4259
      %v4261 = vpop.f32.mrb[0].mxu0
      %4262 = vmatprep.mubr.bf16.mxu0 %v1947
      %4263 = vmatmul.mubr.bf16.gmra.mrb[0].mxu0 %v1799
      %v4264 = vpop.f32.mrb[0].mxu0
      %v4265 = vadd.f32 %v4104, %v4264
      %v4266 = vpop.f32.mrb[0].mxu0
      %v4267 = vpop.f32.mrb[0].mxu0
      %v4268 = vadd.f32 %v4107, %v4267
      %v4269 = vpop.f32.mrb[0].mxu0
      %4270 = vmatprep.mubr.bf16.mxu0 %v1950
      %4271 = vmatmul.mubr.bf16.gmra.mrb[0].mxu0 %v1802
      %v4272 = vpop.f32.mrb[0].mxu0
      %v4273 = vadd.f32 %v4112, %v4272
      %v4274 = vpop.f32.mrb[0].mxu0
      %v4275 = vpop.f32.mrb[0].mxu0
      %v4276 = vadd.f32 %v4115, %v4275
      %v4277 = vpop.f32.mrb[0].mxu0
      %4278 = vmatprep.mubr.bf16.mxu0 %v1953
      %4279 = vmatmul.mubr.bf16.gmra.mrb[0].mxu0 %v1805
      %v4280 = vpop.f32.mrb[0].mxu0
      %v4281 = vadd.f32 %v4120, %v4280
      %v4282 = vpop.f32.mrb[0].mxu0
      %v4283 = vpop.f32.mrb[0].mxu0
      %v4284 = vadd.f32 %v4123, %v4283
      %v4285 = vpop.f32.mrb[0].mxu0
      %4286 = vmatprep.mubr.bf16.mxu0 %v1956
      %4287 = vmatmul.mubr.bf16.gmra.mrb[0].mxu0 %v1808
      %v4288 = vpop.f32.mrb[0].mxu0
      %v4289 = vadd.f32 %v4128, %v4288
      %v4290 = vpop.f32.mrb[0].mxu0
      %v4291 = vpop.f32.mrb[0].mxu0
      %v4292 = vadd.f32 %v4131, %v4291
      %v4293 = vpop.f32.mrb[0].mxu0
      %4294 = vmatprep.mubr.bf16.mxu0 %v1959
      %4295 = vmatmul.mubr.bf16.gmra.mrb[0].mxu0 %v1811
      %v4296 = vpop.f32.mrb[0].mxu0
      %v4297 = vadd.f32 %v4136, %v4296
      %v4298 = vpop.f32.mrb[0].mxu0
      %v4299 = vpop.f32.mrb[0].mxu0
      %v4300 = vadd.f32 %v4139, %v4299
      %v4301 = vpop.f32.mrb[0].mxu0
      %4302 = vmatprep.mubr.bf16.mxu0 %v1962
      %4303 = vmatmul.mubr.bf16.gmra.mrb[0].mxu0 %v1814
      %v4304 = vpop.f32.mrb[0].mxu0
      %v4305 = vadd.f32 %v4144, %v4304
      %v4306 = vpop.f32.mrb[0].mxu0
      %v4307 = vpop.f32.mrb[0].mxu0
      %v4308 = vadd.f32 %v4147, %v4307
      %v4309 = vpop.f32.mrb[0].mxu0
      %4310 = vdwg.mxu0
      %4311 = vmatprep.subr.bf16.mxu0 0
      %4312 = vmatpush1.bf16.msra.mxu0 %v3855
      %4313 = vmatprep.subr.bf16.mxu0 0
      %4314 = vmatpush1.bf16.msra.mxu0 %v3856
      %4315 = vmatprep.subr.bf16.mxu0 0
      %4316 = vmatpush1.bf16.msra.mxu0 %v3857
      %4317 = vmatprep.subr.bf16.mxu0 0
      %4318 = vmatpush1.bf16.msra.mxu0 %v3858
      %4319 = vmatprep.subr.bf16.mxu0 0
      %4320 = vmatpush1.bf16.msra.mxu0 %v3859
      %4321 = vmatprep.subr.bf16.mxu0 0
      %4322 = vmatpush1.bf16.msra.mxu0 %v3860
      %4323 = vmatprep.subr.bf16.mxu0 0
      %4324 = vmatpush1.bf16.msra.mxu0 %v3861
      %4325 = vmatprep.subr.bf16.mxu0 0
      %4326 = vmatpush1.bf16.msra.mxu0 %v3862
      %4327 = vmatprep.subr.bf16.mxu0 0
      %4328 = vmatpush1.bf16.msra.mxu0 %v3863
      %4329 = vmatprep.subr.bf16.mxu0 0
      %4330 = vmatpush1.bf16.msra.mxu0 %v3864
      %4331 = vmatprep.subr.bf16.mxu0 0
      %4332 = vmatpush1.bf16.msra.mxu0 %v3865
      %4333 = vmatprep.subr.bf16.mxu0 0
      %4334 = vmatpush1.bf16.msra.mxu0 %v3866
      %4335 = vmatprep.subr.bf16.mxu0 0
      %4336 = vmatpush1.bf16.msra.mxu0 %v3867
      %4337 = vmatprep.subr.bf16.mxu0 0
      %4338 = vmatpush1.bf16.msra.mxu0 %v3868
      %4339 = vmatprep.subr.bf16.mxu0 0
      %4340 = vmatpush1.bf16.msra.mxu0 %v3869
      %4341 = vmatprep.subr.bf16.mxu0 0
      %4342 = vmatpush1.bf16.msra.mxu0 %v3870
      %4343 = vmatprep.mubr.bf16.mxu0 %v3364
      %4344 = vmatmul.mubr.bf16.gmra.mrb[0].mxu0 %v3430
      %v4345 = vpop.f32.mrb[0].mxu0
      %v4346 = vadd.f32 %v4185, %v4345
      %v4347 = vpop.f32.mrb[0].mxu0
      %v4348 = vpop.f32.mrb[0].mxu0
      %v4349 = vadd.f32 %v4188, %v4348
      %v4350 = vpop.f32.mrb[0].mxu0
      %4351 = vmatprep.mubr.bf16.mxu0 %v3366
      %4352 = vmatmul.mubr.bf16.gmra.mrb[0].mxu0 %v3433
      %v4353 = vpop.f32.mrb[0].mxu0
      %v4354 = vadd.f32 %v4193, %v4353
      %v4355 = vpop.f32.mrb[0].mxu0
      %v4356 = vpop.f32.mrb[0].mxu0
      %v4357 = vadd.f32 %v4196, %v4356
      %v4358 = vpop.f32.mrb[0].mxu0
      %4359 = vmatprep.mubr.bf16.mxu0 %v3368
      %4360 = vmatmul.mubr.bf16.gmra.mrb[0].mxu0 %v3436
      %v4361 = vpop.f32.mrb[0].mxu0
      %v4362 = vadd.f32 %v4201, %v4361
      %v4363 = vpop.f32.mrb[0].mxu0
      %v4364 = vpop.f32.mrb[0].mxu0
      %v4365 = vadd.f32 %v4204, %v4364
      %v4366 = vpop.f32.mrb[0].mxu0
      %4367 = vmatprep.mubr.bf16.mxu0 %v3370
      %4368 = vmatmul.mubr.bf16.gmra.mrb[0].mxu0 %v3439
      %v4369 = vpop.f32.mrb[0].mxu0
      %v4370 = vadd.f32 %v4209, %v4369
      %v4371 = vpop.f32.mrb[0].mxu0
      %v4372 = vpop.f32.mrb[0].mxu0
      %v4373 = vadd.f32 %v4212, %v4372
      %v4374 = vpop.f32.mrb[0].mxu0
      %4375 = vmatprep.mubr.bf16.mxu0 %v3372
      %4376 = vmatmul.mubr.bf16.gmra.mrb[0].mxu0 %v3442
      %v4377 = vpop.f32.mrb[0].mxu0
      %v4378 = vadd.f32 %v4217, %v4377
      %v4379 = vpop.f32.mrb[0].mxu0
      %v4380 = vpop.f32.mrb[0].mxu0
      %v4381 = vadd.f32 %v4220, %v4380
      %v4382 = vpop.f32.mrb[0].mxu0
      %4383 = vmatprep.mubr.bf16.mxu0 %v3374
      %4384 = vmatmul.mubr.bf16.gmra.mrb[0].mxu0 %v3445
      %v4385 = vpop.f32.mrb[0].mxu0
      %v4386 = vadd.f32 %v4225, %v4385
      %v4387 = vpop.f32.mrb[0].mxu0
      %v4388 = vpop.f32.mrb[0].mxu0
      %v4389 = vadd.f32 %v4228, %v4388
      %v4390 = vpop.f32.mrb[0].mxu0
      %4391 = vmatprep.mubr.bf16.mxu0 %v3376
      %4392 = vmatmul.mubr.bf16.gmra.mrb[0].mxu0 %v3448
      %v4393 = vpop.f32.mrb[0].mxu0
      %v4394 = vadd.f32 %v4233, %v4393
      %v4395 = vpop.f32.mrb[0].mxu0
      %v4396 = vpop.f32.mrb[0].mxu0
      %v4397 = vadd.f32 %v4236, %v4396
      %v4398 = vpop.f32.mrb[0].mxu0
      %4399 = vmatprep.mubr.bf16.mxu0 %v3378
      %4400 = vmatmul.mubr.bf16.gmra.mrb[0].mxu0 %v3451
      %v4401 = vpop.f32.mrb[0].mxu0
      %v4402 = vadd.f32 %v4241, %v4401
      %v4403 = vpop.f32.mrb[0].mxu0
      %v4404 = vpop.f32.mrb[0].mxu0
      %v4405 = vadd.f32 %v4244, %v4404
      %v4406 = vpop.f32.mrb[0].mxu0
      %4407 = vmatprep.mubr.bf16.mxu0 %v3380
      %4408 = vmatmul.mubr.bf16.gmra.mrb[0].mxu0 %v3454
      %v4409 = vpop.f32.mrb[0].mxu0
      %v4410 = vadd.f32 %v4249, %v4409
      %v4411 = vpop.f32.mrb[0].mxu0
      %v4412 = vpop.f32.mrb[0].mxu0
      %v4413 = vadd.f32 %v4252, %v4412
      %v4414 = vpop.f32.mrb[0].mxu0
      %4415 = vmatprep.mubr.bf16.mxu0 %v3382
      %4416 = vmatmul.mubr.bf16.gmra.mrb[0].mxu0 %v3457
      %v4417 = vpop.f32.mrb[0].mxu0
      %v4418 = vadd.f32 %v4257, %v4417
      %v4419 = vpop.f32.mrb[0].mxu0
      %v4420 = vpop.f32.mrb[0].mxu0
      %v4421 = vadd.f32 %v4260, %v4420
      %v4422 = vpop.f32.mrb[0].mxu0
      %4423 = vmatprep.mubr.bf16.mxu0 %v3384
      %4424 = vmatmul.mubr.bf16.gmra.mrb[0].mxu0 %v3460
      %v4425 = vpop.f32.mrb[0].mxu0
      %v4426 = vadd.f32 %v4265, %v4425
      %v4427 = vpop.f32.mrb[0].mxu0
      %v4428 = vpop.f32.mrb[0].mxu0
      %v4429 = vadd.f32 %v4268, %v4428
      %v4430 = vpop.f32.mrb[0].mxu0
      %4431 = vmatprep.mubr.bf16.mxu0 %v3386
      %4432 = vmatmul.mubr.bf16.gmra.mrb[0].mxu0 %v3463
      %v4433 = vpop.f32.mrb[0].mxu0
      %v4434 = vadd.f32 %v4273, %v4433
      %v4435 = vpop.f32.mrb[0].mxu0
      %v4436 = vpop.f32.mrb[0].mxu0
      %v4437 = vadd.f32 %v4276, %v4436
      %v4438 = vpop.f32.mrb[0].mxu0
      %4439 = vmatprep.mubr.bf16.mxu0 %v3388
      %4440 = vmatmul.mubr.bf16.gmra.mrb[0].mxu0 %v3466
      %v4441 = vpop.f32.mrb[0].mxu0
      %v4442 = vadd.f32 %v4281, %v4441
      %v4443 = vpop.f32.mrb[0].mxu0
      %v4444 = vpop.f32.mrb[0].mxu0
      %v4445 = vadd.f32 %v4284, %v4444
      %v4446 = vpop.f32.mrb[0].mxu0
      %4447 = vmatprep.mubr.bf16.mxu0 %v3390
      %4448 = vmatmul.mubr.bf16.gmra.mrb[0].mxu0 %v3469
      %v4449 = vpop.f32.mrb[0].mxu0
      %v4450 = vadd.f32 %v4289, %v4449
      %v4451 = vpop.f32.mrb[0].mxu0
      %v4452 = vpop.f32.mrb[0].mxu0
      %v4453 = vadd.f32 %v4292, %v4452
      %v4454 = vpop.f32.mrb[0].mxu0
      %4455 = vmatprep.mubr.bf16.mxu0 %v3392
      %4456 = vmatmul.mubr.bf16.gmra.mrb[0].mxu0 %v3472
      %v4457 = vpop.f32.mrb[0].mxu0
      %v4458 = vadd.f32 %v4297, %v4457
      %v4459 = vpop.f32.mrb[0].mxu0
      %v4460 = vpop.f32.mrb[0].mxu0
      %v4461 = vadd.f32 %v4300, %v4460
      %v4462 = vpop.f32.mrb[0].mxu0
      %4463 = vmatprep.mubr.bf16.mxu0 %v3394
      %4464 = vmatmul.mubr.bf16.gmra.mrb[0].mxu0 %v3475
      %v4465 = vpop.f32.mrb[0].mxu0
      %v4466 = vadd.f32 %v4305, %v4465
      %v4467 = vpop.f32.mrb[0].mxu0
      %v4468 = vpop.f32.mrb[0].mxu0
      %v4469 = vadd.f32 %v4308, %v4468
      %v4470 = vpop.f32.mrb[0].mxu0
      %4471 = vdwg.mxu0
      %4472 = vmatprep.subr.bf16.mxu0 0
      %4473 = vmatpush1.bf16.msra.mxu0 %v3871
      %4474 = vmatprep.subr.bf16.mxu0 0
      %4475 = vmatpush1.bf16.msra.mxu0 %v3872
      %4476 = vmatprep.subr.bf16.mxu0 0
      %4477 = vmatpush1.bf16.msra.mxu0 %v3873
      %4478 = vmatprep.subr.bf16.mxu0 0
      %4479 = vmatpush1.bf16.msra.mxu0 %v3874
      %4480 = vmatprep.subr.bf16.mxu0 0
      %4481 = vmatpush1.bf16.msra.mxu0 %v3875
      %4482 = vmatprep.subr.bf16.mxu0 0
      %4483 = vmatpush1.bf16.msra.mxu0 %v3876
      %4484 = vmatprep.subr.bf16.mxu0 0
      %4485 = vmatpush1.bf16.msra.mxu0 %v3877
      %4486 = vmatprep.subr.bf16.mxu0 0
      %4487 = vmatpush1.bf16.msra.mxu0 %v3878
      %4488 = vmatprep.subr.bf16.mxu0 0
      %4489 = vmatpush1.bf16.msra.mxu0 %v3987
      %4490 = vmatprep.subr.bf16.mxu0 0
      %4491 = vmatpush1.bf16.msra.mxu0 0
      %4492 = vmatprep.subr.bf16.mxu0 0
      %4493 = vmatpush1.bf16.msra.mxu0 0
      %4494 = vmatprep.subr.bf16.mxu0 0
      %4495 = vmatpush1.bf16.msra.mxu0 0
      %4496 = vmatprep.subr.bf16.mxu0 0
      %4497 = vmatpush1.bf16.msra.mxu0 0
      %4498 = vmatprep.subr.bf16.mxu0 0
      %4499 = vmatpush1.bf16.msra.mxu0 0
      %4500 = vmatprep.subr.bf16.mxu0 0
      %4501 = vmatpush1.bf16.msra.mxu0 0
      %4502 = vmatprep.subr.bf16.mxu0 0
      %4503 = vmatpush1.bf16.msra.mxu0 0
      %4504 = vmatprep.mubr.bf16.mxu0 %v3938
      %4505 = vmatmul.mubr.bf16.gmra.mrb[0].mxu0 %v3365
      %v4506 = vpop.f32.mrb[0].mxu0
      %v4507 = vadd.f32 %v4346, %v4506
      %v4508 = vpop.f32.mrb[0].mxu0
      %v4509 = vpop.f32.mrb[0].mxu0
      %v4510 = vadd.f32 %v4349, %v4509
      %v4511 = vpop.f32.mrb[0].mxu0
      %4512 = vmatprep.mubr.bf16.mxu0 %v3941
      %4513 = vmatmul.mubr.bf16.gmra.mrb[0].mxu0 %v3367
      %v4514 = vpop.f32.mrb[0].mxu0
      %v4515 = vadd.f32 %v4354, %v4514
      %v4516 = vpop.f32.mrb[0].mxu0
      %v4517 = vpop.f32.mrb[0].mxu0
      %v4518 = vadd.f32 %v4357, %v4517
      %v4519 = vpop.f32.mrb[0].mxu0
      %4520 = vmatprep.mubr.bf16.mxu0 %v3944
      %4521 = vmatmul.mubr.bf16.gmra.mrb[0].mxu0 %v3369
      %v4522 = vpop.f32.mrb[0].mxu0
      %v4523 = vadd.f32 %v4362, %v4522
      %v4524 = vpop.f32.mrb[0].mxu0
      %v4525 = vpop.f32.mrb[0].mxu0
      %v4526 = vadd.f32 %v4365, %v4525
      %v4527 = vpop.f32.mrb[0].mxu0
      %4528 = vmatprep.mubr.bf16.mxu0 %v3947
      %4529 = vmatmul.mubr.bf16.gmra.mrb[0].mxu0 %v3371
      %v4530 = vpop.f32.mrb[0].mxu0
      %v4531 = vadd.f32 %v4370, %v4530
      %v4532 = vpop.f32.mrb[0].mxu0
      %v4533 = vpop.f32.mrb[0].mxu0
      %v4534 = vadd.f32 %v4373, %v4533
      %v4535 = vpop.f32.mrb[0].mxu0
      %4536 = vmatprep.mubr.bf16.mxu0 %v3950
      %4537 = vmatmul.mubr.bf16.gmra.mrb[0].mxu0 %v3373
      %v4538 = vpop.f32.mrb[0].mxu0
      %v4539 = vadd.f32 %v4378, %v4538
      %v4540 = vpop.f32.mrb[0].mxu0
      %v4541 = vpop.f32.mrb[0].mxu0
      %v4542 = vadd.f32 %v4381, %v4541
      %v4543 = vpop.f32.mrb[0].mxu0
      %4544 = vmatprep.mubr.bf16.mxu0 %v3953
      %4545 = vmatmul.mubr.bf16.gmra.mrb[0].mxu0 %v3375
      %v4546 = vpop.f32.mrb[0].mxu0
      %v4547 = vadd.f32 %v4386, %v4546
      %v4548 = vpop.f32.mrb[0].mxu0
      %v4549 = vpop.f32.mrb[0].mxu0
      %v4550 = vadd.f32 %v4389, %v4549
      %v4551 = vpop.f32.mrb[0].mxu0
      %4552 = vmatprep.mubr.bf16.mxu0 %v3956
      %4553 = vmatmul.mubr.bf16.gmra.mrb[0].mxu0 %v3377
      %v4554 = vpop.f32.mrb[0].mxu0
      %v4555 = vadd.f32 %v4394, %v4554
      %v4556 = vpop.f32.mrb[0].mxu0
      %v4557 = vpop.f32.mrb[0].mxu0
      %v4558 = vadd.f32 %v4397, %v4557
      %v4559 = vpop.f32.mrb[0].mxu0
      %4560 = vmatprep.mubr.bf16.mxu0 %v3959
      %4561 = vmatmul.mubr.bf16.gmra.mrb[0].mxu0 %v3379
      %v4562 = vpop.f32.mrb[0].mxu0
      %v4563 = vadd.f32 %v4402, %v4562
      %v4564 = vpop.f32.mrb[0].mxu0
      %v4565 = vpop.f32.mrb[0].mxu0
      %v4566 = vadd.f32 %v4405, %v4565
      %v4567 = vpop.f32.mrb[0].mxu0
      %4568 = vmatprep.mubr.bf16.mxu0 %v3962
      %4569 = vmatmul.mubr.bf16.gmra.mrb[0].mxu0 %v3381
      %v4570 = vpop.f32.mrb[0].mxu0
      %v4571 = vadd.f32 %v4410, %v4570
      %v4572 = vpop.f32.mrb[0].mxu0
      %v4573 = vpop.f32.mrb[0].mxu0
      %v4574 = vadd.f32 %v4413, %v4573
      %v4575 = vpop.f32.mrb[0].mxu0
      %4576 = vmatprep.mubr.bf16.mxu0 %v3965
      %4577 = vmatmul.mubr.bf16.gmra.mrb[0].mxu0 %v3383
      %v4578 = vpop.f32.mrb[0].mxu0
      %v4579 = vadd.f32 %v4418, %v4578
      %v4580 = vpop.f32.mrb[0].mxu0
      %v4581 = vpop.f32.mrb[0].mxu0
      %v4582 = vadd.f32 %v4421, %v4581
      %v4583 = vpop.f32.mrb[0].mxu0
      %4584 = vmatprep.mubr.bf16.mxu0 %v3968
      %4585 = vmatmul.mubr.bf16.gmra.mrb[0].mxu0 %v3385
      %v4586 = vpop.f32.mrb[0].mxu0
      %v4587 = vadd.f32 %v4426, %v4586
      %v4588 = vpop.f32.mrb[0].mxu0
      %v4589 = vpop.f32.mrb[0].mxu0
      %v4590 = vadd.f32 %v4429, %v4589
      %v4591 = vpop.f32.mrb[0].mxu0
      %4592 = vmatprep.mubr.bf16.mxu0 %v3971
      %4593 = vmatmul.mubr.bf16.gmra.mrb[0].mxu0 %v3387
      %v4594 = vpop.f32.mrb[0].mxu0
      %v4595 = vadd.f32 %v4434, %v4594
      %v4596 = vpop.f32.mrb[0].mxu0
      %v4597 = vpop.f32.mrb[0].mxu0
      %v4598 = vadd.f32 %v4437, %v4597
      %v4599 = vpop.f32.mrb[0].mxu0
      %4600 = vmatprep.mubr.bf16.mxu0 %v3974
      %4601 = vmatmul.mubr.bf16.gmra.mrb[0].mxu0 %v3389
      %v4602 = vpop.f32.mrb[0].mxu0
      %v4603 = vadd.f32 %v4442, %v4602
      %v4604 = vpop.f32.mrb[0].mxu0
      %v4605 = vpop.f32.mrb[0].mxu0
      %v4606 = vadd.f32 %v4445, %v4605
      %v4607 = vpop.f32.mrb[0].mxu0
      %4608 = vmatprep.mubr.bf16.mxu0 %v3977
      %4609 = vmatmul.mubr.bf16.gmra.mrb[0].mxu0 %v3391
      %v4610 = vpop.f32.mrb[0].mxu0
      %v4611 = vadd.f32 %v4450, %v4610
      %v4612 = vpop.f32.mrb[0].mxu0
      %v4613 = vpop.f32.mrb[0].mxu0
      %v4614 = vadd.f32 %v4453, %v4613
      %v4615 = vpop.f32.mrb[0].mxu0
      %4616 = vmatprep.mubr.bf16.mxu0 %v3980
      %4617 = vmatmul.mubr.bf16.gmra.mrb[0].mxu0 %v3393
      %v4618 = vpop.f32.mrb[0].mxu0
      %v4619 = vadd.f32 %v4458, %v4618
      %v4620 = vpop.f32.mrb[0].mxu0
      %v4621 = vpop.f32.mrb[0].mxu0
      %v4622 = vadd.f32 %v4461, %v4621
      %v4623 = vpop.f32.mrb[0].mxu0
      %4624 = vmatprep.mubr.bf16.mxu0 %v3983
      %4625 = vmatmul.mubr.bf16.gmra.mrb[0].mxu0 %v3395
      %v4626 = vpop.f32.mrb[0].mxu0
      %v4627 = vadd.f32 %v4466, %v4626
      %v4628 = vpop.f32.mrb[0].mxu0
      %v4629 = vpop.f32.mrb[0].mxu0
      %v4630 = vadd.f32 %v4469, %v4629
      %v4631 = vpop.f32.mrb[0].mxu0
      %4632 = vdwg.mxu0
      %v4633 = vxor.u32 %v4507, 2147483648
      %v4634 = vxor.u32 %v4510, 2147483648
      %v4635 = vxor.u32 %v4515, 2147483648
      %v4636 = vxor.u32 %v4518, 2147483648
      %v4637 = vxor.u32 %v4523, 2147483648
      %v4638 = vxor.u32 %v4526, 2147483648
      %v4639 = vxor.u32 %v4531, 2147483648
      %v4640 = vxor.u32 %v4534, 2147483648
      %v4641 = vxor.u32 %v4539, 2147483648
      %v4642 = vxor.u32 %v4542, 2147483648
      %v4643 = vxor.u32 %v4547, 2147483648
      %v4644 = vxor.u32 %v4550, 2147483648
      %v4645 = vxor.u32 %v4555, 2147483648
      %v4646 = vxor.u32 %v4558, 2147483648
      %v4647 = vxor.u32 %v4563, 2147483648
      %v4648 = vxor.u32 %v4566, 2147483648
      %v4649 = vxor.u32 %v4571, 2147483648
      %v4650 = vxor.u32 %v4574, 2147483648
      %v4651 = vxor.u32 %v4579, 2147483648
      %v4652 = vxor.u32 %v4582, 2147483648
      %v4653 = vxor.u32 %v4587, 2147483648
      %v4654 = vxor.u32 %v4590, 2147483648
      %v4655 = vxor.u32 %v4595, 2147483648
      %v4656 = vxor.u32 %v4598, 2147483648
      %v4657 = vxor.u32 %v4603, 2147483648
      %v4658 = vxor.u32 %v4606, 2147483648
      %v4659 = vxor.u32 %v4611, 2147483648
      %v4660 = vxor.u32 %v4614, 2147483648
      %v4661 = vxor.u32 %v4619, 2147483648
      %v4662 = vxor.u32 %v4622, 2147483648
      %v4663 = vxor.u32 %v4627, 2147483648
      %v4664 = vxor.u32 %v4630, 2147483648
      %v4665 = vmul.f32 %v4633, 1.442695
      %v4666 = vpow.pop %v4665
      %v4667 = vmul.f32 %v4634, 1.442695
      %v4668 = vpow.pop %v4667
      %v4669 = vmul.f32 %v4635, 1.442695
      %v4670 = vpow.pop %v4669
      %v4671 = vmul.f32 %v4636, 1.442695
      %v4672 = vpow.pop %v4671
      %v4673 = vmul.f32 %v4637, 1.442695
      %v4674 = vpow.pop %v4673
      %v4675 = vmul.f32 %v4638, 1.442695
      %v4676 = vpow.pop %v4675
      %v4677 = vmul.f32 %v4639, 1.442695
      %v4678 = vpow.pop %v4677
      %v4679 = vmul.f32 %v4640, 1.442695
      %v4680 = vpow.pop %v4679
      %v4681 = vmul.f32 %v4641, 1.442695
      %v4682 = vpow.pop %v4681
      %v4683 = vmul.f32 %v4642, 1.442695
      %v4684 = vpow.pop %v4683
      %v4685 = vmul.f32 %v4643, 1.442695
      %v4686 = vpow.pop %v4685
      %v4687 = vmul.f32 %v4644, 1.442695
      %v4688 = vpow.pop %v4687
      %v4689 = vmul.f32 %v4645, 1.442695
      %v4690 = vpow.pop %v4689
      %v4691 = vmul.f32 %v4646, 1.442695
      %v4692 = vpow.pop %v4691
      %v4693 = vmul.f32 %v4647, 1.442695
      %v4694 = vpow.pop %v4693
      %v4695 = vmul.f32 %v4648, 1.442695
      %v4696 = vpow.pop %v4695
      %v4697 = vmul.f32 %v4649, 1.442695
      %v4698 = vpow.pop %v4697
      %v4699 = vmul.f32 %v4650, 1.442695
      %v4700 = vpow.pop %v4699
      %v4701 = vmul.f32 %v4651, 1.442695
      %v4702 = vpow.pop %v4701
      %v4703 = vmul.f32 %v4652, 1.442695
      %v4704 = vpow.pop %v4703
      %v4705 = vmul.f32 %v4653, 1.442695
      %v4706 = vpow.pop %v4705
      %v4707 = vmul.f32 %v4654, 1.442695
      %v4708 = vpow.pop %v4707
      %v4709 = vmul.f32 %v4655, 1.442695
      %v4710 = vpow.pop %v4709
      %v4711 = vmul.f32 %v4656, 1.442695
      %v4712 = vpow.pop %v4711
      %v4713 = vmul.f32 %v4657, 1.442695
      %v4714 = vpow.pop %v4713
      %v4715 = vmul.f32 %v4658, 1.442695
      %v4716 = vpow.pop %v4715
      %v4717 = vmul.f32 %v4659, 1.442695
      %v4718 = vpow.pop %v4717
      %v4719 = vmul.f32 %v4660, 1.442695
      %v4720 = vpow.pop %v4719
      %v4721 = vmul.f32 %v4661, 1.442695
      %v4722 = vpow.pop %v4721
      %v4723 = vmul.f32 %v4662, 1.442695
      %v4724 = vpow.pop %v4723
      %v4725 = vmul.f32 %v4663, 1.442695
      %v4726 = vpow.pop %v4725
      %v4727 = vmul.f32 %v4664, 1.442695
      %v4728 = vpow.pop %v4727
      %v4729 = vadd.f32 %v4666, 1.0
      %v4730 = vadd.f32 %v4668, 1.0
      %v4731 = vadd.f32 %v4670, 1.0
      %v4732 = vadd.f32 %v4672, 1.0
      %v4733 = vadd.f32 %v4674, 1.0
      %v4734 = vadd.f32 %v4676, 1.0
      %v4735 = vadd.f32 %v4678, 1.0
      %v4736 = vadd.f32 %v4680, 1.0
      %v4737 = vadd.f32 %v4682, 1.0
      %v4738 = vadd.f32 %v4684, 1.0
      %v4739 = vadd.f32 %v4686, 1.0
      %v4740 = vadd.f32 %v4688, 1.0
      %v4741 = vadd.f32 %v4690, 1.0
      %v4742 = vadd.f32 %v4692, 1.0
      %v4743 = vadd.f32 %v4694, 1.0
      %v4744 = vadd.f32 %v4696, 1.0
      %v4745 = vadd.f32 %v4698, 1.0
      %v4746 = vadd.f32 %v4700, 1.0
      %v4747 = vadd.f32 %v4702, 1.0
      %v4748 = vadd.f32 %v4704, 1.0
      %v4749 = vadd.f32 %v4706, 1.0
      %v4750 = vadd.f32 %v4708, 1.0
      %v4751 = vadd.f32 %v4710, 1.0
      %v4752 = vadd.f32 %v4712, 1.0
      %v4753 = vadd.f32 %v4714, 1.0
      %v4754 = vadd.f32 %v4716, 1.0
      %v4755 = vadd.f32 %v4718, 1.0
      %v4756 = vadd.f32 %v4720, 1.0
      %v4757 = vadd.f32 %v4722, 1.0
      %v4758 = vadd.f32 %v4724, 1.0
      %v4759 = vadd.f32 %v4726, 1.0
      %v4760 = vadd.f32 %v4728, 1.0
      %v4761 = vrcp.pop %v4729
      %v4762 = vmul.f32 1.0, %v4761
      %v4763 = vrcp.pop %v4730
      %v4764 = vmul.f32 1.0, %v4763
      %v4765 = vrcp.pop %v4731
      %v4766 = vmul.f32 1.0, %v4765
      %v4767 = vrcp.pop %v4732
      %v4768 = vmul.f32 1.0, %v4767
      %v4769 = vrcp.pop %v4733
      %v4770 = vmul.f32 1.0, %v4769
      %v4771 = vrcp.pop %v4734
      %v4772 = vmul.f32 1.0, %v4771
      %v4773 = vrcp.pop %v4735
      %v4774 = vmul.f32 1.0, %v4773
      %v4775 = vrcp.pop %v4736
      %v4776 = vmul.f32 1.0, %v4775
      %v4777 = vrcp.pop %v4737
      %v4778 = vmul.f32 1.0, %v4777
      %v4779 = vrcp.pop %v4738
      %v4780 = vmul.f32 1.0, %v4779
      %v4781 = vrcp.pop %v4739
      %v4782 = vmul.f32 1.0, %v4781
      %v4783 = vrcp.pop %v4740
      %v4784 = vmul.f32 1.0, %v4783
      %v4785 = vrcp.pop %v4741
      %v4786 = vmul.f32 1.0, %v4785
      %v4787 = vrcp.pop %v4742
      %v4788 = vmul.f32 1.0, %v4787
      %v4789 = vrcp.pop %v4743
      %v4790 = vmul.f32 1.0, %v4789
      %v4791 = vrcp.pop %v4744
      %v4792 = vmul.f32 1.0, %v4791
      %v4793 = vrcp.pop %v4745
      %v4794 = vmul.f32 1.0, %v4793
      %v4795 = vrcp.pop %v4746
      %v4796 = vmul.f32 1.0, %v4795
      %v4797 = vrcp.pop %v4747
      %v4798 = vmul.f32 1.0, %v4797
      %v4799 = vrcp.pop %v4748
      %v4800 = vmul.f32 1.0, %v4799
      %v4801 = vrcp.pop %v4749
      %v4802 = vmul.f32 1.0, %v4801
      %v4803 = vrcp.pop %v4750
      %v4804 = vmul.f32 1.0, %v4803
      %v4805 = vrcp.pop %v4751
      %v4806 = vmul.f32 1.0, %v4805
      %v4807 = vrcp.pop %v4752
      %v4808 = vmul.f32 1.0, %v4807
      %v4809 = vrcp.pop %v4753
      %v4810 = vmul.f32 1.0, %v4809
      %v4811 = vrcp.pop %v4754
      %v4812 = vmul.f32 1.0, %v4811
      %v4813 = vrcp.pop %v4755
      %v4814 = vmul.f32 1.0, %v4813
      %v4815 = vrcp.pop %v4756
      %v4816 = vmul.f32 1.0, %v4815
      %v4817 = vrcp.pop %v4757
      %v4818 = vmul.f32 1.0, %v4817
      %v4819 = vrcp.pop %v4758
      %v4820 = vmul.f32 1.0, %v4819
      %v4821 = vrcp.pop %v4759
      %v4822 = vmul.f32 1.0, %v4821
      %v4823 = vrcp.pop %v4760
      %v4824 = vmul.f32 1.0, %v4823
      %v4825 = vtanh.pop %v4507
      %v4826 = vtanh.pop %v4510
      %v4827 = vtanh.pop %v4515
      %v4828 = vtanh.pop %v4518
      %v4829 = vtanh.pop %v4523
      %v4830 = vtanh.pop %v4526
      %v4831 = vtanh.pop %v4531
      %v4832 = vtanh.pop %v4534
      %v4833 = vtanh.pop %v4539
      %v4834 = vtanh.pop %v4542
      %v4835 = vtanh.pop %v4547
      %v4836 = vtanh.pop %v4550
      %v4837 = vtanh.pop %v4555
      %v4838 = vtanh.pop %v4558
      %v4839 = vtanh.pop %v4563
      %v4840 = vtanh.pop %v4566
      %v4841 = vtanh.pop %v4571
      %v4842 = vtanh.pop %v4574
      %v4843 = vtanh.pop %v4579
      %v4844 = vtanh.pop %v4582
      %v4845 = vtanh.pop %v4587
      %v4846 = vtanh.pop %v4590
      %v4847 = vtanh.pop %v4595
      %v4848 = vtanh.pop %v4598
      %v4849 = vtanh.pop %v4603
      %v4850 = vtanh.pop %v4606
      %v4851 = vtanh.pop %v4611
      %v4852 = vtanh.pop %v4614
      %v4853 = vtanh.pop %v4619
      %v4854 = vtanh.pop %v4622
      %v4855 = vtanh.pop %v4627
      %v4856 = vtanh.pop %v4630
      %v4857 = vld [vmem:[%s247] sm:$0xff]
      %v4858 = vld [vmem:[%s247 + $0x8] sm:$0xff]
      %v4859 = vld [vmem:[%s247 + $0x10] sm:$0xff]
      %v4860 = vld [vmem:[%s247 + $0x18] sm:$0xff]
      %v4861 = vld [vmem:[%s247 + $0x20] sm:$0xff]
      %v4862 = vld [vmem:[%s247 + $0x28] sm:$0xff]
      %v4863 = vld [vmem:[%s247 + $0x30] sm:$0xff]
      %v4864 = vld [vmem:[%s247 + $0x38] sm:$0xff]
      %v4865 = vld [vmem:[%s247 + $0x40] sm:$0xff]
      %v4866 = vld [vmem:[%s247 + $0x48] sm:$0xff]
      %v4867 = vld [vmem:[%s247 + $0x50] sm:$0xff]
      %v4868 = vld [vmem:[%s247 + $0x58] sm:$0xff]
      %v4869 = vld [vmem:[%s247 + $0x60] sm:$0xff]
      %v4870 = vld [vmem:[%s247 + $0x68] sm:$0xff]
      %v4871 = vld [vmem:[%s247 + $0x70] sm:$0xff]
      %v4872 = vld [vmem:[%s247 + $0x78] sm:$0xff]
      %v4873 = vld [vmem:[%s247 + $0x80] sm:$0xff]
      %v4874 = vld [vmem:[%s247 + $0x88] sm:$0xff]
      %v4875 = vld [vmem:[%s247 + $0x90] sm:$0xff]
      %v4876 = vld [vmem:[%s247 + $0x98] sm:$0xff]
      %v4877 = vld [vmem:[%s247 + $0xa0] sm:$0xff]
      %v4878 = vld [vmem:[%s247 + $0xa8] sm:$0xff]
      %v4879 = vld [vmem:[%s247 + $0xb0] sm:$0xff]
      %v4880 = vld [vmem:[%s247 + $0xb8] sm:$0xff]
      %v4881 = vld [vmem:[%s247 + $0xc0] sm:$0xff]
      %v4882 = vld [vmem:[%s247 + $0xc8] sm:$0xff]
      %v4883 = vld [vmem:[%s247 + $0xd0] sm:$0xff]
      %v4884 = vld [vmem:[%s247 + $0xd8] sm:$0xff]
      %v4885 = vld [vmem:[%s247 + $0xe0] sm:$0xff]
      %v4886 = vld [vmem:[%s247 + $0xe8] sm:$0xff]
      %v4887 = vld [vmem:[%s247 + $0xf0] sm:$0xff]
      %v4888 = vld [vmem:[%s247 + $0xf8] sm:$0xff]
      %4921 = vrot.lane.b32.xlu0 %v4762, 64
      %v4922 = vpop.permute.xlu0 %4921
      %4923 = vrot.lane.b32.xlu0 %v4764, 64
      %v4924 = vpop.permute.xlu0 %4923
      %4925 = vrot.lane.b32.xlu0 %v4766, 64
      %v4926 = vpop.permute.xlu0 %4925
      %4927 = vrot.lane.b32.xlu0 %v4768, 64
      %v4928 = vpop.permute.xlu0 %4927
      %4929 = vrot.lane.b32.xlu0 %v4770, 64
      %v4930 = vpop.permute.xlu0 %4929
      %4931 = vrot.lane.b32.xlu0 %v4772, 64
      %v4932 = vpop.permute.xlu0 %4931
      %4933 = vrot.lane.b32.xlu0 %v4774, 64
      %v4934 = vpop.permute.xlu0 %4933
      %4935 = vrot.lane.b32.xlu0 %v4776, 64
      %v4936 = vpop.permute.xlu0 %4935
      %4937 = vrot.lane.b32.xlu0 %v4778, 64
      %v4938 = vpop.permute.xlu0 %4937
      %4939 = vrot.lane.b32.xlu0 %v4780, 64
      %v4940 = vpop.permute.xlu0 %4939
      %4941 = vrot.lane.b32.xlu0 %v4782, 64
      %v4942 = vpop.permute.xlu0 %4941
      %4943 = vrot.lane.b32.xlu0 %v4784, 64
      %v4944 = vpop.permute.xlu0 %4943
      %4945 = vrot.lane.b32.xlu0 %v4786, 64
      %v4946 = vpop.permute.xlu0 %4945
      %4947 = vrot.lane.b32.xlu0 %v4788, 64
      %v4948 = vpop.permute.xlu0 %4947
      %4949 = vrot.lane.b32.xlu0 %v4790, 64
      %v4950 = vpop.permute.xlu0 %4949
      %4951 = vrot.lane.b32.xlu0 %v4792, 64
      %v4952 = vpop.permute.xlu0 %4951
      %4953 = vrot.lane.b32.xlu0 %v4794, 64
      %v4954 = vpop.permute.xlu0 %4953
      %4955 = vrot.lane.b32.xlu0 %v4796, 64
      %v4956 = vpop.permute.xlu0 %4955
      %4957 = vrot.lane.b32.xlu0 %v4798, 64
      %v4958 = vpop.permute.xlu0 %4957
      %4959 = vrot.lane.b32.xlu0 %v4800, 64
      %v4960 = vpop.permute.xlu0 %4959
      %4961 = vrot.lane.b32.xlu0 %v4802, 64
      %v4962 = vpop.permute.xlu0 %4961
      %4963 = vrot.lane.b32.xlu0 %v4804, 64
      %v4964 = vpop.permute.xlu0 %4963
      %4965 = vrot.lane.b32.xlu0 %v4806, 64
      %v4966 = vpop.permute.xlu0 %4965
      %4967 = vrot.lane.b32.xlu0 %v4808, 64
      %v4968 = vpop.permute.xlu0 %4967
      %4969 = vrot.lane.b32.xlu0 %v4810, 64
      %v4970 = vpop.permute.xlu0 %4969
      %4971 = vrot.lane.b32.xlu0 %v4812, 64
      %v4972 = vpop.permute.xlu0 %4971
      %4973 = vrot.lane.b32.xlu0 %v4814, 64
      %v4974 = vpop.permute.xlu0 %4973
      %4975 = vrot.lane.b32.xlu0 %v4816, 64
      %v4976 = vpop.permute.xlu0 %4975
      %4977 = vrot.lane.b32.xlu0 %v4818, 64
      %v4978 = vpop.permute.xlu0 %4977
      %4979 = vrot.lane.b32.xlu0 %v4820, 64
      %v4980 = vpop.permute.xlu0 %4979
      %4981 = vrot.lane.b32.xlu0 %v4822, 64
      %v4982 = vpop.permute.xlu0 %4981
      %4983 = vrot.lane.b32.xlu0 %v4824, 64
      %v4984 = vpop.permute.xlu0 %4983
      %v5017 = vmul.f32 %v4857, %v4922
      %v5018 = vmul.f32 %v4858, %v4924
      %v5019 = vmul.f32 %v4859, %v4926
      %v5020 = vmul.f32 %v4860, %v4928
      %v5021 = vmul.f32 %v4861, %v4930
      %v5022 = vmul.f32 %v4862, %v4932
      %v5023 = vmul.f32 %v4863, %v4934
      %v5024 = vmul.f32 %v4864, %v4936
      %v5025 = vmul.f32 %v4865, %v4938
      %v5026 = vmul.f32 %v4866, %v4940
      %v5027 = vmul.f32 %v4867, %v4942
      %v5028 = vmul.f32 %v4868, %v4944
      %v5029 = vmul.f32 %v4869, %v4946
      %v5030 = vmul.f32 %v4870, %v4948
      %v5031 = vmul.f32 %v4871, %v4950
      %v5032 = vmul.f32 %v4872, %v4952
      %v5033 = vmul.f32 %v4873, %v4954
      %v5034 = vmul.f32 %v4874, %v4956
      %v5035 = vmul.f32 %v4875, %v4958
      %v5036 = vmul.f32 %v4876, %v4960
      %v5037 = vmul.f32 %v4877, %v4962
      %v5038 = vmul.f32 %v4878, %v4964
      %v5039 = vmul.f32 %v4879, %v4966
      %v5040 = vmul.f32 %v4880, %v4968
      %v5041 = vmul.f32 %v4881, %v4970
      %v5042 = vmul.f32 %v4882, %v4972
      %v5043 = vmul.f32 %v4883, %v4974
      %v5044 = vmul.f32 %v4884, %v4976
      %v5045 = vmul.f32 %v4885, %v4978
      %v5046 = vmul.f32 %v4886, %v4980
      %v5047 = vmul.f32 %v4887, %v4982
      %v5048 = vmul.f32 %v4888, %v4984
      %5081 = vrot.lane.b32.xlu0 %v4825, 96
      %v5082 = vpop.permute.xlu0 %5081
      %5083 = vrot.lane.b32.xlu0 %v4826, 96
      %v5084 = vpop.permute.xlu0 %5083
      %5085 = vrot.lane.b32.xlu0 %v4827, 96
      %v5086 = vpop.permute.xlu0 %5085
      %5087 = vrot.lane.b32.xlu0 %v4828, 96
      %v5088 = vpop.permute.xlu0 %5087
      %5089 = vrot.lane.b32.xlu0 %v4829, 96
      %v5090 = vpop.permute.xlu0 %5089
      %5091 = vrot.lane.b32.xlu0 %v4830, 96
      %v5092 = vpop.permute.xlu0 %5091
      %5093 = vrot.lane.b32.xlu0 %v4831, 96
      %v5094 = vpop.permute.xlu0 %5093
      %5095 = vrot.lane.b32.xlu0 %v4832, 96
      %v5096 = vpop.permute.xlu0 %5095
      %5097 = vrot.lane.b32.xlu0 %v4833, 96
      %v5098 = vpop.permute.xlu0 %5097
      %5099 = vrot.lane.b32.xlu0 %v4834, 96
      %v5100 = vpop.permute.xlu0 %5099
      %5101 = vrot.lane.b32.xlu0 %v4835, 96
      %v5102 = vpop.permute.xlu0 %5101
      %5103 = vrot.lane.b32.xlu0 %v4836, 96
      %v5104 = vpop.permute.xlu0 %5103
      %5105 = vrot.lane.b32.xlu0 %v4837, 96
      %v5106 = vpop.permute.xlu0 %5105
      %5107 = vrot.lane.b32.xlu0 %v4838, 96
      %v5108 = vpop.permute.xlu0 %5107
      %5109 = vrot.lane.b32.xlu0 %v4839, 96
      %v5110 = vpop.permute.xlu0 %5109
      %5111 = vrot.lane.b32.xlu0 %v4840, 96
      %v5112 = vpop.permute.xlu0 %5111
      %5113 = vrot.lane.b32.xlu0 %v4841, 96
      %v5114 = vpop.permute.xlu0 %5113
      %5115 = vrot.lane.b32.xlu0 %v4842, 96
      %v5116 = vpop.permute.xlu0 %5115
      %5117 = vrot.lane.b32.xlu0 %v4843, 96
      %v5118 = vpop.permute.xlu0 %5117
      %5119 = vrot.lane.b32.xlu0 %v4844, 96
      %v5120 = vpop.permute.xlu0 %5119
      %5121 = vrot.lane.b32.xlu0 %v4845, 96
      %v5122 = vpop.permute.xlu0 %5121
      %5123 = vrot.lane.b32.xlu0 %v4846, 96
      %v5124 = vpop.permute.xlu0 %5123
      %5125 = vrot.lane.b32.xlu0 %v4847, 96
      %v5126 = vpop.permute.xlu0 %5125
      %5127 = vrot.lane.b32.xlu0 %v4848, 96
      %v5128 = vpop.permute.xlu0 %5127
      %5129 = vrot.lane.b32.xlu0 %v4849, 96
      %v5130 = vpop.permute.xlu0 %5129
      %5131 = vrot.lane.b32.xlu0 %v4850, 96
      %v5132 = vpop.permute.xlu0 %5131
      %5133 = vrot.lane.b32.xlu0 %v4851, 96
      %v5134 = vpop.permute.xlu0 %5133
      %5135 = vrot.lane.b32.xlu0 %v4852, 96
      %v5136 = vpop.permute.xlu0 %5135
      %5137 = vrot.lane.b32.xlu0 %v4853, 96
      %v5138 = vpop.permute.xlu0 %5137
      %5139 = vrot.lane.b32.xlu0 %v4854, 96
      %v5140 = vpop.permute.xlu0 %5139
      %5141 = vrot.lane.b32.xlu0 %v4855, 96
      %v5142 = vpop.permute.xlu0 %5141
      %5143 = vrot.lane.b32.xlu0 %v4856, 96
      %v5144 = vpop.permute.xlu0 %5143
      %v5177 = vmul.f32 %v4762, %v5082
      %v5178 = vmul.f32 %v4764, %v5084
      %v5179 = vmul.f32 %v4766, %v5086
      %v5180 = vmul.f32 %v4768, %v5088
      %v5181 = vmul.f32 %v4770, %v5090
      %v5182 = vmul.f32 %v4772, %v5092
      %v5183 = vmul.f32 %v4774, %v5094
      %v5184 = vmul.f32 %v4776, %v5096
      %v5185 = vmul.f32 %v4778, %v5098
      %v5186 = vmul.f32 %v4780, %v5100
      %v5187 = vmul.f32 %v4782, %v5102
      %v5188 = vmul.f32 %v4784, %v5104
      %v5189 = vmul.f32 %v4786, %v5106
      %v5190 = vmul.f32 %v4788, %v5108
      %v5191 = vmul.f32 %v4790, %v5110
      %v5192 = vmul.f32 %v4792, %v5112
      %v5193 = vmul.f32 %v4794, %v5114
      %v5194 = vmul.f32 %v4796, %v5116
      %v5195 = vmul.f32 %v4798, %v5118
      %v5196 = vmul.f32 %v4800, %v5120
      %v5197 = vmul.f32 %v4802, %v5122
      %v5198 = vmul.f32 %v4804, %v5124
      %v5199 = vmul.f32 %v4806, %v5126
      %v5200 = vmul.f32 %v4808, %v5128
      %v5201 = vmul.f32 %v4810, %v5130
      %v5202 = vmul.f32 %v4812, %v5132
      %v5203 = vmul.f32 %v4814, %v5134
      %v5204 = vmul.f32 %v4816, %v5136
      %v5205 = vmul.f32 %v4818, %v5138
      %v5206 = vmul.f32 %v4820, %v5140
      %v5207 = vmul.f32 %v4822, %v5142
      %v5208 = vmul.f32 %v4824, %v5144
      %v5209 = vadd.f32 %v5017, %v5177
      %v5210 = vadd.f32 %v5018, %v5178
      %v5211 = vadd.f32 %v5019, %v5179
      %v5212 = vadd.f32 %v5020, %v5180
      %v5213 = vadd.f32 %v5021, %v5181
      %v5214 = vadd.f32 %v5022, %v5182
      %v5215 = vadd.f32 %v5023, %v5183
      %v5216 = vadd.f32 %v5024, %v5184
      %v5217 = vadd.f32 %v5025, %v5185
      %v5218 = vadd.f32 %v5026, %v5186
      %v5219 = vadd.f32 %v5027, %v5187
      %v5220 = vadd.f32 %v5028, %v5188
      %v5221 = vadd.f32 %v5029, %v5189
      %v5222 = vadd.f32 %v5030, %v5190
      %v5223 = vadd.f32 %v5031, %v5191
      %v5224 = vadd.f32 %v5032, %v5192
      %v5225 = vadd.f32 %v5033, %v5193
      %v5226 = vadd.f32 %v5034, %v5194
      %v5227 = vadd.f32 %v5035, %v5195
      %v5228 = vadd.f32 %v5036, %v5196
      %v5229 = vadd.f32 %v5037, %v5197
      %v5230 = vadd.f32 %v5038, %v5198
      %v5231 = vadd.f32 %v5039, %v5199
      %v5232 = vadd.f32 %v5040, %v5200
      %v5233 = vadd.f32 %v5041, %v5201
      %v5234 = vadd.f32 %v5042, %v5202
      %v5235 = vadd.f32 %v5043, %v5203
      %v5236 = vadd.f32 %v5044, %v5204
      %v5237 = vadd.f32 %v5045, %v5205
      %v5238 = vadd.f32 %v5046, %v5206
      %v5239 = vadd.f32 %v5047, %v5207
      %v5240 = vadd.f32 %v5048, %v5208
      %v5241 = vtanh.pop %v5209
      %v5242 = vtanh.pop %v5210
      %v5243 = vtanh.pop %v5211
      %v5244 = vtanh.pop %v5212
      %v5245 = vtanh.pop %v5213
      %v5246 = vtanh.pop %v5214
      %v5247 = vtanh.pop %v5215
      %v5248 = vtanh.pop %v5216
      %v5249 = vtanh.pop %v5217
      %v5250 = vtanh.pop %v5218
      %v5251 = vtanh.pop %v5219
      %v5252 = vtanh.pop %v5220
      %v5253 = vtanh.pop %v5221
      %v5254 = vtanh.pop %v5222
      %v5255 = vtanh.pop %v5223
      %v5256 = vtanh.pop %v5224
      %v5257 = vtanh.pop %v5225
      %v5258 = vtanh.pop %v5226
      %v5259 = vtanh.pop %v5227
      %v5260 = vtanh.pop %v5228
      %v5261 = vtanh.pop %v5229
      %v5262 = vtanh.pop %v5230
      %v5263 = vtanh.pop %v5231
      %v5264 = vtanh.pop %v5232
      %v5265 = vtanh.pop %v5233
      %v5266 = vtanh.pop %v5234
      %v5267 = vtanh.pop %v5235
      %v5268 = vtanh.pop %v5236
      %v5269 = vtanh.pop %v5237
      %v5270 = vtanh.pop %v5238
      %v5271 = vtanh.pop %v5239
      %v5272 = vtanh.pop %v5240
      %5273 = vrot.lane.b32.xlu0 %v4762, 32
      %v5274 = vpop.permute.xlu0 %5273
      %5275 = vrot.lane.b32.xlu0 %v4764, 32
      %v5276 = vpop.permute.xlu0 %5275
      %5277 = vrot.lane.b32.xlu0 %v4766, 32
      %v5278 = vpop.permute.xlu0 %5277
      %5279 = vrot.lane.b32.xlu0 %v4768, 32
      %v5280 = vpop.permute.xlu0 %5279
      %5281 = vrot.lane.b32.xlu0 %v4770, 32
      %v5282 = vpop.permute.xlu0 %5281
      %5283 = vrot.lane.b32.xlu0 %v4772, 32
      %v5284 = vpop.permute.xlu0 %5283
      %5285 = vrot.lane.b32.xlu0 %v4774, 32
      %v5286 = vpop.permute.xlu0 %5285
      %5287 = vrot.lane.b32.xlu0 %v4776, 32
      %v5288 = vpop.permute.xlu0 %5287
      %5289 = vrot.lane.b32.xlu0 %v4778, 32
      %v5290 = vpop.permute.xlu0 %5289
      %5291 = vrot.lane.b32.xlu0 %v4780, 32
      %v5292 = vpop.permute.xlu0 %5291
      %5293 = vrot.lane.b32.xlu0 %v4782, 32
      %v5294 = vpop.permute.xlu0 %5293
      %5295 = vrot.lane.b32.xlu0 %v4784, 32
      %v5296 = vpop.permute.xlu0 %5295
      %5297 = vrot.lane.b32.xlu0 %v4786, 32
      %v5298 = vpop.permute.xlu0 %5297
      %5299 = vrot.lane.b32.xlu0 %v4788, 32
      %v5300 = vpop.permute.xlu0 %5299
      %5301 = vrot.lane.b32.xlu0 %v4790, 32
      %v5302 = vpop.permute.xlu0 %5301
      %5303 = vrot.lane.b32.xlu0 %v4792, 32
      %v5304 = vpop.permute.xlu0 %5303
      %5305 = vrot.lane.b32.xlu0 %v4794, 32
      %v5306 = vpop.permute.xlu0 %5305
      %5307 = vrot.lane.b32.xlu0 %v4796, 32
      %v5308 = vpop.permute.xlu0 %5307
      %5309 = vrot.lane.b32.xlu0 %v4798, 32
      %v5310 = vpop.permute.xlu0 %5309
      %5311 = vrot.lane.b32.xlu0 %v4800, 32
      %v5312 = vpop.permute.xlu0 %5311
      %5313 = vrot.lane.b32.xlu0 %v4802, 32
      %v5314 = vpop.permute.xlu0 %5313
      %5315 = vrot.lane.b32.xlu0 %v4804, 32
      %v5316 = vpop.permute.xlu0 %5315
      %5317 = vrot.lane.b32.xlu0 %v4806, 32
      %v5318 = vpop.permute.xlu0 %5317
      %5319 = vrot.lane.b32.xlu0 %v4808, 32
      %v5320 = vpop.permute.xlu0 %5319
      %5321 = vrot.lane.b32.xlu0 %v4810, 32
      %v5322 = vpop.permute.xlu0 %5321
      %5323 = vrot.lane.b32.xlu0 %v4812, 32
      %v5324 = vpop.permute.xlu0 %5323
      %5325 = vrot.lane.b32.xlu0 %v4814, 32
      %v5326 = vpop.permute.xlu0 %5325
      %5327 = vrot.lane.b32.xlu0 %v4816, 32
      %v5328 = vpop.permute.xlu0 %5327
      %5329 = vrot.lane.b32.xlu0 %v4818, 32
      %v5330 = vpop.permute.xlu0 %5329
      %5331 = vrot.lane.b32.xlu0 %v4820, 32
      %v5332 = vpop.permute.xlu0 %5331
      %5333 = vrot.lane.b32.xlu0 %v4822, 32
      %v5334 = vpop.permute.xlu0 %5333
      %5335 = vrot.lane.b32.xlu0 %v4824, 32
      %v5336 = vpop.permute.xlu0 %5335
      %v5369 = vmul.f32 %v5241, %v5274
      %v5370 = vmul.f32 %v5242, %v5276
      %v5371 = vmul.f32 %v5243, %v5278
      %v5372 = vmul.f32 %v5244, %v5280
      %v5373 = vmul.f32 %v5245, %v5282
      %v5374 = vmul.f32 %v5246, %v5284
      %v5375 = vmul.f32 %v5247, %v5286
      %v5376 = vmul.f32 %v5248, %v5288
      %v5377 = vmul.f32 %v5249, %v5290
      %v5378 = vmul.f32 %v5250, %v5292
      %v5379 = vmul.f32 %v5251, %v5294
      %v5380 = vmul.f32 %v5252, %v5296
      %v5381 = vmul.f32 %v5253, %v5298
      %v5382 = vmul.f32 %v5254, %v5300
      %v5383 = vmul.f32 %v5255, %v5302
      %v5384 = vmul.f32 %v5256, %v5304
      %v5385 = vmul.f32 %v5257, %v5306
      %v5386 = vmul.f32 %v5258, %v5308
      %v5387 = vmul.f32 %v5259, %v5310
      %v5388 = vmul.f32 %v5260, %v5312
      %v5389 = vmul.f32 %v5261, %v5314
      %v5390 = vmul.f32 %v5262, %v5316
      %v5391 = vmul.f32 %v5263, %v5318
      %v5392 = vmul.f32 %v5264, %v5320
      %v5393 = vmul.f32 %v5265, %v5322
      %v5394 = vmul.f32 %v5266, %v5324
      %v5395 = vmul.f32 %v5267, %v5326
      %v5396 = vmul.f32 %v5268, %v5328
      %v5397 = vmul.f32 %v5269, %v5330
      %v5398 = vmul.f32 %v5270, %v5332
      %v5399 = vmul.f32 %v5271, %v5334
      %v5400 = vmul.f32 %v5272, %v5336
      %5401 = vst.msk [vmem:[%s252] sm:$0xff] %vm1701, %v5209
      %5402 = vst.msk [vmem:[%s252 + $0x8] sm:$0xff] %vm1701, %v5210
      %5403 = vst.msk [vmem:[%s252 + $0x10] sm:$0xff] %vm1701, %v5211
      %5404 = vst.msk [vmem:[%s252 + $0x18] sm:$0xff] %vm1701, %v5212
      %5405 = vst.msk [vmem:[%s252 + $0x20] sm:$0xff] %vm1701, %v5213
      %5406 = vst.msk [vmem:[%s252 + $0x28] sm:$0xff] %vm1701, %v5214
      %5407 = vst.msk [vmem:[%s252 + $0x30] sm:$0xff] %vm1701, %v5215
      %5408 = vst.msk [vmem:[%s252 + $0x38] sm:$0xff] %vm1701, %v5216
      %5409 = vst.msk [vmem:[%s252 + $0x40] sm:$0xff] %vm1701, %v5217
      %5410 = vst.msk [vmem:[%s252 + $0x48] sm:$0xff] %vm1701, %v5218
      %5411 = vst.msk [vmem:[%s252 + $0x50] sm:$0xff] %vm1701, %v5219
      %5412 = vst.msk [vmem:[%s252 + $0x58] sm:$0xff] %vm1701, %v5220
      %5413 = vst.msk [vmem:[%s252 + $0x60] sm:$0xff] %vm1701, %v5221
      %5414 = vst.msk [vmem:[%s252 + $0x68] sm:$0xff] %vm1701, %v5222
      %5415 = vst.msk [vmem:[%s252 + $0x70] sm:$0xff] %vm1701, %v5223
      %5416 = vst.msk [vmem:[%s252 + $0x78] sm:$0xff] %vm1701, %v5224
      %5417 = vst.msk [vmem:[%s252 + $0x80] sm:$0xff] %vm1701, %v5225
      %5418 = vst.msk [vmem:[%s252 + $0x88] sm:$0xff] %vm1701, %v5226
      %5419 = vst.msk [vmem:[%s252 + $0x90] sm:$0xff] %vm1701, %v5227
      %5420 = vst.msk [vmem:[%s252 + $0x98] sm:$0xff] %vm1701, %v5228
      %5421 = vst.msk [vmem:[%s252 + $0xa0] sm:$0xff] %vm1701, %v5229
      %5422 = vst.msk [vmem:[%s252 + $0xa8] sm:$0xff] %vm1701, %v5230
      %5423 = vst.msk [vmem:[%s252 + $0xb0] sm:$0xff] %vm1701, %v5231
      %5424 = vst.msk [vmem:[%s252 + $0xb8] sm:$0xff] %vm1701, %v5232
      %5425 = vst.msk [vmem:[%s252 + $0xc0] sm:$0xff] %vm1701, %v5233
      %5426 = vst.msk [vmem:[%s252 + $0xc8] sm:$0xff] %vm1701, %v5234
      %5427 = vst.msk [vmem:[%s252 + $0xd0] sm:$0xff] %vm1701, %v5235
      %5428 = vst.msk [vmem:[%s252 + $0xd8] sm:$0xff] %vm1701, %v5236
      %5429 = vst.msk [vmem:[%s252 + $0xe0] sm:$0xff] %vm1701, %v5237
      %5430 = vst.msk [vmem:[%s252 + $0xe8] sm:$0xff] %vm1701, %v5238
      %5431 = vst.msk [vmem:[%s252 + $0xf0] sm:$0xff] %vm1701, %v5239
      %5432 = vst.msk [vmem:[%s252 + $0xf8] sm:$0xff] %vm1701, %v5240
      %5433 = vst.msk [vmem:[%s257] sm:$0xff] %vm1701, %v5369
      %5434 = vst.msk [vmem:[%s257 + $0x8] sm:$0xff] %vm1701, %v5370
      %5435 = vst.msk [vmem:[%s257 + $0x10] sm:$0xff] %vm1701, %v5371
      %5436 = vst.msk [vmem:[%s257 + $0x18] sm:$0xff] %vm1701, %v5372
      %5437 = vst.msk [vmem:[%s257 + $0x20] sm:$0xff] %vm1701, %v5373
      %5438 = vst.msk [vmem:[%s257 + $0x28] sm:$0xff] %vm1701, %v5374
      %5439 = vst.msk [vmem:[%s257 + $0x30] sm:$0xff] %vm1701, %v5375
      %5440 = vst.msk [vmem:[%s257 + $0x38] sm:$0xff] %vm1701, %v5376
      %5441 = vst.msk [vmem:[%s257 + $0x40] sm:$0xff] %vm1701, %v5377
      %5442 = vst.msk [vmem:[%s257 + $0x48] sm:$0xff] %vm1701, %v5378
      %5443 = vst.msk [vmem:[%s257 + $0x50] sm:$0xff] %vm1701, %v5379
      %5444 = vst.msk [vmem:[%s257 + $0x58] sm:$0xff] %vm1701, %v5380
      %5445 = vst.msk [vmem:[%s257 + $0x60] sm:$0xff] %vm1701, %v5381
      %5446 = vst.msk [vmem:[%s257 + $0x68] sm:$0xff] %vm1701, %v5382
      %5447 = vst.msk [vmem:[%s257 + $0x70] sm:$0xff] %vm1701, %v5383
      %5448 = vst.msk [vmem:[%s257 + $0x78] sm:$0xff] %vm1701, %v5384
      %5449 = vst.msk [vmem:[%s257 + $0x80] sm:$0xff] %vm1701, %v5385
      %5450 = vst.msk [vmem:[%s257 + $0x88] sm:$0xff] %vm1701, %v5386
      %5451 = vst.msk [vmem:[%s257 + $0x90] sm:$0xff] %vm1701, %v5387
      %5452 = vst.msk [vmem:[%s257 + $0x98] sm:$0xff] %vm1701, %v5388
      %5453 = vst.msk [vmem:[%s257 + $0xa0] sm:$0xff] %vm1701, %v5389
      %5454 = vst.msk [vmem:[%s257 + $0xa8] sm:$0xff] %vm1701, %v5390
      %5455 = vst.msk [vmem:[%s257 + $0xb0] sm:$0xff] %vm1701, %v5391
      %5456 = vst.msk [vmem:[%s257 + $0xb8] sm:$0xff] %vm1701, %v5392
      %5457 = vst.msk [vmem:[%s257 + $0xc0] sm:$0xff] %vm1701, %v5393
      %5458 = vst.msk [vmem:[%s257 + $0xc8] sm:$0xff] %vm1701, %v5394
      %5459 = vst.msk [vmem:[%s257 + $0xd0] sm:$0xff] %vm1701, %v5395
      %5460 = vst.msk [vmem:[%s257 + $0xd8] sm:$0xff] %vm1701, %v5396
      %5461 = vst.msk [vmem:[%s257 + $0xe0] sm:$0xff] %vm1701, %v5397
      %5462 = vst.msk [vmem:[%s257 + $0xe8] sm:$0xff] %vm1701, %v5398
      %5463 = vst.msk [vmem:[%s257 + $0xf0] sm:$0xff] %vm1701, %v5399
      %5464 = vst.msk [vmem:[%s257 + $0xf8] sm:$0xff] %vm1701, %v5400
      %p5465 = scmp.lt.s32.totalorder %s17, 1
      %s5466 = scalar_select %p5465, %s17, 1
      %s5467 = smul.addr %s5466, 32
      %s5468 = smul.addr %s5467, 8
      %s5469 = scalar_lea.vmem %s4, %s5468
      %p5470 = scmp.lt.s32.totalorder %s17, 1
      %s5471 = scalar_select %p5470, %s17, 1
      %s5472 = smul.addr %s5471, 32
      %s5473 = smul.addr %s5472, 8
      %s5474 = scalar_lea.vmem %s5, %s5473
      // Predicated region
      $region37: #{tpu_custom_call.1} parent=35 // pred_check
        %p5475 = pneg %p129
      $region38: #{tpu_custom_call.1} parent=35 // pred_check_branch
        %5477 = sbr.rel (%p5475) target = $region40
      $region39: #{tpu_custom_call.1} parent=35 // pred_region
        _
      $region40: #{tpu_custom_call.1} parent=35 // pred_fallthru
        _
      // Predicated region
      $region41: #{tpu_custom_call.1} parent=35 // pred_check
        %p5478 = pneg %p155
      $region42: #{tpu_custom_call.1} parent=35 // pred_check_branch
        %5480 = sbr.rel (%p5478) target = $region44
      $region43: #{tpu_custom_call.1} parent=35 // pred_region
        _
      $region44: #{tpu_custom_call.1} parent=35 // pred_fallthru
        _
    $region36: #{tpu_custom_call.1} parent=5 // pred_fallthru
      _
    %p5481 = scmp.le.s32.totalorder 2, %s12
    // Predicated region
    $region45: #{tpu_custom_call.1} parent=5 // pred_check
      %p5482 = pneg %p5481
    $region46: #{tpu_custom_call.1} parent=5 // pred_check_branch
      %5484 = sbr.rel (%p5482) target = $region48
    $region47: #{tpu_custom_call.1} parent=5 // pred_region
      %s5485 = ssub.s32 %s12, 2
      // Predicated region
      $region49: #{tpu_custom_call.1} parent=47 // pred_check
        %p5486 = pneg %p135
      $region50: #{tpu_custom_call.1} parent=47 // pred_check_branch
        %5488 = sbr.rel (%p5486) target = $region52
      $region51: #{tpu_custom_call.1} parent=47 // pred_region
        %p5489 = scmp.lt.s32.totalorder %s18, 1
        %s5490 = scalar_select %p5489, %s18, 1
        %s5491 = smul.addr %s5490, 32
        %s5492 = smul.addr %s5491, 8
        %s5493 = scalar_lea.vmem %s4, %s5492
      $region52: #{tpu_custom_call.1} parent=47 // pred_fallthru
        _
      // Predicated region
      $region53: #{tpu_custom_call.1} parent=47 // pred_check
        %p5494 = pneg %p161
      $region54: #{tpu_custom_call.1} parent=47 // pred_check_branch
        %5496 = sbr.rel (%p5494) target = $region56
      $region55: #{tpu_custom_call.1} parent=47 // pred_region
        %p5497 = scmp.lt.s32.totalorder %s18, 1
        %s5498 = scalar_select %p5497, %s18, 1
        %s5499 = smul.addr %s5498, 32
        %s5500 = smul.addr %s5499, 8
        %s5501 = scalar_lea.vmem %s5, %s5500
      $region56: #{tpu_custom_call.1} parent=47 // pred_fallthru
        _
    $region48: #{tpu_custom_call.1} parent=5 // pred_fallthru
      _
  $region6: #{tpu_custom_call.1} parent=0 // loop_footer
    %s16 = sadd.s32 1, %s12
  $region7: #{tpu_custom_call.1} parent=0 // loop_footer_branch
    %11 = sbr.rel target = $region3
  $region8: #{tpu_custom_call.1} parent=0 // loop_exit
    _

</llo_original>
